<compile_context>
chip_gen: v6e
topology: v6e:2x2x1
jax: 0.10.0
libtpu: 0.0.40
codegen_flags: <defaults>
</compile_context>

<pallas_src>
import functools

import numpy as np
import jax
import jax.numpy as jnp
from jax import lax
from jax.experimental import pallas as pl
from jax.experimental.pallas import tpu as pltpu


# ---------------------------------------------------------------------------
# small helpers
# ---------------------------------------------------------------------------
def _rup(n, m):
    return ((n + m - 1) // m) * m


def _vmem_limit_bytes():
    """Per-generation scoped VMEM limit: physical capacity minus headroom."""
    cap = 128 * 1024 * 1024
    try:
        info = pltpu.get_tpu_info()
        cap = int(getattr(info, "vmem_capacity_bytes", cap))
    except Exception:
        pass
    # leave ~24 MiB for Mosaic internal scratch; matters most on v7x (64 MiB)
    return max(32 * 1024 * 1024, cap - 24 * 1024 * 1024)


# ---------------------------------------------------------------------------
# in-kernel helpers
# ---------------------------------------------------------------------------
def _shift_right(v, s, masks, t_seg):
    """shifted[:, p] = v[:, p - s] with zero fill where (p % t_seg) < s.

    XLU lane rotation + precomputed VPU mask; never touches the MXU.  The
    mask is per-segment so folded batch elements never see each other.
    """
    if s == 0:
        return v
    if s >= t_seg:
        return jnp.zeros_like(v)
    rolled = pltpu.roll(v, s, 1)          # out[:, p] = v[:, (p - s) % L]
    return jnp.where(masks[s], rolled, jnp.zeros_like(rolled))


# ---------------------------------------------------------------------------
# Pallas kernel
# ---------------------------------------------------------------------------
def wavenet_kernel(x_ref,
                   cw_ref, cb_ref,        # causal conv:     (K, RC, IC), (RC, 1)
                   dw_ref, db_ref,        # dilated convs:   (L, 2DC, K*RC), (L, 2DC, 1)
                   rsw_ref, rsb_ref,      # fused res+skip:  (L, RC+SC, DC), (L, RC+SC, 1)
                   o1w_ref, o1b_ref,      # output conv 1:   (SC, SC), (SC, 1)
                   o2w_ref, o2b_ref,      # output conv 2:   (NC, SC), (NC, 1)
                   out_ref,
                   *, t_seg, fuse_taps):
    cdt = dw_ref.dtype                                  # compute (MXU) dtype
    x = x_ref[...].astype(cdt)                          # (IC, Ltot)
    Ltot = x.shape[-1]
    K = cw_ref.shape[0]
    RC = cw_ref.shape[1]
    num_layers = dw_ref.shape[0]
    dc = dw_ref.shape[1] // 2
    sc = rsw_ref.shape[1] - RC

    # lane iota / per-segment causal masks, built ONCE and reused everywhere
    t_iota = lax.broadcasted_iota(jnp.int32, (1, Ltot), 1)
    seg_iota = t_iota % t_seg if t_seg != Ltot else t_iota
    dilations = [2 ** (l % 10) for l in range(num_layers)]
    all_shifts = {j for j in range(1, K)}
    for d in dilations:
        all_shifts |= {j * d for j in range(1, K)}
    masks = {s: seg_iota >= s for s in sorted(all_shifts) if 0 < s < t_seg}

    # ---- causal conv + crop (torch: pad K-1 both sides, drop trailing K-1)
    h = jnp.dot(cw_ref[K - 1], x, preferred_element_type=jnp.float32)
    for j in range(K - 1):
        h = h + jnp.dot(cw_ref[j], _shift_right(x, K - 1 - j, masks, t_seg),
                        preferred_element_type=jnp.float32)
    h = h + cb_ref[...]                                 # (RC, Ltot), f32

    skip_sum = jnp.zeros((sc, Ltot), jnp.float32)

    # statically unrolled layer loop (small L).
    # TODO(synk): for real 20-40 layer stacks switch to lax.fori_loop with
    # dynamic dw_ref[l]/rsw_ref[l] indexing to bound code size / live ranges.
    for l in range(num_layers):
        d = dilations[l]
        residual = h                                    # f32
        v = h.astype(cdt)                               # bf16 for the MXU
        w = dw_ref[l]                                   # (2DC, K*RC)
        if fuse_taps:
            # one deep matmul: K shifted copies stacked along the contraction
            taps = [_shift_right(v, (K - 1 - j) * d, masks, t_seg)
                    for j in range(K)]
            stacked = taps[0] if K == 1 else jnp.concatenate(taps, axis=0)
            z = jnp.dot(w, stacked, preferred_element_type=jnp.float32)
        else:
            # per-tap accumulating dots (avoids the (K*RC, T) temporary when
            # the contraction already fills the MXU, e.g. RC >= 128 on v5e)
            z = jnp.dot(w[:, (K - 1) * RC:], v, preferred_element_type=jnp.float32)
            for j in range(K - 1):
                z = z + jnp.dot(w[:, j * RC:(j + 1) * RC],
                                _shift_right(v, (K - 1 - j) * d, masks, t_seg),
                                preferred_element_type=jnp.float32)
        z = z + db_ref[l]                               # (2DC, Ltot), f32
        gate = z[:dc]                                   # first half  -> gate
        filt = z[dc:]                                   # second half -> filter
        g = jnp.tanh(filt) * jax.nn.sigmoid(gate)       # f32 (VPU/EUP)
        # residual (RC rows) and skip (SC rows) 1x1 convs fused in one matmul
        rs = jnp.dot(rsw_ref[l], g.astype(cdt),
                     preferred_element_type=jnp.float32) + rsb_ref[l]
        h = rs[:RC] + residual                          # f32 residual stream
        skip_sum = skip_sum + rs[RC:]                   # f32 skip accumulator

    y = jnp.maximum(skip_sum, 0.0)                      # ReLU; dropout == identity
    y = jnp.dot(o1w_ref[...], y.astype(cdt),
                preferred_element_type=jnp.float32) + o1b_ref[...]
    y = jnp.maximum(y, 0.0)                             # ReLU; dropout == identity
    y = jnp.dot(o2w_ref[...], y.astype(cdt),
                preferred_element_type=jnp.float32) + o2b_ref[...]
    out_ref[...] = y.astype(out_ref.dtype)
    # TODO(synk): nn.Dropout(0.2) is stochastic (training mode); implemented
    # as eval-mode identity.


# ---------------------------------------------------------------------------
# host-side weight packing (torch Conv1d layout -> fused kernel layout)
# ---------------------------------------------------------------------------
def pack_params(cw_t, cb_t, dw_t, db_t, rw_t, rb_t, sw_t, sb_t,
                o1w_t, o1b_t, o2w_t, o2b_t, *, compute_dtype=jnp.bfloat16):
    """Repack torch-layout Conv1d weights, pad channel dims to the sublane
    packing multiple (exact zero padding), cast weights to compute_dtype."""
    L, two_dc, RC, K = dw_t.shape
    DC = two_dc // 2
    IC = cw_t.shape[1]
    SC = sw_t.shape[1]
    NC = o2w_t.shape[0]
    cdt = jnp.dtype(compute_dtype)
    mult = max(8, 32 // cdt.itemsize)                   # 8 for f32, 16 for bf16
    RCp, DCp, SCp = _rup(RC, mult), _rup(DC, mult), _rup(SC, mult)
    ICp, NCp = _rup(IC, mult), _rup(NC, mult)
    f32 = jnp.float32

    def pad_to(a, shape):
        return jnp.pad(a, [(0, t - s) for s, t in zip(a.shape, shape)])

    # causal conv: (K, RCp, ICp)
    cw = pad_to(jnp.transpose(cw_t, (2, 0, 1)), (K, RCp, ICp)).astype(cdt)
    cb = pad_to(cb_t, (RCp,))[:, None].astype(f32)

    # dilated convs: pad gate / filter halves separately, fuse taps
    dw_g = pad_to(dw_t[:, :DC], (L, DCp, RCp, K))
    dw_f = pad_to(dw_t[:, DC:], (L, DCp, RCp, K))
    dw = jnp.concatenate([dw_g, dw_f], axis=1)                       # (L, 2DCp, RCp, K)
    dw = jnp.transpose(dw, (0, 1, 3, 2)).reshape(L, 2 * DCp, K * RCp).astype(cdt)
    db = jnp.concatenate([pad_to(db_t[:, :DC], (L, DCp)),
                          pad_to(db_t[:, DC:], (L, DCp))], axis=1)[:, :, None].astype(f32)

    # fused residual + skip 1x1: (L, RCp + SCp, DCp)
    rsw = jnp.concatenate([pad_to(rw_t[..., 0], (L, RCp, DCp)),
                           pad_to(sw_t[..., 0], (L, SCp, DCp))], axis=1).astype(cdt)
    rsb = jnp.concatenate([pad_to(rb_t, (L, RCp)),
                           pad_to(sb_t, (L, SCp))], axis=1)[:, :, None].astype(f32)

    o1w = pad_to(o1w_t[..., 0], (SCp, SCp)).astype(cdt)
    o1b = pad_to(o1b_t, (SCp,))[:, None].astype(f32)
    o2w = pad_to(o2w_t[..., 0], (NCp, SCp)).astype(cdt)
    o2b = pad_to(o2b_t, (NCp,))[:, None].astype(f32)

    return (cw, cb, dw, db, rsw, rsb, o1w, o1b, o2w, o2b)


# ---------------------------------------------------------------------------
# wrapper
# ---------------------------------------------------------------------------
def wavenet_forward(x, params, *, num_classes=None, batch_fold=None,
                    single_buffer_weights=True):
    B, IC, T = x.shape
    cw = params[0]
    K, RCp, ICp = cw.shape
    DCp = params[2].shape[1] // 2
    SCp = params[4].shape[1] - RCp
    NCp = params[8].shape[0]
    NC = NCp if num_classes is None else num_classes
    cdt = params[0].dtype

    # lane-dense per-batch segment: pad time to a multiple of 128 so stores
    # are unmasked; causality guarantees the tail never leaks into t < T.
    Tseg = max(128, _rup(T, 128))

    # fold several batch elements into the lane axis when channels are small
    # (weights are batch-shared; per-segment causal masks keep them separate)
    if batch_fold is None:
        if max(RCp, DCp, SCp) <= 32 and B > 1:
            bf = max(1, min(B, 2048 // Tseg))
            while B % bf:
                bf -= 1
        else:
            bf = 1
    else:
        bf = batch_fold
    assert B % bf == 0
    G, Ltot = B // bf, bf * Tseg

    # pad input channels / time, fold batches, cast to compute dtype (halves
    # HBM traffic for x in the bf16 path)
    xp = jnp.pad(x, ((0, 0), (0, ICp - IC), (0, Tseg - T)))
    xf = xp.reshape(G, bf, ICp, Tseg).transpose(0, 2, 1, 3).reshape(G, ICp, Ltot)
    xf = xf.astype(cdt)

    def weight_spec(a):
        nd = a.ndim
        idx = lambda b, nd=nd: (0,) * nd
        if single_buffer_weights:
            # constant block index across the grid -> single-buffer to halve
            # the resident weight footprint (important on v7x's 64 MiB VMEM)
            return pl.BlockSpec(a.shape, idx, pipeline_mode=pl.Buffered(1))
        return pl.BlockSpec(a.shape, idx)

    in_specs = [pl.BlockSpec((None, ICp, Ltot), lambda b: (b, 0, 0))]
    in_specs += [weight_spec(a) for a in params]
    out_spec = pl.BlockSpec((None, NCp, Ltot), lambda b: (b, 0, 0))

    kern = functools.partial(wavenet_kernel, t_seg=Tseg,
                             fuse_taps=(K * RCp) <= 256)

    call = pl.pallas_call(
        kern,
        out_shape=jax.ShapeDtypeStruct((G, NCp, Ltot), jnp.float32),
        grid=(G,),
        in_specs=in_specs,
        out_specs=out_spec,
        compiler_params=pltpu.CompilerParams(
            dimension_semantics=("parallel",),        # batch elems independent
            vmem_limit_bytes=_vmem_limit_bytes(),
        ),
    )
    try:
        out = call(xf, *params)
    except Exception:
        if not single_buffer_weights:
            raise
        # fall back to default double-buffered weight blocks
        return wavenet_forward(x, params, num_classes=num_classes,
                               batch_fold=bf, single_buffer_weights=False)

    out = out.reshape(G, NCp, bf, Tseg).transpose(0, 2, 1, 3).reshape(B, NCp, Tseg)
    return out[:, :NC, :T]
    # TODO(synk): for very long T / very large channel counts, tile the time
    # axis with a receptive-field halo of (K-1)*sum(dilations) samples
    # (overlapping windows via manual DMA) instead of one full slab per step.


# ---------------------------------------------------------------------------
# pure-JAX reference (mirrors the PyTorch forward exactly)
# ---------------------------------------------------------------------------
def conv1d_ref(x, w, b, dilation, padding):
    y = lax.conv_general_dilated(
        x, w, window_strides=(1,), padding=[(padding, padding)],
        rhs_dilation=(dilation,), dimension_numbers=("NCH", "OIH", "NCH"))
    return y + b[None, :, None]


def wavenet_ref(x, tparams, kernel_size, num_layers):
    (cw, cb, dws, dbs, rws, rbs, sws, sbs, o1w, o1b, o2w, o2b) = tparams
    K = kernel_size
    T = x.shape[-1]
    h = conv1d_ref(x, cw, cb, 1, K - 1)[:, :, : -(K - 1)]
    skips = []
    for l in range(num_layers):
        d = 2 ** (l % 10)
        residual = h
        z = conv1d_ref(h, dws[l], dbs[l], d, (K - 1) * d)[:, :, :T]
        dc = z.shape[1] // 2
        gate, filt = z[:, :dc], z[:, dc:]
        h = jnp.tanh(filt) * jax.nn.sigmoid(gate)
        skips.append(conv1d_ref(h, sws[l], sbs[l], 1, 0))
        h = conv1d_ref(h, rws[l], rbs[l], 1, 0) + residual
    y = jax.nn.relu(sum(skips))
    y = jax.nn.relu(conv1d_ref(y, o1w, o1b, 1, 0))
    return conv1d_ref(y, o2w, o2b, 1, 0)


# ---------------------------------------------------------------------------
if __name__ == "__main__":
    # small, forward-consistent sizes
    IC, RC, DC, SC, K, NC, L = 4, 8, 8, 8, 2, 4, 3
    B, T = 2, 16

    key = jax.random.PRNGKey(0)
    ks = jax.random.split(key, 16)

    # parameters in torch Conv1d layout (out, in, k)
    cw_t = jax.random.normal(ks[0], (RC, IC, K), jnp.float32) * 0.3
    cb_t = jax.random.normal(ks[1], (RC,), jnp.float32) * 0.1
    dw_t = jax.random.normal(ks[2], (L, 2 * DC, RC, K), jnp.float32) * 0.01
    db_t = jnp.concatenate([jnp.zeros((L, DC), jnp.float32),
                            jnp.ones((L, DC), jnp.float32)], axis=1)  # torch init
    rw_t = jax.random.normal(ks[3], (L, RC, DC, 1), jnp.float32) * 0.3
    rb_t = jax.random.normal(ks[4], (L, RC), jnp.float32) * 0.1
    sw_t = jax.random.normal(ks[5], (L, SC, DC, 1), jnp.float32) * 0.3
    sb_t = jax.random.normal(ks[6], (L, SC), jnp.float32) * 0.1
    o1w_t = jax.random.normal(ks[7], (SC, SC, 1), jnp.float32) * 0.3
    o1b_t = jax.random.normal(ks[8], (SC,), jnp.float32) * 0.1
    o2w_t = jax.random.normal(ks[9], (NC, SC, 1), jnp.float32) * 0.3
    o2b_t = jax.random.normal(ks[10], (NC,), jnp.float32) * 0.1
    x = jax.random.normal(ks[11], (B, IC, T), jnp.float32)

    torch_params = (cw_t, cb_t, dw_t, db_t, rw_t, rb_t, sw_t, sb_t,
                    o1w_t, o1b_t, o2w_t, o2b_t)
    ref = wavenet_ref(x, torch_params, K, L)

    # exactness check with f32 MXU packing
    params_f32 = pack_params(*torch_params, compute_dtype=jnp.float32)
    out_f32 = jax.block_until_ready(wavenet_forward(x, params_f32, num_classes=NC))
    np.testing.assert_allclose(np.asarray(out_f32), np.asarray(ref),
                               rtol=1e-4, atol=1e-4)

    # production path: bf16 weights/activations on the MXU, f32 accumulation
    params_bf16 = pack_params(*torch_params, compute_dtype=jnp.bfloat16)
    out_bf16 = jax.block_until_ready(wavenet_forward(x, params_bf16, num_classes=NC))
    np.testing.assert_allclose(np.asarray(out_bf16), np.asarray(ref),
                               rtol=5e-2, atol=5e-2)

    print("KERNEL_OK")
</pallas_src>

<mosaic_0001>
module attributes {stable_mosaic.version = 11 : i64} {
  func.func @wavenet_kernel(%arg0: i32, %arg1: memref<1x8x256xf32, #tpu.memory_space<vmem>>, %arg2: memref<2x8x8xf32, #tpu.memory_space<vmem>>, %arg3: memref<8x1xf32, #tpu.memory_space<vmem>>, %arg4: memref<3x16x16xf32, #tpu.memory_space<vmem>>, %arg5: memref<3x16x1xf32, #tpu.memory_space<vmem>>, %arg6: memref<3x16x8xf32, #tpu.memory_space<vmem>>, %arg7: memref<3x16x1xf32, #tpu.memory_space<vmem>>, %arg8: memref<8x8xf32, #tpu.memory_space<vmem>>, %arg9: memref<8x1xf32, #tpu.memory_space<vmem>>, %arg10: memref<8x8xf32, #tpu.memory_space<vmem>>, %arg11: memref<8x1xf32, #tpu.memory_space<vmem>>, %arg12: memref<1x8x256xf32, #tpu.memory_space<vmem>>) attributes {dimension_semantics = [#tpu.dimension_semantics<parallel>], iteration_bounds = array<i64: 1>, scalar_prefetch = 0 : i64, scratch_operands = 0 : i64, tpu.core_type = #tpu.core_type<tc>, window_params = [{transform_indices = @transform_0, window_bounds = array<i64: 1, 8, 256>}, {pipeline_mode = #tpu.pipeline_mode<synchronous>, transform_indices = @transform_1, window_bounds = array<i64: 2, 8, 8>}, {pipeline_mode = #tpu.pipeline_mode<synchronous>, transform_indices = @transform_2, window_bounds = array<i64: 8, 1>}, {pipeline_mode = #tpu.pipeline_mode<synchronous>, transform_indices = @transform_3, window_bounds = array<i64: 3, 16, 16>}, {pipeline_mode = #tpu.pipeline_mode<synchronous>, transform_indices = @transform_4, window_bounds = array<i64: 3, 16, 1>}, {pipeline_mode = #tpu.pipeline_mode<synchronous>, transform_indices = @transform_5, window_bounds = array<i64: 3, 16, 8>}, {pipeline_mode = #tpu.pipeline_mode<synchronous>, transform_indices = @transform_6, window_bounds = array<i64: 3, 16, 1>}, {pipeline_mode = #tpu.pipeline_mode<synchronous>, transform_indices = @transform_7, window_bounds = array<i64: 8, 8>}, {pipeline_mode = #tpu.pipeline_mode<synchronous>, transform_indices = @transform_8, window_bounds = array<i64: 8, 1>}, {pipeline_mode = #tpu.pipeline_mode<synchronous>, transform_indices = @transform_9, window_bounds = array<i64: 8, 8>}, {pipeline_mode = #tpu.pipeline_mode<synchronous>, transform_indices = @transform_10, window_bounds = array<i64: 8, 1>}, {transform_indices = @transform_11, window_bounds = array<i64: 1, 8, 256>}]} {
    %c0 = arith.constant 0 : index
    %c0_0 = arith.constant 0 : index
    %c0_1 = arith.constant 0 : index
    %0 = vector.load %arg1[%c0, %c0_0, %c0_1] : memref<1x8x256xf32, #tpu.memory_space<vmem>>, vector<1x8x256xf32>
    %1 = vector.shape_cast %0 : vector<1x8x256xf32> to vector<8x256xf32>
    %2 = tpu.iota {dimensions = array<i32: 1>} : vector<1x256xi32>
    %c128_i32 = arith.constant 128 : i32
    %c0_i32 = arith.constant 0 : i32
    %3 = arith.cmpi eq, %c128_i32, %c0_i32 : i32
    %c1_i32 = arith.constant 1 : i32
    %4 = arith.select %3, %c1_i32, %c128_i32 : i32
    %5 = vector.broadcast %4 : i32 to vector<1x256xi32>
    %6 = arith.remsi %2, %5 : vector<1x256xi32>
    %c0_i32_2 = arith.constant 0 : i32
    %7 = vector.broadcast %c0_i32_2 : i32 to vector<1x256xi32>
    %8 = arith.cmpi ne, %6, %7 : vector<1x256xi32>
    %c0_i32_3 = arith.constant 0 : i32
    %9 = vector.broadcast %c0_i32_3 : i32 to vector<1x256xi32>
    %10 = arith.cmpi slt, %6, %9 : vector<1x256xi32>
    %c0_i32_4 = arith.constant 0 : i32
    %11 = arith.cmpi slt, %4, %c0_i32_4 : i32
    %12 = vector.broadcast %11 : i1 to vector<1x256xi1>
    %13 = vector.broadcast %12 : vector<1x256xi1> to vector<1x256xi1>
    %14 = arith.xori %10, %13 : vector<1x256xi1>
    %15 = arith.andi %14, %8 : vector<1x256xi1>
    %16 = vector.broadcast %4 : i32 to vector<1x256xi32>
    %17 = arith.addi %6, %16 : vector<1x256xi32>
    %18 = arith.select %15, %17, %6 : vector<1x256xi1>, vector<1x256xi32>
    %c1_i32_5 = arith.constant 1 : i32
    %19 = vector.broadcast %c1_i32_5 : i32 to vector<1x256xi32>
    %20 = arith.cmpi sge, %18, %19 : vector<1x256xi32>
    %c2_i32 = arith.constant 2 : i32
    %21 = vector.broadcast %c2_i32 : i32 to vector<1x256xi32>
    %22 = arith.cmpi sge, %18, %21 : vector<1x256xi32>
    %c4_i32 = arith.constant 4 : i32
    %23 = vector.broadcast %c4_i32 : i32 to vector<1x256xi32>
    %24 = arith.cmpi sge, %18, %23 : vector<1x256xi32>
    %c1 = arith.constant 1 : index
    %c0_6 = arith.constant 0 : index
    %c0_7 = arith.constant 0 : index
    %25 = vector.load %arg2[%c1, %c0_6, %c0_7] : memref<2x8x8xf32, #tpu.memory_space<vmem>>, vector<1x8x8xf32>
    %26 = vector.shape_cast %25 : vector<1x8x8xf32> to vector<8x8xf32>
    %cst = arith.constant dense<0.000000e+00> : vector<8x256xf32>
    %27 = tpu.matmul %26, %1, %cst {dimension_numbers = #tpu.dot_dimension_numbers<[1], [0], [0], [1], [0, 0, 1, 1], [], []>} : vector<8x8xf32>, vector<8x256xf32>, vector<8x256xf32> -> vector<8x256xf32>
    %c0_8 = arith.constant 0 : index
    %c0_9 = arith.constant 0 : index
    %c0_10 = arith.constant 0 : index
    %28 = vector.load %arg2[%c0_8, %c0_9, %c0_10] : memref<2x8x8xf32, #tpu.memory_space<vmem>>, vector<1x8x8xf32>
    %29 = vector.shape_cast %28 : vector<1x8x8xf32> to vector<8x8xf32>
    %c1_i32_11 = arith.constant 1 : i32
    %30 = tpu.dynamic_rotate %1 by %c1_i32_11 dim 1 : vector<8x256xf32>, i32 -> vector<8x256xf32>
    %cst_12 = arith.constant 0.000000e+00 : f32
    %31 = vector.broadcast %cst_12 : f32 to vector<8x256xf32>
    %32 = vector.shape_cast %20 : vector<1x256xi1> to vector<1x256xi1>
    %33 = vector.broadcast %32 : vector<1x256xi1> to vector<8x256xi1>
    %34 = arith.select %33, %30, %31 : vector<8x256xi1>, vector<8x256xf32>
    %cst_13 = arith.constant dense<0.000000e+00> : vector<8x256xf32>
    %35 = tpu.matmul %29, %34, %cst_13 {dimension_numbers = #tpu.dot_dimension_numbers<[1], [0], [0], [1], [0, 0, 1, 1], [], []>} : vector<8x8xf32>, vector<8x256xf32>, vector<8x256xf32> -> vector<8x256xf32>
    %36 = arith.addf %27, %35 : vector<8x256xf32>
    %c0_14 = arith.constant 0 : index
    %c0_15 = arith.constant 0 : index
    %37 = vector.load %arg3[%c0_14, %c0_15] : memref<8x1xf32, #tpu.memory_space<vmem>>, vector<8x1xf32>
    %38 = vector.broadcast %37 : vector<8x1xf32> to vector<8x256xf32>
    %39 = arith.addf %36, %38 : vector<8x256xf32>
    %cst_16 = arith.constant 0.000000e+00 : f32
    %40 = vector.broadcast %cst_16 : f32 to vector<8x256xf32>
    %c0_17 = arith.constant 0 : index
    %c0_18 = arith.constant 0 : index
    %c0_19 = arith.constant 0 : index
    %41 = vector.load %arg4[%c0_17, %c0_18, %c0_19] : memref<3x16x16xf32, #tpu.memory_space<vmem>>, vector<1x16x16xf32>
    %42 = vector.shape_cast %41 : vector<1x16x16xf32> to vector<16x16xf32>
    %c1_i32_20 = arith.constant 1 : i32
    %43 = tpu.dynamic_rotate %39 by %c1_i32_20 dim 1 : vector<8x256xf32>, i32 -> vector<8x256xf32>
    %cst_21 = arith.constant 0.000000e+00 : f32
    %44 = vector.broadcast %cst_21 : f32 to vector<8x256xf32>
    %45 = vector.shape_cast %20 : vector<1x256xi1> to vector<1x256xi1>
    %46 = vector.broadcast %45 : vector<1x256xi1> to vector<8x256xi1>
    %47 = arith.select %46, %43, %44 : vector<8x256xi1>, vector<8x256xf32>
    %48 = tpu.concatenate %47, %39 in 0 : vector<8x256xf32>, vector<8x256xf32> -> vector<16x256xf32>
    %cst_22 = arith.constant dense<0.000000e+00> : vector<16x256xf32>
    %49 = tpu.matmul %42, %48, %cst_22 {dimension_numbers = #tpu.dot_dimension_numbers<[1], [0], [0], [1], [0, 0, 1, 1], [], []>} : vector<16x16xf32>, vector<16x256xf32>, vector<16x256xf32> -> vector<16x256xf32>
    %c0_23 = arith.constant 0 : index
    %c0_24 = arith.constant 0 : index
    %c0_25 = arith.constant 0 : index
    %50 = vector.load %arg5[%c0_23, %c0_24, %c0_25] : memref<3x16x1xf32, #tpu.memory_space<vmem>>, vector<1x16x1xf32>
    %51 = vector.shape_cast %50 : vector<1x16x1xf32> to vector<16x1xf32>
    %52 = vector.broadcast %51 : vector<16x1xf32> to vector<16x256xf32>
    %53 = arith.addf %49, %52 : vector<16x256xf32>
    %54 = vector.extract_strided_slice %53 {offsets = [0, 0], sizes = [8, 256], strides = [1, 1]} : vector<16x256xf32> to vector<8x256xf32>
    %55 = vector.extract_strided_slice %53 {offsets = [8, 0], sizes = [8, 256], strides = [1, 1]} : vector<16x256xf32> to vector<8x256xf32>
    %56 = math.tanh %55 : vector<8x256xf32>
    %57 = arith.negf %54 : vector<8x256xf32>
    %58 = math.exp %57 : vector<8x256xf32>
    %cst_26 = arith.constant 1.000000e+00 : f32
    %59 = vector.broadcast %cst_26 : f32 to vector<8x256xf32>
    %60 = arith.addf %59, %58 : vector<8x256xf32>
    %61 = arith.divf %59, %60 : vector<8x256xf32>
    %62 = arith.mulf %56, %61 : vector<8x256xf32>
    %c0_27 = arith.constant 0 : index
    %c0_28 = arith.constant 0 : index
    %c0_29 = arith.constant 0 : index
    %63 = vector.load %arg6[%c0_27, %c0_28, %c0_29] : memref<3x16x8xf32, #tpu.memory_space<vmem>>, vector<1x16x8xf32>
    %64 = vector.shape_cast %63 : vector<1x16x8xf32> to vector<16x8xf32>
    %cst_30 = arith.constant dense<0.000000e+00> : vector<16x256xf32>
    %65 = tpu.matmul %64, %62, %cst_30 {dimension_numbers = #tpu.dot_dimension_numbers<[1], [0], [0], [1], [0, 0, 1, 1], [], []>} : vector<16x8xf32>, vector<8x256xf32>, vector<16x256xf32> -> vector<16x256xf32>
    %c0_31 = arith.constant 0 : index
    %c0_32 = arith.constant 0 : index
    %c0_33 = arith.constant 0 : index
    %66 = vector.load %arg7[%c0_31, %c0_32, %c0_33] : memref<3x16x1xf32, #tpu.memory_space<vmem>>, vector<1x16x1xf32>
    %67 = vector.shape_cast %66 : vector<1x16x1xf32> to vector<16x1xf32>
    %68 = vector.broadcast %67 : vector<16x1xf32> to vector<16x256xf32>
    %69 = arith.addf %65, %68 : vector<16x256xf32>
    %70 = vector.extract_strided_slice %69 {offsets = [0, 0], sizes = [8, 256], strides = [1, 1]} : vector<16x256xf32> to vector<8x256xf32>
    %71 = arith.addf %70, %39 : vector<8x256xf32>
    %72 = vector.extract_strided_slice %69 {offsets = [8, 0], sizes = [8, 256], strides = [1, 1]} : vector<16x256xf32> to vector<8x256xf32>
    %73 = arith.addf %40, %72 : vector<8x256xf32>
    %c1_34 = arith.constant 1 : index
    %c0_35 = arith.constant 0 : index
    %c0_36 = arith.constant 0 : index
    %74 = vector.load %arg4[%c1_34, %c0_35, %c0_36] : memref<3x16x16xf32, #tpu.memory_space<vmem>>, vector<1x16x16xf32>
    %75 = vector.shape_cast %74 : vector<1x16x16xf32> to vector<16x16xf32>
    %c2_i32_37 = arith.constant 2 : i32
    %76 = tpu.dynamic_rotate %71 by %c2_i32_37 dim 1 : vector<8x256xf32>, i32 -> vector<8x256xf32>
    %cst_38 = arith.constant 0.000000e+00 : f32
    %77 = vector.broadcast %cst_38 : f32 to vector<8x256xf32>
    %78 = vector.shape_cast %22 : vector<1x256xi1> to vector<1x256xi1>
    %79 = vector.broadcast %78 : vector<1x256xi1> to vector<8x256xi1>
    %80 = arith.select %79, %76, %77 : vector<8x256xi1>, vector<8x256xf32>
    %81 = tpu.concatenate %80, %71 in 0 : vector<8x256xf32>, vector<8x256xf32> -> vector<16x256xf32>
    %cst_39 = arith.constant dense<0.000000e+00> : vector<16x256xf32>
    %82 = tpu.matmul %75, %81, %cst_39 {dimension_numbers = #tpu.dot_dimension_numbers<[1], [0], [0], [1], [0, 0, 1, 1], [], []>} : vector<16x16xf32>, vector<16x256xf32>, vector<16x256xf32> -> vector<16x256xf32>
    %c1_40 = arith.constant 1 : index
    %c0_41 = arith.constant 0 : index
    %c0_42 = arith.constant 0 : index
    %83 = vector.load %arg5[%c1_40, %c0_41, %c0_42] : memref<3x16x1xf32, #tpu.memory_space<vmem>>, vector<1x16x1xf32>
    %84 = vector.shape_cast %83 : vector<1x16x1xf32> to vector<16x1xf32>
    %85 = vector.broadcast %84 : vector<16x1xf32> to vector<16x256xf32>
    %86 = arith.addf %82, %85 : vector<16x256xf32>
    %87 = vector.extract_strided_slice %86 {offsets = [0, 0], sizes = [8, 256], strides = [1, 1]} : vector<16x256xf32> to vector<8x256xf32>
    %88 = vector.extract_strided_slice %86 {offsets = [8, 0], sizes = [8, 256], strides = [1, 1]} : vector<16x256xf32> to vector<8x256xf32>
    %89 = math.tanh %88 : vector<8x256xf32>
    %90 = arith.negf %87 : vector<8x256xf32>
    %91 = math.exp %90 : vector<8x256xf32>
    %cst_43 = arith.constant 1.000000e+00 : f32
    %92 = vector.broadcast %cst_43 : f32 to vector<8x256xf32>
    %93 = arith.addf %92, %91 : vector<8x256xf32>
    %94 = arith.divf %92, %93 : vector<8x256xf32>
    %95 = arith.mulf %89, %94 : vector<8x256xf32>
    %c1_44 = arith.constant 1 : index
    %c0_45 = arith.constant 0 : index
    %c0_46 = arith.constant 0 : index
    %96 = vector.load %arg6[%c1_44, %c0_45, %c0_46] : memref<3x16x8xf32, #tpu.memory_space<vmem>>, vector<1x16x8xf32>
    %97 = vector.shape_cast %96 : vector<1x16x8xf32> to vector<16x8xf32>
    %cst_47 = arith.constant dense<0.000000e+00> : vector<16x256xf32>
    %98 = tpu.matmul %97, %95, %cst_47 {dimension_numbers = #tpu.dot_dimension_numbers<[1], [0], [0], [1], [0, 0, 1, 1], [], []>} : vector<16x8xf32>, vector<8x256xf32>, vector<16x256xf32> -> vector<16x256xf32>
    %c1_48 = arith.constant 1 : index
    %c0_49 = arith.constant 0 : index
    %c0_50 = arith.constant 0 : index
    %99 = vector.load %arg7[%c1_48, %c0_49, %c0_50] : memref<3x16x1xf32, #tpu.memory_space<vmem>>, vector<1x16x1xf32>
    %100 = vector.shape_cast %99 : vector<1x16x1xf32> to vector<16x1xf32>
    %101 = vector.broadcast %100 : vector<16x1xf32> to vector<16x256xf32>
    %102 = arith.addf %98, %101 : vector<16x256xf32>
    %103 = vector.extract_strided_slice %102 {offsets = [0, 0], sizes = [8, 256], strides = [1, 1]} : vector<16x256xf32> to vector<8x256xf32>
    %104 = arith.addf %103, %71 : vector<8x256xf32>
    %105 = vector.extract_strided_slice %102 {offsets = [8, 0], sizes = [8, 256], strides = [1, 1]} : vector<16x256xf32> to vector<8x256xf32>
    %106 = arith.addf %73, %105 : vector<8x256xf32>
    %c2 = arith.constant 2 : index
    %c0_51 = arith.constant 0 : index
    %c0_52 = arith.constant 0 : index
    %107 = vector.load %arg4[%c2, %c0_51, %c0_52] : memref<3x16x16xf32, #tpu.memory_space<vmem>>, vector<1x16x16xf32>
    %108 = vector.shape_cast %107 : vector<1x16x16xf32> to vector<16x16xf32>
    %c4_i32_53 = arith.constant 4 : i32
    %109 = tpu.dynamic_rotate %104 by %c4_i32_53 dim 1 : vector<8x256xf32>, i32 -> vector<8x256xf32>
    %cst_54 = arith.constant 0.000000e+00 : f32
    %110 = vector.broadcast %cst_54 : f32 to vector<8x256xf32>
    %111 = vector.shape_cast %24 : vector<1x256xi1> to vector<1x256xi1>
    %112 = vector.broadcast %111 : vector<1x256xi1> to vector<8x256xi1>
    %113 = arith.select %112, %109, %110 : vector<8x256xi1>, vector<8x256xf32>
    %114 = tpu.concatenate %113, %104 in 0 : vector<8x256xf32>, vector<8x256xf32> -> vector<16x256xf32>
    %cst_55 = arith.constant dense<0.000000e+00> : vector<16x256xf32>
    %115 = tpu.matmul %108, %114, %cst_55 {dimension_numbers = #tpu.dot_dimension_numbers<[1], [0], [0], [1], [0, 0, 1, 1], [], []>} : vector<16x16xf32>, vector<16x256xf32>, vector<16x256xf32> -> vector<16x256xf32>
    %c2_56 = arith.constant 2 : index
    %c0_57 = arith.constant 0 : index
    %c0_58 = arith.constant 0 : index
    %116 = vector.load %arg5[%c2_56, %c0_57, %c0_58] : memref<3x16x1xf32, #tpu.memory_space<vmem>>, vector<1x16x1xf32>
    %117 = vector.shape_cast %116 : vector<1x16x1xf32> to vector<16x1xf32>
    %118 = vector.broadcast %117 : vector<16x1xf32> to vector<16x256xf32>
    %119 = arith.addf %115, %118 : vector<16x256xf32>
    %120 = vector.extract_strided_slice %119 {offsets = [0, 0], sizes = [8, 256], strides = [1, 1]} : vector<16x256xf32> to vector<8x256xf32>
    %121 = vector.extract_strided_slice %119 {offsets = [8, 0], sizes = [8, 256], strides = [1, 1]} : vector<16x256xf32> to vector<8x256xf32>
    %122 = math.tanh %121 : vector<8x256xf32>
    %123 = arith.negf %120 : vector<8x256xf32>
    %124 = math.exp %123 : vector<8x256xf32>
    %cst_59 = arith.constant 1.000000e+00 : f32
    %125 = vector.broadcast %cst_59 : f32 to vector<8x256xf32>
    %126 = arith.addf %125, %124 : vector<8x256xf32>
    %127 = arith.divf %125, %126 : vector<8x256xf32>
    %128 = arith.mulf %122, %127 : vector<8x256xf32>
    %c2_60 = arith.constant 2 : index
    %c0_61 = arith.constant 0 : index
    %c0_62 = arith.constant 0 : index
    %129 = vector.load %arg6[%c2_60, %c0_61, %c0_62] : memref<3x16x8xf32, #tpu.memory_space<vmem>>, vector<1x16x8xf32>
    %130 = vector.shape_cast %129 : vector<1x16x8xf32> to vector<16x8xf32>
    %cst_63 = arith.constant dense<0.000000e+00> : vector<16x256xf32>
    %131 = tpu.matmul %130, %128, %cst_63 {dimension_numbers = #tpu.dot_dimension_numbers<[1], [0], [0], [1], [0, 0, 1, 1], [], []>} : vector<16x8xf32>, vector<8x256xf32>, vector<16x256xf32> -> vector<16x256xf32>
    %c2_64 = arith.constant 2 : index
    %c0_65 = arith.constant 0 : index
    %c0_66 = arith.constant 0 : index
    %132 = vector.load %arg7[%c2_64, %c0_65, %c0_66] : memref<3x16x1xf32, #tpu.memory_space<vmem>>, vector<1x16x1xf32>
    %133 = vector.shape_cast %132 : vector<1x16x1xf32> to vector<16x1xf32>
    %134 = vector.broadcast %133 : vector<16x1xf32> to vector<16x256xf32>
    %135 = arith.addf %131, %134 : vector<16x256xf32>
    %136 = vector.extract_strided_slice %135 {offsets = [8, 0], sizes = [8, 256], strides = [1, 1]} : vector<16x256xf32> to vector<8x256xf32>
    %137 = arith.addf %106, %136 : vector<8x256xf32>
    %cst_67 = arith.constant 0.000000e+00 : f32
    %138 = vector.broadcast %cst_67 : f32 to vector<8x256xf32>
    %139 = arith.maximumf %137, %138 : vector<8x256xf32>
    %c0_68 = arith.constant 0 : index
    %c0_69 = arith.constant 0 : index
    %140 = vector.load %arg8[%c0_68, %c0_69] : memref<8x8xf32, #tpu.memory_space<vmem>>, vector<8x8xf32>
    %cst_70 = arith.constant dense<0.000000e+00> : vector<8x256xf32>
    %141 = tpu.matmul %140, %139, %cst_70 {dimension_numbers = #tpu.dot_dimension_numbers<[1], [0], [0], [1], [0, 0, 1, 1], [], []>} : vector<8x8xf32>, vector<8x256xf32>, vector<8x256xf32> -> vector<8x256xf32>
    %c0_71 = arith.constant 0 : index
    %c0_72 = arith.constant 0 : index
    %142 = vector.load %arg9[%c0_71, %c0_72] : memref<8x1xf32, #tpu.memory_space<vmem>>, vector<8x1xf32>
    %143 = vector.broadcast %142 : vector<8x1xf32> to vector<8x256xf32>
    %144 = arith.addf %141, %143 : vector<8x256xf32>
    %cst_73 = arith.constant 0.000000e+00 : f32
    %145 = vector.broadcast %cst_73 : f32 to vector<8x256xf32>
    %146 = arith.maximumf %144, %145 : vector<8x256xf32>
    %c0_74 = arith.constant 0 : index
    %c0_75 = arith.constant 0 : index
    %147 = vector.load %arg10[%c0_74, %c0_75] : memref<8x8xf32, #tpu.memory_space<vmem>>, vector<8x8xf32>
    %cst_76 = arith.constant dense<0.000000e+00> : vector<8x256xf32>
    %148 = tpu.matmul %147, %146, %cst_76 {dimension_numbers = #tpu.dot_dimension_numbers<[1], [0], [0], [1], [0, 0, 1, 1], [], []>} : vector<8x8xf32>, vector<8x256xf32>, vector<8x256xf32> -> vector<8x256xf32>
    %c0_77 = arith.constant 0 : index
    %c0_78 = arith.constant 0 : index
    %149 = vector.load %arg11[%c0_77, %c0_78] : memref<8x1xf32, #tpu.memory_space<vmem>>, vector<8x1xf32>
    %150 = vector.broadcast %149 : vector<8x1xf32> to vector<8x256xf32>
    %151 = arith.addf %148, %150 : vector<8x256xf32>
    %c0_79 = arith.constant 0 : index
    %c0_80 = arith.constant 0 : index
    %c0_81 = arith.constant 0 : index
    %152 = vector.load %arg12[%c0_79, %c0_80, %c0_81] : memref<1x8x256xf32, #tpu.memory_space<vmem>>, vector<1x8x256xf32>
    %153 = vector.shape_cast %152 : vector<1x8x256xf32> to vector<8x256xf32>
    %154 = vector.shape_cast %151 : vector<8x256xf32> to vector<1x8x256xf32>
    tpu.vector_store %arg12[%c0_79, %c0_80, %c0_81], %154 {strides = array<i32>} : memref<1x8x256xf32, #tpu.memory_space<vmem>>, vector<1x8x256xf32>,
    return
  }
  func.func @transform_0(%arg0: i32) -> (i32, i32, i32) {
    %c0_i32 = arith.constant 0 : i32
    %c0_i32_0 = arith.constant 0 : i32
    %c0_i32_1 = arith.constant 0 : i32
    return %arg0, %c0_i32, %c0_i32_0 : i32, i32, i32
  }
  func.func @transform_1(%arg0: i32) -> (i32, i32, i32) {
    %c0_i32 = arith.constant 0 : i32
    %c0_i32_0 = arith.constant 0 : i32
    %c0_i32_1 = arith.constant 0 : i32
    %c0_i32_2 = arith.constant 0 : i32
    return %c0_i32, %c0_i32_0, %c0_i32_1 : i32, i32, i32
  }
  func.func @transform_2(%arg0: i32) -> (i32, i32) {
    %c0_i32 = arith.constant 0 : i32
    %c0_i32_0 = arith.constant 0 : i32
    %c0_i32_1 = arith.constant 0 : i32
    return %c0_i32, %c0_i32_0 : i32, i32
  }
  func.func @transform_3(%arg0: i32) -> (i32, i32, i32) {
    %c0_i32 = arith.constant 0 : i32
    %c0_i32_0 = arith.constant 0 : i32
    %c0_i32_1 = arith.constant 0 : i32
    %c0_i32_2 = arith.constant 0 : i32
    return %c0_i32, %c0_i32_0, %c0_i32_1 : i32, i32, i32
  }
  func.func @transform_4(%arg0: i32) -> (i32, i32, i32) {
    %c0_i32 = arith.constant 0 : i32
    %c0_i32_0 = arith.constant 0 : i32
    %c0_i32_1 = arith.constant 0 : i32
    %c0_i32_2 = arith.constant 0 : i32
    return %c0_i32, %c0_i32_0, %c0_i32_1 : i32, i32, i32
  }
  func.func @transform_5(%arg0: i32) -> (i32, i32, i32) {
    %c0_i32 = arith.constant 0 : i32
    %c0_i32_0 = arith.constant 0 : i32
    %c0_i32_1 = arith.constant 0 : i32
    %c0_i32_2 = arith.constant 0 : i32
    return %c0_i32, %c0_i32_0, %c0_i32_1 : i32, i32, i32
  }
  func.func @transform_6(%arg0: i32) -> (i32, i32, i32) {
    %c0_i32 = arith.constant 0 : i32
    %c0_i32_0 = arith.constant 0 : i32
    %c0_i32_1 = arith.constant 0 : i32
    %c0_i32_2 = arith.constant 0 : i32
    return %c0_i32, %c0_i32_0, %c0_i32_1 : i32, i32, i32
  }
  func.func @transform_7(%arg0: i32) -> (i32, i32) {
    %c0_i32 = arith.constant 0 : i32
    %c0_i32_0 = arith.constant 0 : i32
    %c0_i32_1 = arith.constant 0 : i32
    return %c0_i32, %c0_i32_0 : i32, i32
  }
  func.func @transform_8(%arg0: i32) -> (i32, i32) {
    %c0_i32 = arith.constant 0 : i32
    %c0_i32_0 = arith.constant 0 : i32
    %c0_i32_1 = arith.constant 0 : i32
    return %c0_i32, %c0_i32_0 : i32, i32
  }
  func.func @transform_9(%arg0: i32) -> (i32, i32) {
    %c0_i32 = arith.constant 0 : i32
    %c0_i32_0 = arith.constant 0 : i32
    %c0_i32_1 = arith.constant 0 : i32
    return %c0_i32, %c0_i32_0 : i32, i32
  }
  func.func @transform_10(%arg0: i32) -> (i32, i32) {
    %c0_i32 = arith.constant 0 : i32
    %c0_i32_0 = arith.constant 0 : i32
    %c0_i32_1 = arith.constant 0 : i32
    return %c0_i32, %c0_i32_0 : i32, i32
  }
  func.func @transform_11(%arg0: i32) -> (i32, i32, i32) {
    %c0_i32 = arith.constant 0 : i32
    %c0_i32_0 = arith.constant 0 : i32
    %c0_i32_1 = arith.constant 0 : i32
    return %arg0, %c0_i32, %c0_i32_0 : i32, i32, i32
  }
}

module attributes {stable_mosaic.version = 11 : i64} {
  func.func @wavenet_kernel(%arg0: i32, %arg1: memref<1x8x256xf32, #tpu.memory_space<vmem>>, %arg2: memref<2x8x8xf32, #tpu.memory_space<vmem>>, %arg3: memref<8x1xf32, #tpu.memory_space<vmem>>, %arg4: memref<3x16x16xf32, #tpu.memory_space<vmem>>, %arg5: memref<3x16x1xf32, #tpu.memory_space<vmem>>, %arg6: memref<3x16x8xf32, #tpu.memory_space<vmem>>, %arg7: memref<3x16x1xf32, #tpu.memory_space<vmem>>, %arg8: memref<8x8xf32, #tpu.memory_space<vmem>>, %arg9: memref<8x1xf32, #tpu.memory_space<vmem>>, %arg10: memref<8x8xf32, #tpu.memory_space<vmem>>, %arg11: memref<8x1xf32, #tpu.memory_space<vmem>>, %arg12: memref<1x8x256xf32, #tpu.memory_space<vmem>>) attributes {dimension_semantics = [#tpu.dimension_semantics<parallel>], iteration_bounds = array<i64: 1>, scalar_prefetch = 0 : i64, scratch_operands = 0 : i64, tpu.core_type = #tpu.core_type<tc>, window_params = [{transform_indices = @transform_0, window_bounds = array<i64: 1, 8, 256>}, {pipeline_mode = #tpu.pipeline_mode<synchronous>, transform_indices = @transform_1, window_bounds = array<i64: 2, 8, 8>}, {pipeline_mode = #tpu.pipeline_mode<synchronous>, transform_indices = @transform_2, window_bounds = array<i64: 8, 1>}, {pipeline_mode = #tpu.pipeline_mode<synchronous>, transform_indices = @transform_3, window_bounds = array<i64: 3, 16, 16>}, {pipeline_mode = #tpu.pipeline_mode<synchronous>, transform_indices = @transform_4, window_bounds = array<i64: 3, 16, 1>}, {pipeline_mode = #tpu.pipeline_mode<synchronous>, transform_indices = @transform_5, window_bounds = array<i64: 3, 16, 8>}, {pipeline_mode = #tpu.pipeline_mode<synchronous>, transform_indices = @transform_6, window_bounds = array<i64: 3, 16, 1>}, {pipeline_mode = #tpu.pipeline_mode<synchronous>, transform_indices = @transform_7, window_bounds = array<i64: 8, 8>}, {pipeline_mode = #tpu.pipeline_mode<synchronous>, transform_indices = @transform_8, window_bounds = array<i64: 8, 1>}, {pipeline_mode = #tpu.pipeline_mode<synchronous>, transform_indices = @transform_9, window_bounds = array<i64: 8, 8>}, {pipeline_mode = #tpu.pipeline_mode<synchronous>, transform_indices = @transform_10, window_bounds = array<i64: 8, 1>}, {transform_indices = @transform_11, window_bounds = array<i64: 1, 8, 256>}]} {
    %c0 = arith.constant 0 : index
    %c0_0 = arith.constant 0 : index
    %c0_1 = arith.constant 0 : index
    %0 = vector.load %arg1[%c0, %c0_0, %c0_1] : memref<1x8x256xf32, #tpu.memory_space<vmem>>, vector<1x8x256xf32>
    %1 = vector.shape_cast %0 : vector<1x8x256xf32> to vector<8x256xf32>
    %2 = tpu.iota {dimensions = array<i32: 1>} : vector<1x256xi32>
    %c128_i32 = arith.constant 128 : i32
    %c0_i32 = arith.constant 0 : i32
    %3 = arith.cmpi eq, %c128_i32, %c0_i32 : i32
    %c1_i32 = arith.constant 1 : i32
    %4 = arith.select %3, %c1_i32, %c128_i32 : i32
    %5 = vector.broadcast %4 : i32 to vector<1x256xi32>
    %6 = arith.remsi %2, %5 : vector<1x256xi32>
    %c0_i32_2 = arith.constant 0 : i32
    %7 = vector.broadcast %c0_i32_2 : i32 to vector<1x256xi32>
    %8 = arith.cmpi ne, %6, %7 : vector<1x256xi32>
    %c0_i32_3 = arith.constant 0 : i32
    %9 = vector.broadcast %c0_i32_3 : i32 to vector<1x256xi32>
    %10 = arith.cmpi slt, %6, %9 : vector<1x256xi32>
    %c0_i32_4 = arith.constant 0 : i32
    %11 = arith.cmpi slt, %4, %c0_i32_4 : i32
    %12 = vector.broadcast %11 : i1 to vector<1x256xi1>
    %13 = vector.broadcast %12 : vector<1x256xi1> to vector<1x256xi1>
    %14 = arith.xori %10, %13 : vector<1x256xi1>
    %15 = arith.andi %14, %8 : vector<1x256xi1>
    %16 = vector.broadcast %4 : i32 to vector<1x256xi32>
    %17 = arith.addi %6, %16 : vector<1x256xi32>
    %18 = arith.select %15, %17, %6 : vector<1x256xi1>, vector<1x256xi32>
    %c1_i32_5 = arith.constant 1 : i32
    %19 = vector.broadcast %c1_i32_5 : i32 to vector<1x256xi32>
    %20 = arith.cmpi sge, %18, %19 : vector<1x256xi32>
    %c2_i32 = arith.constant 2 : i32
    %21 = vector.broadcast %c2_i32 : i32 to vector<1x256xi32>
    %22 = arith.cmpi sge, %18, %21 : vector<1x256xi32>
    %c4_i32 = arith.constant 4 : i32
    %23 = vector.broadcast %c4_i32 : i32 to vector<1x256xi32>
    %24 = arith.cmpi sge, %18, %23 : vector<1x256xi32>
    %c1 = arith.constant 1 : index
    %c0_6 = arith.constant 0 : index
    %c0_7 = arith.constant 0 : index
    %25 = vector.load %arg2[%c1, %c0_6, %c0_7] : memref<2x8x8xf32, #tpu.memory_space<vmem>>, vector<1x8x8xf32>
    %26 = vector.shape_cast %25 : vector<1x8x8xf32> to vector<8x8xf32>
    %cst = arith.constant dense<0.000000e+00> : vector<8x256xf32>
    %27 = tpu.matmul %26, %1, %cst {dimension_numbers = #tpu.dot_dimension_numbers<[1], [0], [0], [1], [0, 0, 1, 1], [], []>} : vector<8x8xf32>, vector<8x256xf32>, vector<8x256xf32> -> vector<8x256xf32>
    %c0_8 = arith.constant 0 : index
    %c0_9 = arith.constant 0 : index
    %c0_10 = arith.constant 0 : index
    %28 = vector.load %arg2[%c0_8, %c0_9, %c0_10] : memref<2x8x8xf32, #tpu.memory_space<vmem>>, vector<1x8x8xf32>
    %29 = vector.shape_cast %28 : vector<1x8x8xf32> to vector<8x8xf32>
    %c1_i32_11 = arith.constant 1 : i32
    %30 = tpu.dynamic_rotate %1 by %c1_i32_11 dim 1 : vector<8x256xf32>, i32 -> vector<8x256xf32>
    %cst_12 = arith.constant 0.000000e+00 : f32
    %31 = vector.broadcast %cst_12 : f32 to vector<8x256xf32>
    %32 = vector.shape_cast %20 : vector<1x256xi1> to vector<1x256xi1>
    %33 = vector.broadcast %32 : vector<1x256xi1> to vector<8x256xi1>
    %34 = arith.select %33, %30, %31 : vector<8x256xi1>, vector<8x256xf32>
    %cst_13 = arith.constant dense<0.000000e+00> : vector<8x256xf32>
    %35 = tpu.matmul %29, %34, %cst_13 {dimension_numbers = #tpu.dot_dimension_numbers<[1], [0], [0], [1], [0, 0, 1, 1], [], []>} : vector<8x8xf32>, vector<8x256xf32>, vector<8x256xf32> -> vector<8x256xf32>
    %36 = arith.addf %27, %35 : vector<8x256xf32>
    %c0_14 = arith.constant 0 : index
    %c0_15 = arith.constant 0 : index
    %37 = vector.load %arg3[%c0_14, %c0_15] : memref<8x1xf32, #tpu.memory_space<vmem>>, vector<8x1xf32>
    %38 = vector.broadcast %37 : vector<8x1xf32> to vector<8x256xf32>
    %39 = arith.addf %36, %38 : vector<8x256xf32>
    %cst_16 = arith.constant 0.000000e+00 : f32
    %40 = vector.broadcast %cst_16 : f32 to vector<8x256xf32>
    %c0_17 = arith.constant 0 : index
    %c0_18 = arith.constant 0 : index
    %c0_19 = arith.constant 0 : index
    %41 = vector.load %arg4[%c0_17, %c0_18, %c0_19] : memref<3x16x16xf32, #tpu.memory_space<vmem>>, vector<1x16x16xf32>
    %42 = vector.shape_cast %41 : vector<1x16x16xf32> to vector<16x16xf32>
    %c1_i32_20 = arith.constant 1 : i32
    %43 = tpu.dynamic_rotate %39 by %c1_i32_20 dim 1 : vector<8x256xf32>, i32 -> vector<8x256xf32>
    %cst_21 = arith.constant 0.000000e+00 : f32
    %44 = vector.broadcast %cst_21 : f32 to vector<8x256xf32>
    %45 = vector.shape_cast %20 : vector<1x256xi1> to vector<1x256xi1>
    %46 = vector.broadcast %45 : vector<1x256xi1> to vector<8x256xi1>
    %47 = arith.select %46, %43, %44 : vector<8x256xi1>, vector<8x256xf32>
    %48 = tpu.concatenate %47, %39 in 0 : vector<8x256xf32>, vector<8x256xf32> -> vector<16x256xf32>
    %cst_22 = arith.constant dense<0.000000e+00> : vector<16x256xf32>
    %49 = tpu.matmul %42, %48, %cst_22 {dimension_numbers = #tpu.dot_dimension_numbers<[1], [0], [0], [1], [0, 0, 1, 1], [], []>} : vector<16x16xf32>, vector<16x256xf32>, vector<16x256xf32> -> vector<16x256xf32>
    %c0_23 = arith.constant 0 : index
    %c0_24 = arith.constant 0 : index
    %c0_25 = arith.constant 0 : index
    %50 = vector.load %arg5[%c0_23, %c0_24, %c0_25] : memref<3x16x1xf32, #tpu.memory_space<vmem>>, vector<1x16x1xf32>
    %51 = vector.shape_cast %50 : vector<1x16x1xf32> to vector<16x1xf32>
    %52 = vector.broadcast %51 : vector<16x1xf32> to vector<16x256xf32>
    %53 = arith.addf %49, %52 : vector<16x256xf32>
    %54 = vector.extract_strided_slice %53 {offsets = [0, 0], sizes = [8, 256], strides = [1, 1]} : vector<16x256xf32> to vector<8x256xf32>
    %55 = vector.extract_strided_slice %53 {offsets = [8, 0], sizes = [8, 256], strides = [1, 1]} : vector<16x256xf32> to vector<8x256xf32>
    %56 = math.tanh %55 : vector<8x256xf32>
    %57 = arith.negf %54 : vector<8x256xf32>
    %58 = math.exp %57 : vector<8x256xf32>
    %cst_26 = arith.constant 1.000000e+00 : f32
    %59 = vector.broadcast %cst_26 : f32 to vector<8x256xf32>
    %60 = arith.addf %59, %58 : vector<8x256xf32>
    %61 = arith.divf %59, %60 : vector<8x256xf32>
    %62 = arith.mulf %56, %61 : vector<8x256xf32>
    %c0_27 = arith.constant 0 : index
    %c0_28 = arith.constant 0 : index
    %c0_29 = arith.constant 0 : index
    %63 = vector.load %arg6[%c0_27, %c0_28, %c0_29] : memref<3x16x8xf32, #tpu.memory_space<vmem>>, vector<1x16x8xf32>
    %64 = vector.shape_cast %63 : vector<1x16x8xf32> to vector<16x8xf32>
    %cst_30 = arith.constant dense<0.000000e+00> : vector<16x256xf32>
    %65 = tpu.matmul %64, %62, %cst_30 {dimension_numbers = #tpu.dot_dimension_numbers<[1], [0], [0], [1], [0, 0, 1, 1], [], []>} : vector<16x8xf32>, vector<8x256xf32>, vector<16x256xf32> -> vector<16x256xf32>
    %c0_31 = arith.constant 0 : index
    %c0_32 = arith.constant 0 : index
    %c0_33 = arith.constant 0 : index
    %66 = vector.load %arg7[%c0_31, %c0_32, %c0_33] : memref<3x16x1xf32, #tpu.memory_space<vmem>>, vector<1x16x1xf32>
    %67 = vector.shape_cast %66 : vector<1x16x1xf32> to vector<16x1xf32>
    %68 = vector.broadcast %67 : vector<16x1xf32> to vector<16x256xf32>
    %69 = arith.addf %65, %68 : vector<16x256xf32>
    %70 = vector.extract_strided_slice %69 {offsets = [0, 0], sizes = [8, 256], strides = [1, 1]} : vector<16x256xf32> to vector<8x256xf32>
    %71 = arith.addf %70, %39 : vector<8x256xf32>
    %72 = vector.extract_strided_slice %69 {offsets = [8, 0], sizes = [8, 256], strides = [1, 1]} : vector<16x256xf32> to vector<8x256xf32>
    %73 = arith.addf %40, %72 : vector<8x256xf32>
    %c1_34 = arith.constant 1 : index
    %c0_35 = arith.constant 0 : index
    %c0_36 = arith.constant 0 : index
    %74 = vector.load %arg4[%c1_34, %c0_35, %c0_36] : memref<3x16x16xf32, #tpu.memory_space<vmem>>, vector<1x16x16xf32>
    %75 = vector.shape_cast %74 : vector<1x16x16xf32> to vector<16x16xf32>
    %c2_i32_37 = arith.constant 2 : i32
    %76 = tpu.dynamic_rotate %71 by %c2_i32_37 dim 1 : vector<8x256xf32>, i32 -> vector<8x256xf32>
    %cst_38 = arith.constant 0.000000e+00 : f32
    %77 = vector.broadcast %cst_38 : f32 to vector<8x256xf32>
    %78 = vector.shape_cast %22 : vector<1x256xi1> to vector<1x256xi1>
    %79 = vector.broadcast %78 : vector<1x256xi1> to vector<8x256xi1>
    %80 = arith.select %79, %76, %77 : vector<8x256xi1>, vector<8x256xf32>
    %81 = tpu.concatenate %80, %71 in 0 : vector<8x256xf32>, vector<8x256xf32> -> vector<16x256xf32>
    %cst_39 = arith.constant dense<0.000000e+00> : vector<16x256xf32>
    %82 = tpu.matmul %75, %81, %cst_39 {dimension_numbers = #tpu.dot_dimension_numbers<[1], [0], [0], [1], [0, 0, 1, 1], [], []>} : vector<16x16xf32>, vector<16x256xf32>, vector<16x256xf32> -> vector<16x256xf32>
    %c1_40 = arith.constant 1 : index
    %c0_41 = arith.constant 0 : index
    %c0_42 = arith.constant 0 : index
    %83 = vector.load %arg5[%c1_40, %c0_41, %c0_42] : memref<3x16x1xf32, #tpu.memory_space<vmem>>, vector<1x16x1xf32>
    %84 = vector.shape_cast %83 : vector<1x16x1xf32> to vector<16x1xf32>
    %85 = vector.broadcast %84 : vector<16x1xf32> to vector<16x256xf32>
    %86 = arith.addf %82, %85 : vector<16x256xf32>
    %87 = vector.extract_strided_slice %86 {offsets = [0, 0], sizes = [8, 256], strides = [1, 1]} : vector<16x256xf32> to vector<8x256xf32>
    %88 = vector.extract_strided_slice %86 {offsets = [8, 0], sizes = [8, 256], strides = [1, 1]} : vector<16x256xf32> to vector<8x256xf32>
    %89 = math.tanh %88 : vector<8x256xf32>
    %90 = arith.negf %87 : vector<8x256xf32>
    %91 = math.exp %90 : vector<8x256xf32>
    %cst_43 = arith.constant 1.000000e+00 : f32
    %92 = vector.broadcast %cst_43 : f32 to vector<8x256xf32>
    %93 = arith.addf %92, %91 : vector<8x256xf32>
    %94 = arith.divf %92, %93 : vector<8x256xf32>
    %95 = arith.mulf %89, %94 : vector<8x256xf32>
    %c1_44 = arith.constant 1 : index
    %c0_45 = arith.constant 0 : index
    %c0_46 = arith.constant 0 : index
    %96 = vector.load %arg6[%c1_44, %c0_45, %c0_46] : memref<3x16x8xf32, #tpu.memory_space<vmem>>, vector<1x16x8xf32>
    %97 = vector.shape_cast %96 : vector<1x16x8xf32> to vector<16x8xf32>
    %cst_47 = arith.constant dense<0.000000e+00> : vector<16x256xf32>
    %98 = tpu.matmul %97, %95, %cst_47 {dimension_numbers = #tpu.dot_dimension_numbers<[1], [0], [0], [1], [0, 0, 1, 1], [], []>} : vector<16x8xf32>, vector<8x256xf32>, vector<16x256xf32> -> vector<16x256xf32>
    %c1_48 = arith.constant 1 : index
    %c0_49 = arith.constant 0 : index
    %c0_50 = arith.constant 0 : index
    %99 = vector.load %arg7[%c1_48, %c0_49, %c0_50] : memref<3x16x1xf32, #tpu.memory_space<vmem>>, vector<1x16x1xf32>
    %100 = vector.shape_cast %99 : vector<1x16x1xf32> to vector<16x1xf32>
    %101 = vector.broadcast %100 : vector<16x1xf32> to vector<16x256xf32>
    %102 = arith.addf %98, %101 : vector<16x256xf32>
    %103 = vector.extract_strided_slice %102 {offsets = [0, 0], sizes = [8, 256], strides = [1, 1]} : vector<16x256xf32> to vector<8x256xf32>
    %104 = arith.addf %103, %71 : vector<8x256xf32>
    %105 = vector.extract_strided_slice %102 {offsets = [8, 0], sizes = [8, 256], strides = [1, 1]} : vector<16x256xf32> to vector<8x256xf32>
    %106 = arith.addf %73, %105 : vector<8x256xf32>
    %c2 = arith.constant 2 : index
    %c0_51 = arith.constant 0 : index
    %c0_52 = arith.constant 0 : index
    %107 = vector.load %arg4[%c2, %c0_51, %c0_52] : memref<3x16x16xf32, #tpu.memory_space<vmem>>, vector<1x16x16xf32>
    %108 = vector.shape_cast %107 : vector<1x16x16xf32> to vector<16x16xf32>
    %c4_i32_53 = arith.constant 4 : i32
    %109 = tpu.dynamic_rotate %104 by %c4_i32_53 dim 1 : vector<8x256xf32>, i32 -> vector<8x256xf32>
    %cst_54 = arith.constant 0.000000e+00 : f32
    %110 = vector.broadcast %cst_54 : f32 to vector<8x256xf32>
    %111 = vector.shape_cast %24 : vector<1x256xi1> to vector<1x256xi1>
    %112 = vector.broadcast %111 : vector<1x256xi1> to vector<8x256xi1>
    %113 = arith.select %112, %109, %110 : vector<8x256xi1>, vector<8x256xf32>
    %114 = tpu.concatenate %113, %104 in 0 : vector<8x256xf32>, vector<8x256xf32> -> vector<16x256xf32>
    %cst_55 = arith.constant dense<0.000000e+00> : vector<16x256xf32>
    %115 = tpu.matmul %108, %114, %cst_55 {dimension_numbers = #tpu.dot_dimension_numbers<[1], [0], [0], [1], [0, 0, 1, 1], [], []>} : vector<16x16xf32>, vector<16x256xf32>, vector<16x256xf32> -> vector<16x256xf32>
    %c2_56 = arith.constant 2 : index
    %c0_57 = arith.constant 0 : index
    %c0_58 = arith.constant 0 : index
    %116 = vector.load %arg5[%c2_56, %c0_57, %c0_58] : memref<3x16x1xf32, #tpu.memory_space<vmem>>, vector<1x16x1xf32>
    %117 = vector.shape_cast %116 : vector<1x16x1xf32> to vector<16x1xf32>
    %118 = vector.broadcast %117 : vector<16x1xf32> to vector<16x256xf32>
    %119 = arith.addf %115, %118 : vector<16x256xf32>
    %120 = vector.extract_strided_slice %119 {offsets = [0, 0], sizes = [8, 256], strides = [1, 1]} : vector<16x256xf32> to vector<8x256xf32>
    %121 = vector.extract_strided_slice %119 {offsets = [8, 0], sizes = [8, 256], strides = [1, 1]} : vector<16x256xf32> to vector<8x256xf32>
    %122 = math.tanh %121 : vector<8x256xf32>
    %123 = arith.negf %120 : vector<8x256xf32>
    %124 = math.exp %123 : vector<8x256xf32>
    %cst_59 = arith.constant 1.000000e+00 : f32
    %125 = vector.broadcast %cst_59 : f32 to vector<8x256xf32>
    %126 = arith.addf %125, %124 : vector<8x256xf32>
    %127 = arith.divf %125, %126 : vector<8x256xf32>
    %128 = arith.mulf %122, %127 : vector<8x256xf32>
    %c2_60 = arith.constant 2 : index
    %c0_61 = arith.constant 0 : index
    %c0_62 = arith.constant 0 : index
    %129 = vector.load %arg6[%c2_60, %c0_61, %c0_62] : memref<3x16x8xf32, #tpu.memory_space<vmem>>, vector<1x16x8xf32>
    %130 = vector.shape_cast %129 : vector<1x16x8xf32> to vector<16x8xf32>
    %cst_63 = arith.constant dense<0.000000e+00> : vector<16x256xf32>
    %131 = tpu.matmul %130, %128, %cst_63 {dimension_numbers = #tpu.dot_dimension_numbers<[1], [0], [0], [1], [0, 0, 1, 1], [], []>} : vector<16x8xf32>, vector<8x256xf32>, vector<16x256xf32> -> vector<16x256xf32>
    %c2_64 = arith.constant 2 : index
    %c0_65 = arith.constant 0 : index
    %c0_66 = arith.constant 0 : index
    %132 = vector.load %arg7[%c2_64, %c0_65, %c0_66] : memref<3x16x1xf32, #tpu.memory_space<vmem>>, vector<1x16x1xf32>
    %133 = vector.shape_cast %132 : vector<1x16x1xf32> to vector<16x1xf32>
    %134 = vector.broadcast %133 : vector<16x1xf32> to vector<16x256xf32>
    %135 = arith.addf %131, %134 : vector<16x256xf32>
    %136 = vector.extract_strided_slice %135 {offsets = [8, 0], sizes = [8, 256], strides = [1, 1]} : vector<16x256xf32> to vector<8x256xf32>
    %137 = arith.addf %106, %136 : vector<8x256xf32>
    %cst_67 = arith.constant 0.000000e+00 : f32
    %138 = vector.broadcast %cst_67 : f32 to vector<8x256xf32>
    %139 = arith.maximumf %137, %138 : vector<8x256xf32>
    %c0_68 = arith.constant 0 : index
    %c0_69 = arith.constant 0 : index
    %140 = vector.load %arg8[%c0_68, %c0_69] : memref<8x8xf32, #tpu.memory_space<vmem>>, vector<8x8xf32>
    %cst_70 = arith.constant dense<0.000000e+00> : vector<8x256xf32>
    %141 = tpu.matmul %140, %139, %cst_70 {dimension_numbers = #tpu.dot_dimension_numbers<[1], [0], [0], [1], [0, 0, 1, 1], [], []>} : vector<8x8xf32>, vector<8x256xf32>, vector<8x256xf32> -> vector<8x256xf32>
    %c0_71 = arith.constant 0 : index
    %c0_72 = arith.constant 0 : index
    %142 = vector.load %arg9[%c0_71, %c0_72] : memref<8x1xf32, #tpu.memory_space<vmem>>, vector<8x1xf32>
    %143 = vector.broadcast %142 : vector<8x1xf32> to vector<8x256xf32>
    %144 = arith.addf %141, %143 : vector<8x256xf32>
    %cst_73 = arith.constant 0.000000e+00 : f32
    %145 = vector.broadcast %cst_73 : f32 to vector<8x256xf32>
    %146 = arith.maximumf %144, %145 : vector<8x256xf32>
    %c0_74 = arith.constant 0 : index
    %c0_75 = arith.constant 0 : index
    %147 = vector.load %arg10[%c0_74, %c0_75] : memref<8x8xf32, #tpu.memory_space<vmem>>, vector<8x8xf32>
    %cst_76 = arith.constant dense<0.000000e+00> : vector<8x256xf32>
    %148 = tpu.matmul %147, %146, %cst_76 {dimension_numbers = #tpu.dot_dimension_numbers<[1], [0], [0], [1], [0, 0, 1, 1], [], []>} : vector<8x8xf32>, vector<8x256xf32>, vector<8x256xf32> -> vector<8x256xf32>
    %c0_77 = arith.constant 0 : index
    %c0_78 = arith.constant 0 : index
    %149 = vector.load %arg11[%c0_77, %c0_78] : memref<8x1xf32, #tpu.memory_space<vmem>>, vector<8x1xf32>
    %150 = vector.broadcast %149 : vector<8x1xf32> to vector<8x256xf32>
    %151 = arith.addf %148, %150 : vector<8x256xf32>
    %c0_79 = arith.constant 0 : index
    %c0_80 = arith.constant 0 : index
    %c0_81 = arith.constant 0 : index
    %152 = vector.load %arg12[%c0_79, %c0_80, %c0_81] : memref<1x8x256xf32, #tpu.memory_space<vmem>>, vector<1x8x256xf32>
    %153 = vector.shape_cast %152 : vector<1x8x256xf32> to vector<8x256xf32>
    %154 = vector.shape_cast %151 : vector<8x256xf32> to vector<1x8x256xf32>
    tpu.vector_store %arg12[%c0_79, %c0_80, %c0_81], %154 {strides = array<i32>} : memref<1x8x256xf32, #tpu.memory_space<vmem>>, vector<1x8x256xf32>,
    return
  }
  func.func @transform_0(%arg0: i32) -> (i32, i32, i32) {
    %c0_i32 = arith.constant 0 : i32
    %c0_i32_0 = arith.constant 0 : i32
    %c0_i32_1 = arith.constant 0 : i32
    return %arg0, %c0_i32, %c0_i32_0 : i32, i32, i32
  }
  func.func @transform_1(%arg0: i32) -> (i32, i32, i32) {
    %c0_i32 = arith.constant 0 : i32
    %c0_i32_0 = arith.constant 0 : i32
    %c0_i32_1 = arith.constant 0 : i32
    %c0_i32_2 = arith.constant 0 : i32
    return %c0_i32, %c0_i32_0, %c0_i32_1 : i32, i32, i32
  }
  func.func @transform_2(%arg0: i32) -> (i32, i32) {
    %c0_i32 = arith.constant 0 : i32
    %c0_i32_0 = arith.constant 0 : i32
    %c0_i32_1 = arith.constant 0 : i32
    return %c0_i32, %c0_i32_0 : i32, i32
  }
  func.func @transform_3(%arg0: i32) -> (i32, i32, i32) {
    %c0_i32 = arith.constant 0 : i32
    %c0_i32_0 = arith.constant 0 : i32
    %c0_i32_1 = arith.constant 0 : i32
    %c0_i32_2 = arith.constant 0 : i32
    return %c0_i32, %c0_i32_0, %c0_i32_1 : i32, i32, i32
  }
  func.func @transform_4(%arg0: i32) -> (i32, i32, i32) {
    %c0_i32 = arith.constant 0 : i32
    %c0_i32_0 = arith.constant 0 : i32
    %c0_i32_1 = arith.constant 0 : i32
    %c0_i32_2 = arith.constant 0 : i32
    return %c0_i32, %c0_i32_0, %c0_i32_1 : i32, i32, i32
  }
  func.func @transform_5(%arg0: i32) -> (i32, i32, i32) {
    %c0_i32 = arith.constant 0 : i32
    %c0_i32_0 = arith.constant 0 : i32
    %c0_i32_1 = arith.constant 0 : i32
    %c0_i32_2 = arith.constant 0 : i32
    return %c0_i32, %c0_i32_0, %c0_i32_1 : i32, i32, i32
  }
  func.func @transform_6(%arg0: i32) -> (i32, i32, i32) {
    %c0_i32 = arith.constant 0 : i32
    %c0_i32_0 = arith.constant 0 : i32
    %c0_i32_1 = arith.constant 0 : i32
    %c0_i32_2 = arith.constant 0 : i32
    return %c0_i32, %c0_i32_0, %c0_i32_1 : i32, i32, i32
  }
  func.func @transform_7(%arg0: i32) -> (i32, i32) {
    %c0_i32 = arith.constant 0 : i32
    %c0_i32_0 = arith.constant 0 : i32
    %c0_i32_1 = arith.constant 0 : i32
    return %c0_i32, %c0_i32_0 : i32, i32
  }
  func.func @transform_8(%arg0: i32) -> (i32, i32) {
    %c0_i32 = arith.constant 0 : i32
    %c0_i32_0 = arith.constant 0 : i32
    %c0_i32_1 = arith.constant 0 : i32
    return %c0_i32, %c0_i32_0 : i32, i32
  }
  func.func @transform_9(%arg0: i32) -> (i32, i32) {
    %c0_i32 = arith.constant 0 : i32
    %c0_i32_0 = arith.constant 0 : i32
    %c0_i32_1 = arith.constant 0 : i32
    return %c0_i32, %c0_i32_0 : i32, i32
  }
  func.func @transform_10(%arg0: i32) -> (i32, i32) {
    %c0_i32 = arith.constant 0 : i32
    %c0_i32_0 = arith.constant 0 : i32
    %c0_i32_1 = arith.constant 0 : i32
    return %c0_i32, %c0_i32_0 : i32, i32
  }
  func.func @transform_11(%arg0: i32) -> (i32, i32, i32) {
    %c0_i32 = arith.constant 0 : i32
    %c0_i32_0 = arith.constant 0 : i32
    %c0_i32_1 = arith.constant 0 : i32
    return %arg0, %c0_i32, %c0_i32_0 : i32, i32, i32
  }
}

</mosaic_0001>

<llo_original>
// kernel: tpu_custom_call.1
$region0: #{tpu_custom_call.1}
  #allocation0 [shape = 'u32[]', space=smem, size = 0x4, offset = 0x4, fixed_abs, tag = 'smem constant byte address 0x4 - core index']
  #allocation1 [shape = 'u32[144,128]{1,0:T(1,128)}', space=vmem, size = 0x12000, scoped, tag = 'internal scratch']
  %s0 = inlined_call_operand.vmem [shape: f32[1,8,256], index: 0, kind: input, shape index: {}]
  %s1 = inlined_call_operand.vmem [shape: f32[2,8,8], index: 1, kind: input, shape index: {}]
  %s2 = inlined_call_operand.vmem [shape: f32[8,1], index: 2, kind: input, shape index: {}]
  %s3 = inlined_call_operand.vmem [shape: f32[3,16,16], index: 3, kind: input, shape index: {}]
  %s4 = inlined_call_operand.vmem [shape: f32[3,16,1], index: 4, kind: input, shape index: {}]
  %s5 = inlined_call_operand.vmem [shape: f32[3,16,8], index: 5, kind: input, shape index: {}]
  %s6 = inlined_call_operand.vmem [shape: f32[3,16,1], index: 6, kind: input, shape index: {}]
  %s7 = inlined_call_operand.vmem [shape: f32[8,8], index: 7, kind: input, shape index: {}]
  %s8 = inlined_call_operand.vmem [shape: f32[8,1], index: 8, kind: input, shape index: {}]
  %s9 = inlined_call_operand.vmem [shape: f32[8,8], index: 9, kind: input, shape index: {}]
  %s10 = inlined_call_operand.vmem [shape: f32[8,1], index: 10, kind: input, shape index: {}]
  %s11 = inlined_call_operand.hbm [shape: f32[1,8,256], index: 11, kind: output, shape index: {}]
  %s12 = sld [smem:[#allocation0]]
  $region54: #{tpu_custom_call.1} parent=0
    _
  %s14 = ssub.s32 1, %s12
  %s15 = scalar_select 0, %s14, %s12
  $region1: #{tpu_custom_call.1} parent=0
    #allocation2 [shape = 'u8[8192]{0}', space=vmem, size = 0x2000, scoped, tag = 'output window, operand 0, single buffered']
    #allocation3 [shape = 's32[1]{0}', space=sflag, size = 0x4, scoped, tag = 'scoped memory for tpu_custom_call.1']
    %16 = vsyncpa [#allocation3], 0
    // Predicated region
    $region2: #{tpu_custom_call.1} parent=1 // pred_check
      _
    $region3: #{tpu_custom_call.1} parent=1 // pred_check_branch
      %18 = sbr.rel (0) target = $region5
    $region4: #{tpu_custom_call.1} parent=1 // pred_region
      _
    $region5: #{tpu_custom_call.1} parent=1 // pred_fallthru
      _
    // Predicated region
    $region6: #{tpu_custom_call.1} parent=1 // pred_check
      _
    $region7: #{tpu_custom_call.1} parent=1 // pred_check_branch
      %20 = sbr.rel (0) target = $region9
    $region8: #{tpu_custom_call.1} parent=1 // pred_region
      _
    $region9: #{tpu_custom_call.1} parent=1 // pred_fallthru
      _
    // Predicated region
    $region10: #{tpu_custom_call.1} parent=1 // pred_check
      _
    $region11: #{tpu_custom_call.1} parent=1 // pred_check_branch
      %22 = sbr.rel (0) target = $region13
    $region12: #{tpu_custom_call.1} parent=1 // pred_region
      _
    $region13: #{tpu_custom_call.1} parent=1 // pred_fallthru
      _
    // Predicated region
    $region14: #{tpu_custom_call.1} parent=1 // pred_check
      _
    $region15: #{tpu_custom_call.1} parent=1 // pred_check_branch
      %24 = sbr.rel (0) target = $region17
    $region16: #{tpu_custom_call.1} parent=1 // pred_region
      _
    $region17: #{tpu_custom_call.1} parent=1 // pred_fallthru
      _
    // Predicated region
    $region18: #{tpu_custom_call.1} parent=1 // pred_check
      _
    $region19: #{tpu_custom_call.1} parent=1 // pred_check_branch
      %26 = sbr.rel (0) target = $region21
    $region20: #{tpu_custom_call.1} parent=1 // pred_region
      _
    $region21: #{tpu_custom_call.1} parent=1 // pred_fallthru
      _
    // Predicated region
    $region22: #{tpu_custom_call.1} parent=1 // pred_check
      _
    $region23: #{tpu_custom_call.1} parent=1 // pred_check_branch
      %28 = sbr.rel (0) target = $region25
    $region24: #{tpu_custom_call.1} parent=1 // pred_region
      _
    $region25: #{tpu_custom_call.1} parent=1 // pred_fallthru
      _
    // Predicated region
    $region26: #{tpu_custom_call.1} parent=1 // pred_check
      _
    $region27: #{tpu_custom_call.1} parent=1 // pred_check_branch
      %30 = sbr.rel (0) target = $region29
    $region28: #{tpu_custom_call.1} parent=1 // pred_region
      _
    $region29: #{tpu_custom_call.1} parent=1 // pred_fallthru
      _
    // Predicated region
    $region30: #{tpu_custom_call.1} parent=1 // pred_check
      _
    $region31: #{tpu_custom_call.1} parent=1 // pred_check_branch
      %32 = sbr.rel (0) target = $region33
    $region32: #{tpu_custom_call.1} parent=1 // pred_region
      _
    $region33: #{tpu_custom_call.1} parent=1 // pred_fallthru
      _
    // Predicated region
    $region34: #{tpu_custom_call.1} parent=1 // pred_check
      _
    $region35: #{tpu_custom_call.1} parent=1 // pred_check_branch
      %34 = sbr.rel (0) target = $region37
    $region36: #{tpu_custom_call.1} parent=1 // pred_region
      _
    $region37: #{tpu_custom_call.1} parent=1 // pred_fallthru
      _
    // Predicated region
    $region38: #{tpu_custom_call.1} parent=1 // pred_check
      _
    $region39: #{tpu_custom_call.1} parent=1 // pred_check_branch
      %36 = sbr.rel (0) target = $region41
    $region40: #{tpu_custom_call.1} parent=1 // pred_region
      _
    $region41: #{tpu_custom_call.1} parent=1 // pred_fallthru
      _
    // Predicated region
    $region42: #{tpu_custom_call.1} parent=1 // pred_check
      _
    $region43: #{tpu_custom_call.1} parent=1 // pred_check_branch
      %38 = sbr.rel (0) target = $region45
    $region44: #{tpu_custom_call.1} parent=1 // pred_region
      _
    $region45: #{tpu_custom_call.1} parent=1 // pred_fallthru
      _
    %v39 = vld [vmem:[%s0] sm:$0xff]
    %v40 = vld [vmem:[%s0 + $0x8] sm:$0xff]
    %v41 = vlaneseq
    %v42 = vand.u32 %v41, 127
    %v43 = vadd.s32 %v42, 128
    %vm44 = vcmp.lt.s32.totalorder %v42, 0
    %v45 = vsub.s32 0, %v42
    %v46 = vsel %vm44, %v45, %v42
    %v47 = vshrl.u32 %v46, 7
    %v48 = vand.u32 %v46, 127
    %v49 = vsub.s32 0, %v48
    %v50 = vsel %vm44, %v49, %v48
    %vm51 = vcmp.lt.s32.totalorder %v43, 0
    %v52 = vsub.s32 0, %v43
    %v53 = vsel %vm51, %v52, %v43
    %v54 = vshrl.u32 %v53, 7
    %v55 = vand.u32 %v53, 127
    %v56 = vsub.s32 0, %v55
    %v57 = vsel %vm51, %v56, %v55
    %vm58 = vcmp.ne.s32.totalorder %v50, 0
    %vm59 = vcmp.ne.s32.totalorder %v57, 0
    %vm60 = vcmp.lt.s32.totalorder %v50, 0
    %vm61 = vcmp.lt.s32.totalorder %v57, 0
    %vm62 = vmand %vm60, %vm58
    %vm63 = vmand %vm61, %vm59
    %v64 = vadd.s32 %v50, 128
    %v65 = vadd.s32 %v57, 128
    %v66 = vsel %vm62, %v64, %v50
    %v67 = vsel %vm63, %v65, %v57
    %vm68 = vcmp.ge.s32.totalorder %v66, 1
    %vm69 = vcmp.ge.s32.totalorder %v67, 1
    %vm70 = vcmp.ge.s32.totalorder %v66, 2
    %vm71 = vcmp.ge.s32.totalorder %v67, 2
    %vm72 = vcmp.ge.s32.totalorder %v66, 4
    %vm73 = vcmp.ge.s32.totalorder %v67, 4
    %s74 = scalar_lea.vmem %s1, 8
    %v75 = vld [vmem:[%s74] sm:$0xff]
    %v76 = vld [vmem:[%s1] sm:$0xff]
    %77 = vrot.lane.b32.xlu0 %v39, 1
    %v78 = vpop.permute.xlu0 %77
    %79 = vrot.lane.b32.xlu0 %v40, 1
    %v80 = vpop.permute.xlu0 %79
    %vm81 = vcmp.lt.s32.totalorder %v42, 1
    %v82 = vsel %vm81, %v78, %v80
    %v83 = vsel %vm81, %v80, %v78
    %v84 = vsel %vm68, 1, 0
    %v85 = vsel %vm69, 1, 0
    %vm86 = vcmp.eq.s32.totalorder %v84, 1
    %vm87 = vcmp.eq.s32.totalorder %v85, 1
    %v88 = vsel %vm86, %v83, 0.0
    %v89 = vsel %vm87, %v82, 0.0
    %vm90 = vcmask 64512
    %v92 = vsel %vm90, %v76, 0
    %94 = vmatprep.subr.mxu0 0.0
    %95 = vmatpush1.msra.mxu0 0.0
    %96 = vmatprep.subr.mxu0 0.0
    %97 = vmatpush1.msra.mxu0 0.0
    %98 = vmatprep.subr.mxu0 0.0
    %99 = vmatpush1.msra.mxu0 0.0
    %100 = vmatprep.subr.mxu0 0.0
    %101 = vmatpush1.msra.mxu0 0.0
    %102 = vmatprep.subr.mxu0 0.0
    %103 = vmatpush1.msra.mxu0 0.0
    %104 = vmatprep.subr.mxu0 0.0
    %105 = vmatpush1.msra.mxu0 0.0
    %106 = vmatprep.subr.mxu0 0.0
    %107 = vmatpush1.msra.mxu0 0.0
    %108 = vmatprep.subr.mxu0 0.0
    %109 = vmatpush1.msra.mxu0 0.0
    %110 = vmatprep.subr.mxu0 0.0
    %111 = vmatpush1.msra.mxu0 0.0
    %112 = vmatprep.subr.mxu0 0.0
    %113 = vmatpush1.msra.mxu0 0.0
    %114 = vmatprep.subr.mxu0 0.0
    %115 = vmatpush1.msra.mxu0 0.0
    %116 = vmatprep.subr.mxu0 0.0
    %117 = vmatpush1.msra.mxu0 0.0
    %118 = vmatprep.subr.mxu0 0.0
    %119 = vmatpush1.msra.mxu0 0.0
    %120 = vmatprep.subr.mxu0 0.0
    %121 = vmatpush1.msra.mxu0 0.0
    %122 = vmatprep.subr.mxu0 0.0
    %123 = vmatpush1.msra.mxu0 0.0
    %124 = vmatprep.subr.mxu0 %v89
    %125 = vmatpush1.msra.mxu0 %v88
    %126 = vmatprep.subr.mxu0 0.0
    %127 = vmatpush2.msra.mxu0 0.0
    %128 = vmatprep.subr.mxu0 0.0
    %129 = vmatpush2.msra.mxu0 0.0
    %130 = vmatprep.subr.mxu0 0.0
    %131 = vmatpush2.msra.mxu0 0.0
    %132 = vmatprep.subr.mxu0 0.0
    %133 = vmatpush2.msra.mxu0 0.0
    %134 = vmatprep.subr.mxu0 0.0
    %135 = vmatpush2.msra.mxu0 0.0
    %136 = vmatprep.subr.mxu0 0.0
    %137 = vmatpush2.msra.mxu0 0.0
    %138 = vmatprep.subr.mxu0 0.0
    %139 = vmatpush2.msra.mxu0 0.0
    %140 = vmatprep.subr.mxu0 0.0
    %141 = vmatpush2.msra.mxu0 0.0
    %142 = vmatprep.subr.mxu0 0.0
    %143 = vmatpush2.msra.mxu0 0.0
    %144 = vmatprep.subr.mxu0 0.0
    %145 = vmatpush2.msra.mxu0 0.0
    %146 = vmatprep.subr.mxu0 0.0
    %147 = vmatpush2.msra.mxu0 0.0
    %148 = vmatprep.subr.mxu0 0.0
    %149 = vmatpush2.msra.mxu0 0.0
    %150 = vmatprep.subr.mxu0 0.0
    %151 = vmatpush2.msra.mxu0 0.0
    %152 = vmatprep.subr.mxu0 0.0
    %153 = vmatpush2.msra.mxu0 0.0
    %154 = vmatprep.subr.mxu0 0.0
    %155 = vmatpush2.msra.mxu0 0.0
    %156 = vmatprep.subr.mxu0 0.0
    %157 = vmatpush2.msra.mxu0 0.0
    %158 = vmatprep.mubr.f32.mxu0 0.0
    %159 = vmatmul.mubr.f32.gmra.mxu0 %v92
    %v160 = vpop.f32.mrf.mxu0
    %v161 = vadd.f32 0.0, %v160
    %v162 = vpop.f32.mrf.mxu0
    %v163 = vadd.f32 0.0, %v162
    %164 = vdwg.mxu0
    %v166 = vsel %vm90, %v75, 0
    %168 = vmatprep.subr.mxu0 0.0
    %169 = vmatpush1.msra.mxu0 0.0
    %170 = vmatprep.subr.mxu0 0.0
    %171 = vmatpush1.msra.mxu0 0.0
    %172 = vmatprep.subr.mxu0 0.0
    %173 = vmatpush1.msra.mxu0 0.0
    %174 = vmatprep.subr.mxu0 0.0
    %175 = vmatpush1.msra.mxu0 0.0
    %176 = vmatprep.subr.mxu0 0.0
    %177 = vmatpush1.msra.mxu0 0.0
    %178 = vmatprep.subr.mxu0 0.0
    %179 = vmatpush1.msra.mxu0 0.0
    %180 = vmatprep.subr.mxu0 0.0
    %181 = vmatpush1.msra.mxu0 0.0
    %182 = vmatprep.subr.mxu0 0.0
    %183 = vmatpush1.msra.mxu0 0.0
    %184 = vmatprep.subr.mxu0 0.0
    %185 = vmatpush1.msra.mxu0 0.0
    %186 = vmatprep.subr.mxu0 0.0
    %187 = vmatpush1.msra.mxu0 0.0
    %188 = vmatprep.subr.mxu0 0.0
    %189 = vmatpush1.msra.mxu0 0.0
    %190 = vmatprep.subr.mxu0 0.0
    %191 = vmatpush1.msra.mxu0 0.0
    %192 = vmatprep.subr.mxu0 0.0
    %193 = vmatpush1.msra.mxu0 0.0
    %194 = vmatprep.subr.mxu0 0.0
    %195 = vmatpush1.msra.mxu0 0.0
    %196 = vmatprep.subr.mxu0 0.0
    %197 = vmatpush1.msra.mxu0 0.0
    %198 = vmatprep.subr.mxu0 %v40
    %199 = vmatpush1.msra.mxu0 %v39
    %200 = vmatprep.subr.mxu0 0.0
    %201 = vmatpush2.msra.mxu0 0.0
    %202 = vmatprep.subr.mxu0 0.0
    %203 = vmatpush2.msra.mxu0 0.0
    %204 = vmatprep.subr.mxu0 0.0
    %205 = vmatpush2.msra.mxu0 0.0
    %206 = vmatprep.subr.mxu0 0.0
    %207 = vmatpush2.msra.mxu0 0.0
    %208 = vmatprep.subr.mxu0 0.0
    %209 = vmatpush2.msra.mxu0 0.0
    %210 = vmatprep.subr.mxu0 0.0
    %211 = vmatpush2.msra.mxu0 0.0
    %212 = vmatprep.subr.mxu0 0.0
    %213 = vmatpush2.msra.mxu0 0.0
    %214 = vmatprep.subr.mxu0 0.0
    %215 = vmatpush2.msra.mxu0 0.0
    %216 = vmatprep.subr.mxu0 0.0
    %217 = vmatpush2.msra.mxu0 0.0
    %218 = vmatprep.subr.mxu0 0.0
    %219 = vmatpush2.msra.mxu0 0.0
    %220 = vmatprep.subr.mxu0 0.0
    %221 = vmatpush2.msra.mxu0 0.0
    %222 = vmatprep.subr.mxu0 0.0
    %223 = vmatpush2.msra.mxu0 0.0
    %224 = vmatprep.subr.mxu0 0.0
    %225 = vmatpush2.msra.mxu0 0.0
    %226 = vmatprep.subr.mxu0 0.0
    %227 = vmatpush2.msra.mxu0 0.0
    %228 = vmatprep.subr.mxu0 0.0
    %229 = vmatpush2.msra.mxu0 0.0
    %230 = vmatprep.subr.mxu0 0.0
    %231 = vmatpush2.msra.mxu0 0.0
    %232 = vmatprep.mubr.f32.mxu0 0.0
    %233 = vmatmul.mubr.f32.gmra.mxu0 %v166
    %v234 = vpop.f32.mrf.mxu0
    %v235 = vadd.f32 %v161, %v234
    %v236 = vpop.f32.mrf.mxu0
    %v237 = vadd.f32 %v163, %v236
    %238 = vdwg.mxu0
    %v239 = vld [vmem:[%s2] sm:$0xff]
    %241 = vset.pattern.permute.xlu0 0
    %242 = vperm.xlu0 %241, %v239
    %v243 = vpop.permute.xlu0 %242
    %v245 = vadd.f32 %v235, %v243
    %v246 = vadd.f32 %v237, %v243
    %v247 = vld [vmem:[%s3] sm:$0xff]
    %v248 = vld [vmem:[%s3 + $0x8] sm:$0xff]
    %249 = vrot.lane.b32.xlu0 %v245, 1
    %v250 = vpop.permute.xlu0 %249
    %251 = vrot.lane.b32.xlu0 %v246, 1
    %v252 = vpop.permute.xlu0 %251
    %v253 = vsel %vm81, %v250, %v252
    %v254 = vsel %vm81, %v252, %v250
    %v255 = vsel %vm86, %v254, 0.0
    %v256 = vsel %vm87, %v253, 0.0
    %v257 = vld [vmem:[%s4] sm:$0xff]
    %v258 = vld [vmem:[%s4 + $0x8] sm:$0xff]
    %260 = vset.pattern.permute.xlu0 0
    %261 = vperm.xlu0 %260, %v257
    %v262 = vpop.permute.xlu0 %261
    %265 = vset.pattern.permute.xlu0 0
    %266 = vperm.xlu0 %265, %v258
    %v267 = vpop.permute.xlu0 %266
    %vm269 = vcmask 130048
    %v271 = vsel %vm269, %v247, 0
    %v274 = vsel %vm269, %v248, 0
    %276 = vmatprep.subr.mxu0 0.0
    %277 = vmatpush1.msra.mxu0 0.0
    %278 = vmatprep.subr.mxu0 0.0
    %279 = vmatpush1.msra.mxu0 0.0
    %280 = vmatprep.subr.mxu0 0.0
    %281 = vmatpush1.msra.mxu0 0.0
    %282 = vmatprep.subr.mxu0 0.0
    %283 = vmatpush1.msra.mxu0 0.0
    %284 = vmatprep.subr.mxu0 0.0
    %285 = vmatpush1.msra.mxu0 0.0
    %286 = vmatprep.subr.mxu0 0.0
    %287 = vmatpush1.msra.mxu0 0.0
    %288 = vmatprep.subr.mxu0 0.0
    %289 = vmatpush1.msra.mxu0 0.0
    %290 = vmatprep.subr.mxu0 0.0
    %291 = vmatpush1.msra.mxu0 0.0
    %292 = vmatprep.subr.mxu0 0.0
    %293 = vmatpush1.msra.mxu0 0.0
    %294 = vmatprep.subr.mxu0 0.0
    %295 = vmatpush1.msra.mxu0 0.0
    %296 = vmatprep.subr.mxu0 0.0
    %297 = vmatpush1.msra.mxu0 0.0
    %298 = vmatprep.subr.mxu0 0.0
    %299 = vmatpush1.msra.mxu0 0.0
    %300 = vmatprep.subr.mxu0 0.0
    %301 = vmatpush1.msra.mxu0 0.0
    %302 = vmatprep.subr.mxu0 0.0
    %303 = vmatpush1.msra.mxu0 0.0
    %304 = vmatprep.subr.mxu0 %v246
    %305 = vmatpush1.msra.mxu0 %v245
    %306 = vmatprep.subr.mxu0 %v256
    %307 = vmatpush1.msra.mxu0 %v255
    %308 = vmatprep.subr.mxu0 0.0
    %309 = vmatpush2.msra.mxu0 0.0
    %310 = vmatprep.subr.mxu0 0.0
    %311 = vmatpush2.msra.mxu0 0.0
    %312 = vmatprep.subr.mxu0 0.0
    %313 = vmatpush2.msra.mxu0 0.0
    %314 = vmatprep.subr.mxu0 0.0
    %315 = vmatpush2.msra.mxu0 0.0
    %316 = vmatprep.subr.mxu0 0.0
    %317 = vmatpush2.msra.mxu0 0.0
    %318 = vmatprep.subr.mxu0 0.0
    %319 = vmatpush2.msra.mxu0 0.0
    %320 = vmatprep.subr.mxu0 0.0
    %321 = vmatpush2.msra.mxu0 0.0
    %322 = vmatprep.subr.mxu0 0.0
    %323 = vmatpush2.msra.mxu0 0.0
    %324 = vmatprep.subr.mxu0 0.0
    %325 = vmatpush2.msra.mxu0 0.0
    %326 = vmatprep.subr.mxu0 0.0
    %327 = vmatpush2.msra.mxu0 0.0
    %328 = vmatprep.subr.mxu0 0.0
    %329 = vmatpush2.msra.mxu0 0.0
    %330 = vmatprep.subr.mxu0 0.0
    %331 = vmatpush2.msra.mxu0 0.0
    %332 = vmatprep.subr.mxu0 0.0
    %333 = vmatpush2.msra.mxu0 0.0
    %334 = vmatprep.subr.mxu0 0.0
    %335 = vmatpush2.msra.mxu0 0.0
    %336 = vmatprep.subr.mxu0 0.0
    %337 = vmatpush2.msra.mxu0 0.0
    %338 = vmatprep.subr.mxu0 0.0
    %339 = vmatpush2.msra.mxu0 0.0
    %340 = vmatprep.mubr.f32.mxu0 0.0
    %341 = vmatmul.mubr.f32.gmra.mxu0 %v271
    %v342 = vpop.f32.mrf.mxu0
    %v343 = vadd.f32 %v262, %v342
    %v344 = vpop.f32.mrf.mxu0
    %v345 = vadd.f32 %v262, %v344
    %346 = vmatprep.mubr.f32.mxu0 0.0
    %347 = vmatmul.mubr.f32.gmra.mxu0 %v274
    %v348 = vpop.f32.mrf.mxu0
    %v349 = vadd.f32 %v267, %v348
    %v350 = vpop.f32.mrf.mxu0
    %v351 = vadd.f32 %v267, %v350
    %352 = vdwg.mxu0
    %v353 = vtanh.pop %v349
    %v354 = vtanh.pop %v351
    %v355 = vxor.u32 %v343, 2147483648
    %v356 = vxor.u32 %v345, 2147483648
    %v357 = vmul.f32 %v355, 1.442695
    %v358 = vpow.pop %v357
    %v359 = vmul.f32 %v356, 1.442695
    %v360 = vpow.pop %v359
    %v361 = vadd.f32 %v358, 1.0
    %v362 = vadd.f32 %v360, 1.0
    %v363 = vrcp.pop %v361
    %v364 = vmul.f32 1.0, %v363
    %v365 = vrcp.pop %v362
    %v366 = vmul.f32 1.0, %v365
    %v367 = vmul.f32 %v353, %v364
    %v368 = vmul.f32 %v354, %v366
    %v369 = vld [vmem:[%s5] sm:$0xff]
    %v370 = vld [vmem:[%s5 + $0x8] sm:$0xff]
    %v371 = vld [vmem:[%s6] sm:$0xff]
    %v372 = vld [vmem:[%s6 + $0x8] sm:$0xff]
    %374 = vset.pattern.permute.xlu0 0
    %375 = vperm.xlu0 %374, %v371
    %v376 = vpop.permute.xlu0 %375
    %379 = vset.pattern.permute.xlu0 0
    %380 = vperm.xlu0 %379, %v372
    %v381 = vpop.permute.xlu0 %380
    %v384 = vsel %vm90, %v369, 0
    %v387 = vsel %vm90, %v370, 0
    %389 = vmatprep.subr.mxu0 0.0
    %390 = vmatpush1.msra.mxu0 0.0
    %391 = vmatprep.subr.mxu0 0.0
    %392 = vmatpush1.msra.mxu0 0.0
    %393 = vmatprep.subr.mxu0 0.0
    %394 = vmatpush1.msra.mxu0 0.0
    %395 = vmatprep.subr.mxu0 0.0
    %396 = vmatpush1.msra.mxu0 0.0
    %397 = vmatprep.subr.mxu0 0.0
    %398 = vmatpush1.msra.mxu0 0.0
    %399 = vmatprep.subr.mxu0 0.0
    %400 = vmatpush1.msra.mxu0 0.0
    %401 = vmatprep.subr.mxu0 0.0
    %402 = vmatpush1.msra.mxu0 0.0
    %403 = vmatprep.subr.mxu0 0.0
    %404 = vmatpush1.msra.mxu0 0.0
    %405 = vmatprep.subr.mxu0 0.0
    %406 = vmatpush1.msra.mxu0 0.0
    %407 = vmatprep.subr.mxu0 0.0
    %408 = vmatpush1.msra.mxu0 0.0
    %409 = vmatprep.subr.mxu0 0.0
    %410 = vmatpush1.msra.mxu0 0.0
    %411 = vmatprep.subr.mxu0 0.0
    %412 = vmatpush1.msra.mxu0 0.0
    %413 = vmatprep.subr.mxu0 0.0
    %414 = vmatpush1.msra.mxu0 0.0
    %415 = vmatprep.subr.mxu0 0.0
    %416 = vmatpush1.msra.mxu0 0.0
    %417 = vmatprep.subr.mxu0 0.0
    %418 = vmatpush1.msra.mxu0 0.0
    %419 = vmatprep.subr.mxu0 %v368
    %420 = vmatpush1.msra.mxu0 %v367
    %421 = vmatprep.subr.mxu0 0.0
    %422 = vmatpush2.msra.mxu0 0.0
    %423 = vmatprep.subr.mxu0 0.0
    %424 = vmatpush2.msra.mxu0 0.0
    %425 = vmatprep.subr.mxu0 0.0
    %426 = vmatpush2.msra.mxu0 0.0
    %427 = vmatprep.subr.mxu0 0.0
    %428 = vmatpush2.msra.mxu0 0.0
    %429 = vmatprep.subr.mxu0 0.0
    %430 = vmatpush2.msra.mxu0 0.0
    %431 = vmatprep.subr.mxu0 0.0
    %432 = vmatpush2.msra.mxu0 0.0
    %433 = vmatprep.subr.mxu0 0.0
    %434 = vmatpush2.msra.mxu0 0.0
    %435 = vmatprep.subr.mxu0 0.0
    %436 = vmatpush2.msra.mxu0 0.0
    %437 = vmatprep.subr.mxu0 0.0
    %438 = vmatpush2.msra.mxu0 0.0
    %439 = vmatprep.subr.mxu0 0.0
    %440 = vmatpush2.msra.mxu0 0.0
    %441 = vmatprep.subr.mxu0 0.0
    %442 = vmatpush2.msra.mxu0 0.0
    %443 = vmatprep.subr.mxu0 0.0
    %444 = vmatpush2.msra.mxu0 0.0
    %445 = vmatprep.subr.mxu0 0.0
    %446 = vmatpush2.msra.mxu0 0.0
    %447 = vmatprep.subr.mxu0 0.0
    %448 = vmatpush2.msra.mxu0 0.0
    %449 = vmatprep.subr.mxu0 0.0
    %450 = vmatpush2.msra.mxu0 0.0
    %451 = vmatprep.subr.mxu0 0.0
    %452 = vmatpush2.msra.mxu0 0.0
    %453 = vmatprep.mubr.f32.mxu0 0.0
    %454 = vmatmul.mubr.f32.gmra.mxu0 %v384
    %v455 = vpop.f32.mrf.mxu0
    %v456 = vadd.f32 %v376, %v455
    %v457 = vpop.f32.mrf.mxu0
    %v458 = vadd.f32 %v376, %v457
    %459 = vmatprep.mubr.f32.mxu0 0.0
    %460 = vmatmul.mubr.f32.gmra.mxu0 %v387
    %v461 = vpop.f32.mrf.mxu0
    %v462 = vadd.f32 %v381, %v461
    %v463 = vpop.f32.mrf.mxu0
    %v464 = vadd.f32 %v381, %v463
    %465 = vdwg.mxu0
    %v466 = vadd.f32 %v456, %v245
    %v467 = vadd.f32 %v458, %v246
    %v468 = vadd.f32 %v462, 0.0
    %v469 = vadd.f32 %v464, 0.0
    %s470 = scalar_lea.vmem %s3, 16
    %v471 = vld [vmem:[%s470] sm:$0xff]
    %v472 = vld [vmem:[%s470 + $0x8] sm:$0xff]
    %473 = vrot.lane.b32.xlu0 %v466, 2
    %v474 = vpop.permute.xlu0 %473
    %475 = vrot.lane.b32.xlu0 %v467, 2
    %v476 = vpop.permute.xlu0 %475
    %vm477 = vcmp.lt.s32.totalorder %v42, 2
    %v478 = vsel %vm477, %v474, %v476
    %v479 = vsel %vm477, %v476, %v474
    %v480 = vsel %vm70, 1, 0
    %v481 = vsel %vm71, 1, 0
    %vm482 = vcmp.eq.s32.totalorder %v480, 1
    %vm483 = vcmp.eq.s32.totalorder %v481, 1
    %v484 = vsel %vm482, %v479, 0.0
    %v485 = vsel %vm483, %v478, 0.0
    %s486 = scalar_lea.vmem %s4, 16
    %v487 = vld [vmem:[%s486] sm:$0xff]
    %v488 = vld [vmem:[%s486 + $0x8] sm:$0xff]
    %490 = vset.pattern.permute.xlu0 0
    %491 = vperm.xlu0 %490, %v487
    %v492 = vpop.permute.xlu0 %491
    %495 = vset.pattern.permute.xlu0 0
    %496 = vperm.xlu0 %495, %v488
    %v497 = vpop.permute.xlu0 %496
    %v500 = vsel %vm269, %v471, 0
    %v503 = vsel %vm269, %v472, 0
    %505 = vmatprep.subr.mxu0 0.0
    %506 = vmatpush1.msra.mxu0 0.0
    %507 = vmatprep.subr.mxu0 0.0
    %508 = vmatpush1.msra.mxu0 0.0
    %509 = vmatprep.subr.mxu0 0.0
    %510 = vmatpush1.msra.mxu0 0.0
    %511 = vmatprep.subr.mxu0 0.0
    %512 = vmatpush1.msra.mxu0 0.0
    %513 = vmatprep.subr.mxu0 0.0
    %514 = vmatpush1.msra.mxu0 0.0
    %515 = vmatprep.subr.mxu0 0.0
    %516 = vmatpush1.msra.mxu0 0.0
    %517 = vmatprep.subr.mxu0 0.0
    %518 = vmatpush1.msra.mxu0 0.0
    %519 = vmatprep.subr.mxu0 0.0
    %520 = vmatpush1.msra.mxu0 0.0
    %521 = vmatprep.subr.mxu0 0.0
    %522 = vmatpush1.msra.mxu0 0.0
    %523 = vmatprep.subr.mxu0 0.0
    %524 = vmatpush1.msra.mxu0 0.0
    %525 = vmatprep.subr.mxu0 0.0
    %526 = vmatpush1.msra.mxu0 0.0
    %527 = vmatprep.subr.mxu0 0.0
    %528 = vmatpush1.msra.mxu0 0.0
    %529 = vmatprep.subr.mxu0 0.0
    %530 = vmatpush1.msra.mxu0 0.0
    %531 = vmatprep.subr.mxu0 0.0
    %532 = vmatpush1.msra.mxu0 0.0
    %533 = vmatprep.subr.mxu0 %v467
    %534 = vmatpush1.msra.mxu0 %v466
    %535 = vmatprep.subr.mxu0 %v485
    %536 = vmatpush1.msra.mxu0 %v484
    %537 = vmatprep.subr.mxu0 0.0
    %538 = vmatpush2.msra.mxu0 0.0
    %539 = vmatprep.subr.mxu0 0.0
    %540 = vmatpush2.msra.mxu0 0.0
    %541 = vmatprep.subr.mxu0 0.0
    %542 = vmatpush2.msra.mxu0 0.0
    %543 = vmatprep.subr.mxu0 0.0
    %544 = vmatpush2.msra.mxu0 0.0
    %545 = vmatprep.subr.mxu0 0.0
    %546 = vmatpush2.msra.mxu0 0.0
    %547 = vmatprep.subr.mxu0 0.0
    %548 = vmatpush2.msra.mxu0 0.0
    %549 = vmatprep.subr.mxu0 0.0
    %550 = vmatpush2.msra.mxu0 0.0
    %551 = vmatprep.subr.mxu0 0.0
    %552 = vmatpush2.msra.mxu0 0.0
    %553 = vmatprep.subr.mxu0 0.0
    %554 = vmatpush2.msra.mxu0 0.0
    %555 = vmatprep.subr.mxu0 0.0
    %556 = vmatpush2.msra.mxu0 0.0
    %557 = vmatprep.subr.mxu0 0.0
    %558 = vmatpush2.msra.mxu0 0.0
    %559 = vmatprep.subr.mxu0 0.0
    %560 = vmatpush2.msra.mxu0 0.0
    %561 = vmatprep.subr.mxu0 0.0
    %562 = vmatpush2.msra.mxu0 0.0
    %563 = vmatprep.subr.mxu0 0.0
    %564 = vmatpush2.msra.mxu0 0.0
    %565 = vmatprep.subr.mxu0 0.0
    %566 = vmatpush2.msra.mxu0 0.0
    %567 = vmatprep.subr.mxu0 0.0
    %568 = vmatpush2.msra.mxu0 0.0
    %569 = vmatprep.mubr.f32.mxu0 0.0
    %570 = vmatmul.mubr.f32.gmra.mxu0 %v500
    %v571 = vpop.f32.mrf.mxu0
    %v572 = vadd.f32 %v492, %v571
    %v573 = vpop.f32.mrf.mxu0
    %v574 = vadd.f32 %v492, %v573
    %575 = vmatprep.mubr.f32.mxu0 0.0
    %576 = vmatmul.mubr.f32.gmra.mxu0 %v503
    %v577 = vpop.f32.mrf.mxu0
    %v578 = vadd.f32 %v497, %v577
    %v579 = vpop.f32.mrf.mxu0
    %v580 = vadd.f32 %v497, %v579
    %581 = vdwg.mxu0
    %v582 = vtanh.pop %v578
    %v583 = vtanh.pop %v580
    %v584 = vxor.u32 %v572, 2147483648
    %v585 = vxor.u32 %v574, 2147483648
    %v586 = vmul.f32 %v584, 1.442695
    %v587 = vpow.pop %v586
    %v588 = vmul.f32 %v585, 1.442695
    %v589 = vpow.pop %v588
    %v590 = vadd.f32 %v587, 1.0
    %v591 = vadd.f32 %v589, 1.0
    %v592 = vrcp.pop %v590
    %v593 = vmul.f32 1.0, %v592
    %v594 = vrcp.pop %v591
    %v595 = vmul.f32 1.0, %v594
    %v596 = vmul.f32 %v582, %v593
    %v597 = vmul.f32 %v583, %v595
    %s598 = scalar_lea.vmem %s5, 16
    %v599 = vld [vmem:[%s598] sm:$0xff]
    %v600 = vld [vmem:[%s598 + $0x8] sm:$0xff]
    %s601 = scalar_lea.vmem %s6, 16
    %v602 = vld [vmem:[%s601] sm:$0xff]
    %v603 = vld [vmem:[%s601 + $0x8] sm:$0xff]
    %605 = vset.pattern.permute.xlu0 0
    %606 = vperm.xlu0 %605, %v602
    %v607 = vpop.permute.xlu0 %606
    %610 = vset.pattern.permute.xlu0 0
    %611 = vperm.xlu0 %610, %v603
    %v612 = vpop.permute.xlu0 %611
    %v615 = vsel %vm90, %v599, 0
    %v618 = vsel %vm90, %v600, 0
    %620 = vmatprep.subr.mxu0 0.0
    %621 = vmatpush1.msra.mxu0 0.0
    %622 = vmatprep.subr.mxu0 0.0
    %623 = vmatpush1.msra.mxu0 0.0
    %624 = vmatprep.subr.mxu0 0.0
    %625 = vmatpush1.msra.mxu0 0.0
    %626 = vmatprep.subr.mxu0 0.0
    %627 = vmatpush1.msra.mxu0 0.0
    %628 = vmatprep.subr.mxu0 0.0
    %629 = vmatpush1.msra.mxu0 0.0
    %630 = vmatprep.subr.mxu0 0.0
    %631 = vmatpush1.msra.mxu0 0.0
    %632 = vmatprep.subr.mxu0 0.0
    %633 = vmatpush1.msra.mxu0 0.0
    %634 = vmatprep.subr.mxu0 0.0
    %635 = vmatpush1.msra.mxu0 0.0
    %636 = vmatprep.subr.mxu0 0.0
    %637 = vmatpush1.msra.mxu0 0.0
    %638 = vmatprep.subr.mxu0 0.0
    %639 = vmatpush1.msra.mxu0 0.0
    %640 = vmatprep.subr.mxu0 0.0
    %641 = vmatpush1.msra.mxu0 0.0
    %642 = vmatprep.subr.mxu0 0.0
    %643 = vmatpush1.msra.mxu0 0.0
    %644 = vmatprep.subr.mxu0 0.0
    %645 = vmatpush1.msra.mxu0 0.0
    %646 = vmatprep.subr.mxu0 0.0
    %647 = vmatpush1.msra.mxu0 0.0
    %648 = vmatprep.subr.mxu0 0.0
    %649 = vmatpush1.msra.mxu0 0.0
    %650 = vmatprep.subr.mxu0 %v597
    %651 = vmatpush1.msra.mxu0 %v596
    %652 = vmatprep.subr.mxu0 0.0
    %653 = vmatpush2.msra.mxu0 0.0
    %654 = vmatprep.subr.mxu0 0.0
    %655 = vmatpush2.msra.mxu0 0.0
    %656 = vmatprep.subr.mxu0 0.0
    %657 = vmatpush2.msra.mxu0 0.0
    %658 = vmatprep.subr.mxu0 0.0
    %659 = vmatpush2.msra.mxu0 0.0
    %660 = vmatprep.subr.mxu0 0.0
    %661 = vmatpush2.msra.mxu0 0.0
    %662 = vmatprep.subr.mxu0 0.0
    %663 = vmatpush2.msra.mxu0 0.0
    %664 = vmatprep.subr.mxu0 0.0
    %665 = vmatpush2.msra.mxu0 0.0
    %666 = vmatprep.subr.mxu0 0.0
    %667 = vmatpush2.msra.mxu0 0.0
    %668 = vmatprep.subr.mxu0 0.0
    %669 = vmatpush2.msra.mxu0 0.0
    %670 = vmatprep.subr.mxu0 0.0
    %671 = vmatpush2.msra.mxu0 0.0
    %672 = vmatprep.subr.mxu0 0.0
    %673 = vmatpush2.msra.mxu0 0.0
    %674 = vmatprep.subr.mxu0 0.0
    %675 = vmatpush2.msra.mxu0 0.0
    %676 = vmatprep.subr.mxu0 0.0
    %677 = vmatpush2.msra.mxu0 0.0
    %678 = vmatprep.subr.mxu0 0.0
    %679 = vmatpush2.msra.mxu0 0.0
    %680 = vmatprep.subr.mxu0 0.0
    %681 = vmatpush2.msra.mxu0 0.0
    %682 = vmatprep.subr.mxu0 0.0
    %683 = vmatpush2.msra.mxu0 0.0
    %684 = vmatprep.mubr.f32.mxu0 0.0
    %685 = vmatmul.mubr.f32.gmra.mxu0 %v615
    %v686 = vpop.f32.mrf.mxu0
    %v687 = vadd.f32 %v607, %v686
    %v688 = vpop.f32.mrf.mxu0
    %v689 = vadd.f32 %v607, %v688
    %690 = vmatprep.mubr.f32.mxu0 0.0
    %691 = vmatmul.mubr.f32.gmra.mxu0 %v618
    %v692 = vpop.f32.mrf.mxu0
    %v693 = vadd.f32 %v612, %v692
    %v694 = vpop.f32.mrf.mxu0
    %v695 = vadd.f32 %v612, %v694
    %696 = vdwg.mxu0
    %v697 = vadd.f32 %v687, %v466
    %v698 = vadd.f32 %v689, %v467
    %v699 = vadd.f32 %v468, %v693
    %v700 = vadd.f32 %v469, %v695
    %s701 = scalar_lea.vmem %s3, 32
    %v702 = vld [vmem:[%s701] sm:$0xff]
    %v703 = vld [vmem:[%s701 + $0x8] sm:$0xff]
    %704 = vrot.lane.b32.xlu0 %v697, 4
    %v705 = vpop.permute.xlu0 %704
    %706 = vrot.lane.b32.xlu0 %v698, 4
    %v707 = vpop.permute.xlu0 %706
    %vm708 = vcmp.lt.s32.totalorder %v42, 4
    %v709 = vsel %vm708, %v705, %v707
    %v710 = vsel %vm708, %v707, %v705
    %v711 = vsel %vm72, 1, 0
    %v712 = vsel %vm73, 1, 0
    %vm713 = vcmp.eq.s32.totalorder %v711, 1
    %vm714 = vcmp.eq.s32.totalorder %v712, 1
    %v715 = vsel %vm713, %v710, 0.0
    %v716 = vsel %vm714, %v709, 0.0
    %s717 = scalar_lea.vmem %s4, 32
    %v718 = vld [vmem:[%s717] sm:$0xff]
    %v719 = vld [vmem:[%s717 + $0x8] sm:$0xff]
    %721 = vset.pattern.permute.xlu0 0
    %722 = vperm.xlu0 %721, %v718
    %v723 = vpop.permute.xlu0 %722
    %726 = vset.pattern.permute.xlu0 0
    %727 = vperm.xlu0 %726, %v719
    %v728 = vpop.permute.xlu0 %727
    %v731 = vsel %vm269, %v702, 0
    %v734 = vsel %vm269, %v703, 0
    %736 = vmatprep.subr.mxu0 0.0
    %737 = vmatpush1.msra.mxu0 0.0
    %738 = vmatprep.subr.mxu0 0.0
    %739 = vmatpush1.msra.mxu0 0.0
    %740 = vmatprep.subr.mxu0 0.0
    %741 = vmatpush1.msra.mxu0 0.0
    %742 = vmatprep.subr.mxu0 0.0
    %743 = vmatpush1.msra.mxu0 0.0
    %744 = vmatprep.subr.mxu0 0.0
    %745 = vmatpush1.msra.mxu0 0.0
    %746 = vmatprep.subr.mxu0 0.0
    %747 = vmatpush1.msra.mxu0 0.0
    %748 = vmatprep.subr.mxu0 0.0
    %749 = vmatpush1.msra.mxu0 0.0
    %750 = vmatprep.subr.mxu0 0.0
    %751 = vmatpush1.msra.mxu0 0.0
    %752 = vmatprep.subr.mxu0 0.0
    %753 = vmatpush1.msra.mxu0 0.0
    %754 = vmatprep.subr.mxu0 0.0
    %755 = vmatpush1.msra.mxu0 0.0
    %756 = vmatprep.subr.mxu0 0.0
    %757 = vmatpush1.msra.mxu0 0.0
    %758 = vmatprep.subr.mxu0 0.0
    %759 = vmatpush1.msra.mxu0 0.0
    %760 = vmatprep.subr.mxu0 0.0
    %761 = vmatpush1.msra.mxu0 0.0
    %762 = vmatprep.subr.mxu0 0.0
    %763 = vmatpush1.msra.mxu0 0.0
    %764 = vmatprep.subr.mxu0 %v698
    %765 = vmatpush1.msra.mxu0 %v697
    %766 = vmatprep.subr.mxu0 %v716
    %767 = vmatpush1.msra.mxu0 %v715
    %768 = vmatprep.subr.mxu0 0.0
    %769 = vmatpush2.msra.mxu0 0.0
    %770 = vmatprep.subr.mxu0 0.0
    %771 = vmatpush2.msra.mxu0 0.0
    %772 = vmatprep.subr.mxu0 0.0
    %773 = vmatpush2.msra.mxu0 0.0
    %774 = vmatprep.subr.mxu0 0.0
    %775 = vmatpush2.msra.mxu0 0.0
    %776 = vmatprep.subr.mxu0 0.0
    %777 = vmatpush2.msra.mxu0 0.0
    %778 = vmatprep.subr.mxu0 0.0
    %779 = vmatpush2.msra.mxu0 0.0
    %780 = vmatprep.subr.mxu0 0.0
    %781 = vmatpush2.msra.mxu0 0.0
    %782 = vmatprep.subr.mxu0 0.0
    %783 = vmatpush2.msra.mxu0 0.0
    %784 = vmatprep.subr.mxu0 0.0
    %785 = vmatpush2.msra.mxu0 0.0
    %786 = vmatprep.subr.mxu0 0.0
    %787 = vmatpush2.msra.mxu0 0.0
    %788 = vmatprep.subr.mxu0 0.0
    %789 = vmatpush2.msra.mxu0 0.0
    %790 = vmatprep.subr.mxu0 0.0
    %791 = vmatpush2.msra.mxu0 0.0
    %792 = vmatprep.subr.mxu0 0.0
    %793 = vmatpush2.msra.mxu0 0.0
    %794 = vmatprep.subr.mxu0 0.0
    %795 = vmatpush2.msra.mxu0 0.0
    %796 = vmatprep.subr.mxu0 0.0
    %797 = vmatpush2.msra.mxu0 0.0
    %798 = vmatprep.subr.mxu0 0.0
    %799 = vmatpush2.msra.mxu0 0.0
    %800 = vmatprep.mubr.f32.mxu0 0.0
    %801 = vmatmul.mubr.f32.gmra.mxu0 %v731
    %v802 = vpop.f32.mrf.mxu0
    %v803 = vadd.f32 %v723, %v802
    %v804 = vpop.f32.mrf.mxu0
    %v805 = vadd.f32 %v723, %v804
    %806 = vmatprep.mubr.f32.mxu0 0.0
    %807 = vmatmul.mubr.f32.gmra.mxu0 %v734
    %v808 = vpop.f32.mrf.mxu0
    %v809 = vadd.f32 %v728, %v808
    %v810 = vpop.f32.mrf.mxu0
    %v811 = vadd.f32 %v728, %v810
    %812 = vdwg.mxu0
    %v813 = vtanh.pop %v809
    %v814 = vtanh.pop %v811
    %v815 = vxor.u32 %v803, 2147483648
    %v816 = vxor.u32 %v805, 2147483648
    %v817 = vmul.f32 %v815, 1.442695
    %v818 = vpow.pop %v817
    %v819 = vmul.f32 %v816, 1.442695
    %v820 = vpow.pop %v819
    %v821 = vadd.f32 %v818, 1.0
    %v822 = vadd.f32 %v820, 1.0
    %v823 = vrcp.pop %v821
    %v824 = vmul.f32 1.0, %v823
    %v825 = vrcp.pop %v822
    %v826 = vmul.f32 1.0, %v825
    %v827 = vmul.f32 %v813, %v824
    %v828 = vmul.f32 %v814, %v826
    %s829 = scalar_lea.vmem %s5, 32
    %v830 = vld [vmem:[%s829] sm:$0xff]
    %v831 = vld [vmem:[%s829 + $0x8] sm:$0xff]
    %s832 = scalar_lea.vmem %s6, 32
    %v833 = vld [vmem:[%s832] sm:$0xff]
    %v834 = vld [vmem:[%s832 + $0x8] sm:$0xff]
    %836 = vset.pattern.permute.xlu0 0
    %837 = vperm.xlu0 %836, %v833
    %v838 = vpop.permute.xlu0 %837
    %840 = vset.pattern.permute.xlu0 0
    %841 = vperm.xlu0 %840, %v834
    %v842 = vpop.permute.xlu0 %841
    %v845 = vsel %vm90, %v830, 0
    %v848 = vsel %vm90, %v831, 0
    %850 = vmatprep.subr.mxu0 0.0
    %851 = vmatpush1.msra.mxu0 0.0
    %852 = vmatprep.subr.mxu0 0.0
    %853 = vmatpush1.msra.mxu0 0.0
    %854 = vmatprep.subr.mxu0 0.0
    %855 = vmatpush1.msra.mxu0 0.0
    %856 = vmatprep.subr.mxu0 0.0
    %857 = vmatpush1.msra.mxu0 0.0
    %858 = vmatprep.subr.mxu0 0.0
    %859 = vmatpush1.msra.mxu0 0.0
    %860 = vmatprep.subr.mxu0 0.0
    %861 = vmatpush1.msra.mxu0 0.0
    %862 = vmatprep.subr.mxu0 0.0
    %863 = vmatpush1.msra.mxu0 0.0
    %864 = vmatprep.subr.mxu0 0.0
    %865 = vmatpush1.msra.mxu0 0.0
    %866 = vmatprep.subr.mxu0 0.0
    %867 = vmatpush1.msra.mxu0 0.0
    %868 = vmatprep.subr.mxu0 0.0
    %869 = vmatpush1.msra.mxu0 0.0
    %870 = vmatprep.subr.mxu0 0.0
    %871 = vmatpush1.msra.mxu0 0.0
    %872 = vmatprep.subr.mxu0 0.0
    %873 = vmatpush1.msra.mxu0 0.0
    %874 = vmatprep.subr.mxu0 0.0
    %875 = vmatpush1.msra.mxu0 0.0
    %876 = vmatprep.subr.mxu0 0.0
    %877 = vmatpush1.msra.mxu0 0.0
    %878 = vmatprep.subr.mxu0 0.0
    %879 = vmatpush1.msra.mxu0 0.0
    %880 = vmatprep.subr.mxu0 %v828
    %881 = vmatpush1.msra.mxu0 %v827
    %882 = vmatprep.subr.mxu0 0.0
    %883 = vmatpush2.msra.mxu0 0.0
    %884 = vmatprep.subr.mxu0 0.0
    %885 = vmatpush2.msra.mxu0 0.0
    %886 = vmatprep.subr.mxu0 0.0
    %887 = vmatpush2.msra.mxu0 0.0
    %888 = vmatprep.subr.mxu0 0.0
    %889 = vmatpush2.msra.mxu0 0.0
    %890 = vmatprep.subr.mxu0 0.0
    %891 = vmatpush2.msra.mxu0 0.0
    %892 = vmatprep.subr.mxu0 0.0
    %893 = vmatpush2.msra.mxu0 0.0
    %894 = vmatprep.subr.mxu0 0.0
    %895 = vmatpush2.msra.mxu0 0.0
    %896 = vmatprep.subr.mxu0 0.0
    %897 = vmatpush2.msra.mxu0 0.0
    %898 = vmatprep.subr.mxu0 0.0
    %899 = vmatpush2.msra.mxu0 0.0
    %900 = vmatprep.subr.mxu0 0.0
    %901 = vmatpush2.msra.mxu0 0.0
    %902 = vmatprep.subr.mxu0 0.0
    %903 = vmatpush2.msra.mxu0 0.0
    %904 = vmatprep.subr.mxu0 0.0
    %905 = vmatpush2.msra.mxu0 0.0
    %906 = vmatprep.subr.mxu0 0.0
    %907 = vmatpush2.msra.mxu0 0.0
    %908 = vmatprep.subr.mxu0 0.0
    %909 = vmatpush2.msra.mxu0 0.0
    %910 = vmatprep.subr.mxu0 0.0
    %911 = vmatpush2.msra.mxu0 0.0
    %912 = vmatprep.subr.mxu0 0.0
    %913 = vmatpush2.msra.mxu0 0.0
    %914 = vmatprep.mubr.f32.mxu0 0.0
    %915 = vmatmul.mubr.f32.gmra.mxu0 %v845
    %v916 = vpop.f32.mrf.mxu0
    %v917 = vpop.f32.mrf.mxu0
    %918 = vmatprep.mubr.f32.mxu0 0.0
    %919 = vmatmul.mubr.f32.gmra.mxu0 %v848
    %v920 = vpop.f32.mrf.mxu0
    %v921 = vadd.f32 %v842, %v920
    %v922 = vpop.f32.mrf.mxu0
    %v923 = vadd.f32 %v842, %v922
    %924 = vdwg.mxu0
    %v925 = vadd.f32 %v699, %v921
    %v926 = vadd.f32 %v700, %v923
    %v927 = vmax.f32 %v925, 0.0
    %v928 = vmax.f32 %v926, 0.0
    %v929 = vld [vmem:[%s7] sm:$0xff]
    %v930 = vld [vmem:[%s8] sm:$0xff]
    %932 = vset.pattern.permute.xlu0 0
    %933 = vperm.xlu0 %932, %v930
    %v934 = vpop.permute.xlu0 %933
    %v937 = vsel %vm90, %v929, 0
    %939 = vmatprep.subr.mxu0 0.0
    %940 = vmatpush1.msra.mxu0 0.0
    %941 = vmatprep.subr.mxu0 0.0
    %942 = vmatpush1.msra.mxu0 0.0
    %943 = vmatprep.subr.mxu0 0.0
    %944 = vmatpush1.msra.mxu0 0.0
    %945 = vmatprep.subr.mxu0 0.0
    %946 = vmatpush1.msra.mxu0 0.0
    %947 = vmatprep.subr.mxu0 0.0
    %948 = vmatpush1.msra.mxu0 0.0
    %949 = vmatprep.subr.mxu0 0.0
    %950 = vmatpush1.msra.mxu0 0.0
    %951 = vmatprep.subr.mxu0 0.0
    %952 = vmatpush1.msra.mxu0 0.0
    %953 = vmatprep.subr.mxu0 0.0
    %954 = vmatpush1.msra.mxu0 0.0
    %955 = vmatprep.subr.mxu0 0.0
    %956 = vmatpush1.msra.mxu0 0.0
    %957 = vmatprep.subr.mxu0 0.0
    %958 = vmatpush1.msra.mxu0 0.0
    %959 = vmatprep.subr.mxu0 0.0
    %960 = vmatpush1.msra.mxu0 0.0
    %961 = vmatprep.subr.mxu0 0.0
    %962 = vmatpush1.msra.mxu0 0.0
    %963 = vmatprep.subr.mxu0 0.0
    %964 = vmatpush1.msra.mxu0 0.0
    %965 = vmatprep.subr.mxu0 0.0
    %966 = vmatpush1.msra.mxu0 0.0
    %967 = vmatprep.subr.mxu0 0.0
    %968 = vmatpush1.msra.mxu0 0.0
    %969 = vmatprep.subr.mxu0 %v928
    %970 = vmatpush1.msra.mxu0 %v927
    %971 = vmatprep.subr.mxu0 0.0
    %972 = vmatpush2.msra.mxu0 0.0
    %973 = vmatprep.subr.mxu0 0.0
    %974 = vmatpush2.msra.mxu0 0.0
    %975 = vmatprep.subr.mxu0 0.0
    %976 = vmatpush2.msra.mxu0 0.0
    %977 = vmatprep.subr.mxu0 0.0
    %978 = vmatpush2.msra.mxu0 0.0
    %979 = vmatprep.subr.mxu0 0.0
    %980 = vmatpush2.msra.mxu0 0.0
    %981 = vmatprep.subr.mxu0 0.0
    %982 = vmatpush2.msra.mxu0 0.0
    %983 = vmatprep.subr.mxu0 0.0
    %984 = vmatpush2.msra.mxu0 0.0
    %985 = vmatprep.subr.mxu0 0.0
    %986 = vmatpush2.msra.mxu0 0.0
    %987 = vmatprep.subr.mxu0 0.0
    %988 = vmatpush2.msra.mxu0 0.0
    %989 = vmatprep.subr.mxu0 0.0
    %990 = vmatpush2.msra.mxu0 0.0
    %991 = vmatprep.subr.mxu0 0.0
    %992 = vmatpush2.msra.mxu0 0.0
    %993 = vmatprep.subr.mxu0 0.0
    %994 = vmatpush2.msra.mxu0 0.0
    %995 = vmatprep.subr.mxu0 0.0
    %996 = vmatpush2.msra.mxu0 0.0
    %997 = vmatprep.subr.mxu0 0.0
    %998 = vmatpush2.msra.mxu0 0.0
    %999 = vmatprep.subr.mxu0 0.0
    %1000 = vmatpush2.msra.mxu0 0.0
    %1001 = vmatprep.subr.mxu0 0.0
    %1002 = vmatpush2.msra.mxu0 0.0
    %1003 = vmatprep.mubr.f32.mxu0 0.0
    %1004 = vmatmul.mubr.f32.gmra.mxu0 %v937
    %v1005 = vpop.f32.mrf.mxu0
    %v1006 = vadd.f32 %v934, %v1005
    %v1007 = vpop.f32.mrf.mxu0
    %v1008 = vadd.f32 %v934, %v1007
    %1009 = vdwg.mxu0
    %v1010 = vmax.f32 %v1006, 0.0
    %v1011 = vmax.f32 %v1008, 0.0
    %v1012 = vld [vmem:[%s9] sm:$0xff]
    %v1013 = vld [vmem:[%s10] sm:$0xff]
    %1015 = vset.pattern.permute.xlu0 0
    %1016 = vperm.xlu0 %1015, %v1013
    %v1017 = vpop.permute.xlu0 %1016
    %v1020 = vsel %vm90, %v1012, 0
    %1022 = vmatprep.subr.mxu0 0.0
    %1023 = vmatpush1.msra.mxu0 0.0
    %1024 = vmatprep.subr.mxu0 0.0
    %1025 = vmatpush1.msra.mxu0 0.0
    %1026 = vmatprep.subr.mxu0 0.0
    %1027 = vmatpush1.msra.mxu0 0.0
    %1028 = vmatprep.subr.mxu0 0.0
    %1029 = vmatpush1.msra.mxu0 0.0
    %1030 = vmatprep.subr.mxu0 0.0
    %1031 = vmatpush1.msra.mxu0 0.0
    %1032 = vmatprep.subr.mxu0 0.0
    %1033 = vmatpush1.msra.mxu0 0.0
    %1034 = vmatprep.subr.mxu0 0.0
    %1035 = vmatpush1.msra.mxu0 0.0
    %1036 = vmatprep.subr.mxu0 0.0
    %1037 = vmatpush1.msra.mxu0 0.0
    %1038 = vmatprep.subr.mxu0 0.0
    %1039 = vmatpush1.msra.mxu0 0.0
    %1040 = vmatprep.subr.mxu0 0.0
    %1041 = vmatpush1.msra.mxu0 0.0
    %1042 = vmatprep.subr.mxu0 0.0
    %1043 = vmatpush1.msra.mxu0 0.0
    %1044 = vmatprep.subr.mxu0 0.0
    %1045 = vmatpush1.msra.mxu0 0.0
    %1046 = vmatprep.subr.mxu0 0.0
    %1047 = vmatpush1.msra.mxu0 0.0
    %1048 = vmatprep.subr.mxu0 0.0
    %1049 = vmatpush1.msra.mxu0 0.0
    %1050 = vmatprep.subr.mxu0 0.0
    %1051 = vmatpush1.msra.mxu0 0.0
    %1052 = vmatprep.subr.mxu0 %v1011
    %1053 = vmatpush1.msra.mxu0 %v1010
    %1054 = vmatprep.subr.mxu0 0.0
    %1055 = vmatpush2.msra.mxu0 0.0
    %1056 = vmatprep.subr.mxu0 0.0
    %1057 = vmatpush2.msra.mxu0 0.0
    %1058 = vmatprep.subr.mxu0 0.0
    %1059 = vmatpush2.msra.mxu0 0.0
    %1060 = vmatprep.subr.mxu0 0.0
    %1061 = vmatpush2.msra.mxu0 0.0
    %1062 = vmatprep.subr.mxu0 0.0
    %1063 = vmatpush2.msra.mxu0 0.0
    %1064 = vmatprep.subr.mxu0 0.0
    %1065 = vmatpush2.msra.mxu0 0.0
    %1066 = vmatprep.subr.mxu0 0.0
    %1067 = vmatpush2.msra.mxu0 0.0
    %1068 = vmatprep.subr.mxu0 0.0
    %1069 = vmatpush2.msra.mxu0 0.0
    %1070 = vmatprep.subr.mxu0 0.0
    %1071 = vmatpush2.msra.mxu0 0.0
    %1072 = vmatprep.subr.mxu0 0.0
    %1073 = vmatpush2.msra.mxu0 0.0
    %1074 = vmatprep.subr.mxu0 0.0
    %1075 = vmatpush2.msra.mxu0 0.0
    %1076 = vmatprep.subr.mxu0 0.0
    %1077 = vmatpush2.msra.mxu0 0.0
    %1078 = vmatprep.subr.mxu0 0.0
    %1079 = vmatpush2.msra.mxu0 0.0
    %1080 = vmatprep.subr.mxu0 0.0
    %1081 = vmatpush2.msra.mxu0 0.0
    %1082 = vmatprep.subr.mxu0 0.0
    %1083 = vmatpush2.msra.mxu0 0.0
    %1084 = vmatprep.subr.mxu0 0.0
    %1085 = vmatpush2.msra.mxu0 0.0
    %1086 = vmatprep.mubr.f32.mxu0 0.0
    %1087 = vmatmul.mubr.f32.gmra.mxu0 %v1020
    %v1088 = vpop.f32.mrf.mxu0
    %v1089 = vadd.f32 %v1017, %v1088
    %v1090 = vpop.f32.mrf.mxu0
    %v1091 = vadd.f32 %v1017, %v1090
    %1092 = vdwg.mxu0
    %1093 = vst [vmem:[#allocation2] sm:$0xff] %v1089
    %1094 = vst [vmem:[#allocation2 + $0x8] sm:$0xff] %v1091
    // Predicated region
    $region46: #{tpu_custom_call.1} parent=1 // pred_check
      _
    $region47: #{tpu_custom_call.1} parent=1 // pred_check_branch
      %1096 = sbr.rel (0) target = $region49
    $region48: #{tpu_custom_call.1} parent=1 // pred_region
      %s1098 = ssub.s32 256, 256
      %1099 = vsyncadd [#allocation3], %s1098
      %s1101 = sshll.u32 [#allocation2], 4
      %s1102 = int_to_ptr.vmem [resolvable:$true] %s1101
      %1104 = dma.vmem_to_hbm [thread:$0]  %s1102, 256, %s11, [#allocation3]
    $region49: #{tpu_custom_call.1} parent=1 // pred_fallthru
      _
    // Predicated region
    $region50: #{tpu_custom_call.1} parent=1 // pred_check
      _
    $region51: #{tpu_custom_call.1} parent=1 // pred_check_branch
      %1106 = sbr.rel (0) target = $region53
    $region52: #{tpu_custom_call.1} parent=1 // pred_region
      %1107 = dma.done [#allocation3], 256
    $region53: #{tpu_custom_call.1} parent=1 // pred_fallthru
      _
    %1108 = vsyncpa [#allocation3], 1

// kernel: tpu_custom_call.1
$region0: #{tpu_custom_call.1}
  #allocation0 [shape = 'u32[]', space=smem, size = 0x4, offset = 0x4, fixed_abs, tag = 'smem constant byte address 0x4 - core index']
  #allocation1 [shape = 'u32[144,128]{1,0:T(1,128)}', space=vmem, size = 0x12000, scoped, tag = 'internal scratch']
  %s0 = inlined_call_operand.vmem [shape: f32[1,8,256], index: 0, kind: input, shape index: {}]
  %s1 = inlined_call_operand.vmem [shape: f32[2,8,8], index: 1, kind: input, shape index: {}]
  %s2 = inlined_call_operand.vmem [shape: f32[8,1], index: 2, kind: input, shape index: {}]
  %s3 = inlined_call_operand.vmem [shape: f32[3,16,16], index: 3, kind: input, shape index: {}]
  %s4 = inlined_call_operand.vmem [shape: f32[3,16,1], index: 4, kind: input, shape index: {}]
  %s5 = inlined_call_operand.vmem [shape: f32[3,16,8], index: 5, kind: input, shape index: {}]
  %s6 = inlined_call_operand.vmem [shape: f32[3,16,1], index: 6, kind: input, shape index: {}]
  %s7 = inlined_call_operand.vmem [shape: f32[8,8], index: 7, kind: input, shape index: {}]
  %s8 = inlined_call_operand.vmem [shape: f32[8,1], index: 8, kind: input, shape index: {}]
  %s9 = inlined_call_operand.vmem [shape: f32[8,8], index: 9, kind: input, shape index: {}]
  %s10 = inlined_call_operand.vmem [shape: f32[8,1], index: 10, kind: input, shape index: {}]
  %s11 = inlined_call_operand.hbm [shape: f32[1,8,256], index: 11, kind: output, shape index: {}]
  %s12 = sld [smem:[#allocation0]]
  $region54: #{tpu_custom_call.1} parent=0
    _
  %s14 = ssub.s32 1, %s12
  %s15 = scalar_select 0, %s14, %s12
  $region1: #{tpu_custom_call.1} parent=0
    #allocation2 [shape = 'u8[8192]{0}', space=vmem, size = 0x2000, scoped, tag = 'output window, operand 0, single buffered']
    #allocation3 [shape = 's32[1]{0}', space=sflag, size = 0x4, scoped, tag = 'scoped memory for tpu_custom_call.1']
    %16 = vsyncpa [#allocation3], 0
    // Predicated region
    $region2: #{tpu_custom_call.1} parent=1 // pred_check
      _
    $region3: #{tpu_custom_call.1} parent=1 // pred_check_branch
      %18 = sbr.rel (0) target = $region5
    $region4: #{tpu_custom_call.1} parent=1 // pred_region
      _
    $region5: #{tpu_custom_call.1} parent=1 // pred_fallthru
      _
    // Predicated region
    $region6: #{tpu_custom_call.1} parent=1 // pred_check
      _
    $region7: #{tpu_custom_call.1} parent=1 // pred_check_branch
      %20 = sbr.rel (0) target = $region9
    $region8: #{tpu_custom_call.1} parent=1 // pred_region
      _
    $region9: #{tpu_custom_call.1} parent=1 // pred_fallthru
      _
    // Predicated region
    $region10: #{tpu_custom_call.1} parent=1 // pred_check
      _
    $region11: #{tpu_custom_call.1} parent=1 // pred_check_branch
      %22 = sbr.rel (0) target = $region13
    $region12: #{tpu_custom_call.1} parent=1 // pred_region
      _
    $region13: #{tpu_custom_call.1} parent=1 // pred_fallthru
      _
    // Predicated region
    $region14: #{tpu_custom_call.1} parent=1 // pred_check
      _
    $region15: #{tpu_custom_call.1} parent=1 // pred_check_branch
      %24 = sbr.rel (0) target = $region17
    $region16: #{tpu_custom_call.1} parent=1 // pred_region
      _
    $region17: #{tpu_custom_call.1} parent=1 // pred_fallthru
      _
    // Predicated region
    $region18: #{tpu_custom_call.1} parent=1 // pred_check
      _
    $region19: #{tpu_custom_call.1} parent=1 // pred_check_branch
      %26 = sbr.rel (0) target = $region21
    $region20: #{tpu_custom_call.1} parent=1 // pred_region
      _
    $region21: #{tpu_custom_call.1} parent=1 // pred_fallthru
      _
    // Predicated region
    $region22: #{tpu_custom_call.1} parent=1 // pred_check
      _
    $region23: #{tpu_custom_call.1} parent=1 // pred_check_branch
      %28 = sbr.rel (0) target = $region25
    $region24: #{tpu_custom_call.1} parent=1 // pred_region
      _
    $region25: #{tpu_custom_call.1} parent=1 // pred_fallthru
      _
    // Predicated region
    $region26: #{tpu_custom_call.1} parent=1 // pred_check
      _
    $region27: #{tpu_custom_call.1} parent=1 // pred_check_branch
      %30 = sbr.rel (0) target = $region29
    $region28: #{tpu_custom_call.1} parent=1 // pred_region
      _
    $region29: #{tpu_custom_call.1} parent=1 // pred_fallthru
      _
    // Predicated region
    $region30: #{tpu_custom_call.1} parent=1 // pred_check
      _
    $region31: #{tpu_custom_call.1} parent=1 // pred_check_branch
      %32 = sbr.rel (0) target = $region33
    $region32: #{tpu_custom_call.1} parent=1 // pred_region
      _
    $region33: #{tpu_custom_call.1} parent=1 // pred_fallthru
      _
    // Predicated region
    $region34: #{tpu_custom_call.1} parent=1 // pred_check
      _
    $region35: #{tpu_custom_call.1} parent=1 // pred_check_branch
      %34 = sbr.rel (0) target = $region37
    $region36: #{tpu_custom_call.1} parent=1 // pred_region
      _
    $region37: #{tpu_custom_call.1} parent=1 // pred_fallthru
      _
    // Predicated region
    $region38: #{tpu_custom_call.1} parent=1 // pred_check
      _
    $region39: #{tpu_custom_call.1} parent=1 // pred_check_branch
      %36 = sbr.rel (0) target = $region41
    $region40: #{tpu_custom_call.1} parent=1 // pred_region
      _
    $region41: #{tpu_custom_call.1} parent=1 // pred_fallthru
      _
    // Predicated region
    $region42: #{tpu_custom_call.1} parent=1 // pred_check
      _
    $region43: #{tpu_custom_call.1} parent=1 // pred_check_branch
      %38 = sbr.rel (0) target = $region45
    $region44: #{tpu_custom_call.1} parent=1 // pred_region
      _
    $region45: #{tpu_custom_call.1} parent=1 // pred_fallthru
      _
    %v39 = vld [vmem:[%s0] sm:$0xff]
    %v40 = vld [vmem:[%s0 + $0x8] sm:$0xff]
    %v41 = vlaneseq
    %v42 = vand.u32 %v41, 127
    %v43 = vadd.s32 %v42, 128
    %vm44 = vcmp.lt.s32.totalorder %v42, 0
    %v45 = vsub.s32 0, %v42
    %v46 = vsel %vm44, %v45, %v42
    %v47 = vshrl.u32 %v46, 7
    %v48 = vand.u32 %v46, 127
    %v49 = vsub.s32 0, %v48
    %v50 = vsel %vm44, %v49, %v48
    %vm51 = vcmp.lt.s32.totalorder %v43, 0
    %v52 = vsub.s32 0, %v43
    %v53 = vsel %vm51, %v52, %v43
    %v54 = vshrl.u32 %v53, 7
    %v55 = vand.u32 %v53, 127
    %v56 = vsub.s32 0, %v55
    %v57 = vsel %vm51, %v56, %v55
    %vm58 = vcmp.ne.s32.totalorder %v50, 0
    %vm59 = vcmp.ne.s32.totalorder %v57, 0
    %vm60 = vcmp.lt.s32.totalorder %v50, 0
    %vm61 = vcmp.lt.s32.totalorder %v57, 0
    %vm62 = vmand %vm60, %vm58
    %vm63 = vmand %vm61, %vm59
    %v64 = vadd.s32 %v50, 128
    %v65 = vadd.s32 %v57, 128
    %v66 = vsel %vm62, %v64, %v50
    %v67 = vsel %vm63, %v65, %v57
    %vm68 = vcmp.ge.s32.totalorder %v66, 1
    %vm69 = vcmp.ge.s32.totalorder %v67, 1
    %vm70 = vcmp.ge.s32.totalorder %v66, 2
    %vm71 = vcmp.ge.s32.totalorder %v67, 2
    %vm72 = vcmp.ge.s32.totalorder %v66, 4
    %vm73 = vcmp.ge.s32.totalorder %v67, 4
    %s74 = scalar_lea.vmem %s1, 8
    %v75 = vld [vmem:[%s74] sm:$0xff]
    %v76 = vld [vmem:[%s1] sm:$0xff]
    %77 = vrot.lane.b32.xlu0 %v39, 1
    %v78 = vpop.permute.xlu0 %77
    %79 = vrot.lane.b32.xlu0 %v40, 1
    %v80 = vpop.permute.xlu0 %79
    %vm81 = vcmp.lt.s32.totalorder %v42, 1
    %v82 = vsel %vm81, %v78, %v80
    %v83 = vsel %vm81, %v80, %v78
    %v84 = vsel %vm68, 1, 0
    %v85 = vsel %vm69, 1, 0
    %vm86 = vcmp.eq.s32.totalorder %v84, 1
    %vm87 = vcmp.eq.s32.totalorder %v85, 1
    %v88 = vsel %vm86, %v83, 0.0
    %v89 = vsel %vm87, %v82, 0.0
    %vm90 = vcmask 64512
    %v92 = vsel %vm90, %v76, 0
    %94 = vmatprep.subr.mxu0 0.0
    %95 = vmatpush1.msra.mxu0 0.0
    %96 = vmatprep.subr.mxu0 0.0
    %97 = vmatpush1.msra.mxu0 0.0
    %98 = vmatprep.subr.mxu0 0.0
    %99 = vmatpush1.msra.mxu0 0.0
    %100 = vmatprep.subr.mxu0 0.0
    %101 = vmatpush1.msra.mxu0 0.0
    %102 = vmatprep.subr.mxu0 0.0
    %103 = vmatpush1.msra.mxu0 0.0
    %104 = vmatprep.subr.mxu0 0.0
    %105 = vmatpush1.msra.mxu0 0.0
    %106 = vmatprep.subr.mxu0 0.0
    %107 = vmatpush1.msra.mxu0 0.0
    %108 = vmatprep.subr.mxu0 0.0
    %109 = vmatpush1.msra.mxu0 0.0
    %110 = vmatprep.subr.mxu0 0.0
    %111 = vmatpush1.msra.mxu0 0.0
    %112 = vmatprep.subr.mxu0 0.0
    %113 = vmatpush1.msra.mxu0 0.0
    %114 = vmatprep.subr.mxu0 0.0
    %115 = vmatpush1.msra.mxu0 0.0
    %116 = vmatprep.subr.mxu0 0.0
    %117 = vmatpush1.msra.mxu0 0.0
    %118 = vmatprep.subr.mxu0 0.0
    %119 = vmatpush1.msra.mxu0 0.0
    %120 = vmatprep.subr.mxu0 0.0
    %121 = vmatpush1.msra.mxu0 0.0
    %122 = vmatprep.subr.mxu0 0.0
    %123 = vmatpush1.msra.mxu0 0.0
    %124 = vmatprep.subr.mxu0 %v89
    %125 = vmatpush1.msra.mxu0 %v88
    %126 = vmatprep.subr.mxu0 0.0
    %127 = vmatpush2.msra.mxu0 0.0
    %128 = vmatprep.subr.mxu0 0.0
    %129 = vmatpush2.msra.mxu0 0.0
    %130 = vmatprep.subr.mxu0 0.0
    %131 = vmatpush2.msra.mxu0 0.0
    %132 = vmatprep.subr.mxu0 0.0
    %133 = vmatpush2.msra.mxu0 0.0
    %134 = vmatprep.subr.mxu0 0.0
    %135 = vmatpush2.msra.mxu0 0.0
    %136 = vmatprep.subr.mxu0 0.0
    %137 = vmatpush2.msra.mxu0 0.0
    %138 = vmatprep.subr.mxu0 0.0
    %139 = vmatpush2.msra.mxu0 0.0
    %140 = vmatprep.subr.mxu0 0.0
    %141 = vmatpush2.msra.mxu0 0.0
    %142 = vmatprep.subr.mxu0 0.0
    %143 = vmatpush2.msra.mxu0 0.0
    %144 = vmatprep.subr.mxu0 0.0
    %145 = vmatpush2.msra.mxu0 0.0
    %146 = vmatprep.subr.mxu0 0.0
    %147 = vmatpush2.msra.mxu0 0.0
    %148 = vmatprep.subr.mxu0 0.0
    %149 = vmatpush2.msra.mxu0 0.0
    %150 = vmatprep.subr.mxu0 0.0
    %151 = vmatpush2.msra.mxu0 0.0
    %152 = vmatprep.subr.mxu0 0.0
    %153 = vmatpush2.msra.mxu0 0.0
    %154 = vmatprep.subr.mxu0 0.0
    %155 = vmatpush2.msra.mxu0 0.0
    %156 = vmatprep.subr.mxu0 0.0
    %157 = vmatpush2.msra.mxu0 0.0
    %158 = vmatprep.mubr.f32.mxu0 0.0
    %159 = vmatmul.mubr.f32.gmra.mxu0 %v92
    %v160 = vpop.f32.mrf.mxu0
    %v161 = vadd.f32 0.0, %v160
    %v162 = vpop.f32.mrf.mxu0
    %v163 = vadd.f32 0.0, %v162
    %164 = vdwg.mxu0
    %v166 = vsel %vm90, %v75, 0
    %168 = vmatprep.subr.mxu0 0.0
    %169 = vmatpush1.msra.mxu0 0.0
    %170 = vmatprep.subr.mxu0 0.0
    %171 = vmatpush1.msra.mxu0 0.0
    %172 = vmatprep.subr.mxu0 0.0
    %173 = vmatpush1.msra.mxu0 0.0
    %174 = vmatprep.subr.mxu0 0.0
    %175 = vmatpush1.msra.mxu0 0.0
    %176 = vmatprep.subr.mxu0 0.0
    %177 = vmatpush1.msra.mxu0 0.0
    %178 = vmatprep.subr.mxu0 0.0
    %179 = vmatpush1.msra.mxu0 0.0
    %180 = vmatprep.subr.mxu0 0.0
    %181 = vmatpush1.msra.mxu0 0.0
    %182 = vmatprep.subr.mxu0 0.0
    %183 = vmatpush1.msra.mxu0 0.0
    %184 = vmatprep.subr.mxu0 0.0
    %185 = vmatpush1.msra.mxu0 0.0
    %186 = vmatprep.subr.mxu0 0.0
    %187 = vmatpush1.msra.mxu0 0.0
    %188 = vmatprep.subr.mxu0 0.0
    %189 = vmatpush1.msra.mxu0 0.0
    %190 = vmatprep.subr.mxu0 0.0
    %191 = vmatpush1.msra.mxu0 0.0
    %192 = vmatprep.subr.mxu0 0.0
    %193 = vmatpush1.msra.mxu0 0.0
    %194 = vmatprep.subr.mxu0 0.0
    %195 = vmatpush1.msra.mxu0 0.0
    %196 = vmatprep.subr.mxu0 0.0
    %197 = vmatpush1.msra.mxu0 0.0
    %198 = vmatprep.subr.mxu0 %v40
    %199 = vmatpush1.msra.mxu0 %v39
    %200 = vmatprep.subr.mxu0 0.0
    %201 = vmatpush2.msra.mxu0 0.0
    %202 = vmatprep.subr.mxu0 0.0
    %203 = vmatpush2.msra.mxu0 0.0
    %204 = vmatprep.subr.mxu0 0.0
    %205 = vmatpush2.msra.mxu0 0.0
    %206 = vmatprep.subr.mxu0 0.0
    %207 = vmatpush2.msra.mxu0 0.0
    %208 = vmatprep.subr.mxu0 0.0
    %209 = vmatpush2.msra.mxu0 0.0
    %210 = vmatprep.subr.mxu0 0.0
    %211 = vmatpush2.msra.mxu0 0.0
    %212 = vmatprep.subr.mxu0 0.0
    %213 = vmatpush2.msra.mxu0 0.0
    %214 = vmatprep.subr.mxu0 0.0
    %215 = vmatpush2.msra.mxu0 0.0
    %216 = vmatprep.subr.mxu0 0.0
    %217 = vmatpush2.msra.mxu0 0.0
    %218 = vmatprep.subr.mxu0 0.0
    %219 = vmatpush2.msra.mxu0 0.0
    %220 = vmatprep.subr.mxu0 0.0
    %221 = vmatpush2.msra.mxu0 0.0
    %222 = vmatprep.subr.mxu0 0.0
    %223 = vmatpush2.msra.mxu0 0.0
    %224 = vmatprep.subr.mxu0 0.0
    %225 = vmatpush2.msra.mxu0 0.0
    %226 = vmatprep.subr.mxu0 0.0
    %227 = vmatpush2.msra.mxu0 0.0
    %228 = vmatprep.subr.mxu0 0.0
    %229 = vmatpush2.msra.mxu0 0.0
    %230 = vmatprep.subr.mxu0 0.0
    %231 = vmatpush2.msra.mxu0 0.0
    %232 = vmatprep.mubr.f32.mxu0 0.0
    %233 = vmatmul.mubr.f32.gmra.mxu0 %v166
    %v234 = vpop.f32.mrf.mxu0
    %v235 = vadd.f32 %v161, %v234
    %v236 = vpop.f32.mrf.mxu0
    %v237 = vadd.f32 %v163, %v236
    %238 = vdwg.mxu0
    %v239 = vld [vmem:[%s2] sm:$0xff]
    %241 = vset.pattern.permute.xlu0 0
    %242 = vperm.xlu0 %241, %v239
    %v243 = vpop.permute.xlu0 %242
    %v245 = vadd.f32 %v235, %v243
    %v246 = vadd.f32 %v237, %v243
    %v247 = vld [vmem:[%s3] sm:$0xff]
    %v248 = vld [vmem:[%s3 + $0x8] sm:$0xff]
    %249 = vrot.lane.b32.xlu0 %v245, 1
    %v250 = vpop.permute.xlu0 %249
    %251 = vrot.lane.b32.xlu0 %v246, 1
    %v252 = vpop.permute.xlu0 %251
    %v253 = vsel %vm81, %v250, %v252
    %v254 = vsel %vm81, %v252, %v250
    %v255 = vsel %vm86, %v254, 0.0
    %v256 = vsel %vm87, %v253, 0.0
    %v257 = vld [vmem:[%s4] sm:$0xff]
    %v258 = vld [vmem:[%s4 + $0x8] sm:$0xff]
    %260 = vset.pattern.permute.xlu0 0
    %261 = vperm.xlu0 %260, %v257
    %v262 = vpop.permute.xlu0 %261
    %265 = vset.pattern.permute.xlu0 0
    %266 = vperm.xlu0 %265, %v258
    %v267 = vpop.permute.xlu0 %266
    %vm269 = vcmask 130048
    %v271 = vsel %vm269, %v247, 0
    %v274 = vsel %vm269, %v248, 0
    %276 = vmatprep.subr.mxu0 0.0
    %277 = vmatpush1.msra.mxu0 0.0
    %278 = vmatprep.subr.mxu0 0.0
    %279 = vmatpush1.msra.mxu0 0.0
    %280 = vmatprep.subr.mxu0 0.0
    %281 = vmatpush1.msra.mxu0 0.0
    %282 = vmatprep.subr.mxu0 0.0
    %283 = vmatpush1.msra.mxu0 0.0
    %284 = vmatprep.subr.mxu0 0.0
    %285 = vmatpush1.msra.mxu0 0.0
    %286 = vmatprep.subr.mxu0 0.0
    %287 = vmatpush1.msra.mxu0 0.0
    %288 = vmatprep.subr.mxu0 0.0
    %289 = vmatpush1.msra.mxu0 0.0
    %290 = vmatprep.subr.mxu0 0.0
    %291 = vmatpush1.msra.mxu0 0.0
    %292 = vmatprep.subr.mxu0 0.0
    %293 = vmatpush1.msra.mxu0 0.0
    %294 = vmatprep.subr.mxu0 0.0
    %295 = vmatpush1.msra.mxu0 0.0
    %296 = vmatprep.subr.mxu0 0.0
    %297 = vmatpush1.msra.mxu0 0.0
    %298 = vmatprep.subr.mxu0 0.0
    %299 = vmatpush1.msra.mxu0 0.0
    %300 = vmatprep.subr.mxu0 0.0
    %301 = vmatpush1.msra.mxu0 0.0
    %302 = vmatprep.subr.mxu0 0.0
    %303 = vmatpush1.msra.mxu0 0.0
    %304 = vmatprep.subr.mxu0 %v246
    %305 = vmatpush1.msra.mxu0 %v245
    %306 = vmatprep.subr.mxu0 %v256
    %307 = vmatpush1.msra.mxu0 %v255
    %308 = vmatprep.subr.mxu0 0.0
    %309 = vmatpush2.msra.mxu0 0.0
    %310 = vmatprep.subr.mxu0 0.0
    %311 = vmatpush2.msra.mxu0 0.0
    %312 = vmatprep.subr.mxu0 0.0
    %313 = vmatpush2.msra.mxu0 0.0
    %314 = vmatprep.subr.mxu0 0.0
    %315 = vmatpush2.msra.mxu0 0.0
    %316 = vmatprep.subr.mxu0 0.0
    %317 = vmatpush2.msra.mxu0 0.0
    %318 = vmatprep.subr.mxu0 0.0
    %319 = vmatpush2.msra.mxu0 0.0
    %320 = vmatprep.subr.mxu0 0.0
    %321 = vmatpush2.msra.mxu0 0.0
    %322 = vmatprep.subr.mxu0 0.0
    %323 = vmatpush2.msra.mxu0 0.0
    %324 = vmatprep.subr.mxu0 0.0
    %325 = vmatpush2.msra.mxu0 0.0
    %326 = vmatprep.subr.mxu0 0.0
    %327 = vmatpush2.msra.mxu0 0.0
    %328 = vmatprep.subr.mxu0 0.0
    %329 = vmatpush2.msra.mxu0 0.0
    %330 = vmatprep.subr.mxu0 0.0
    %331 = vmatpush2.msra.mxu0 0.0
    %332 = vmatprep.subr.mxu0 0.0
    %333 = vmatpush2.msra.mxu0 0.0
    %334 = vmatprep.subr.mxu0 0.0
    %335 = vmatpush2.msra.mxu0 0.0
    %336 = vmatprep.subr.mxu0 0.0
    %337 = vmatpush2.msra.mxu0 0.0
    %338 = vmatprep.subr.mxu0 0.0
    %339 = vmatpush2.msra.mxu0 0.0
    %340 = vmatprep.mubr.f32.mxu0 0.0
    %341 = vmatmul.mubr.f32.gmra.mxu0 %v271
    %v342 = vpop.f32.mrf.mxu0
    %v343 = vadd.f32 %v262, %v342
    %v344 = vpop.f32.mrf.mxu0
    %v345 = vadd.f32 %v262, %v344
    %346 = vmatprep.mubr.f32.mxu0 0.0
    %347 = vmatmul.mubr.f32.gmra.mxu0 %v274
    %v348 = vpop.f32.mrf.mxu0
    %v349 = vadd.f32 %v267, %v348
    %v350 = vpop.f32.mrf.mxu0
    %v351 = vadd.f32 %v267, %v350
    %352 = vdwg.mxu0
    %v353 = vtanh.pop %v349
    %v354 = vtanh.pop %v351
    %v355 = vxor.u32 %v343, 2147483648
    %v356 = vxor.u32 %v345, 2147483648
    %v357 = vmul.f32 %v355, 1.442695
    %v358 = vpow.pop %v357
    %v359 = vmul.f32 %v356, 1.442695
    %v360 = vpow.pop %v359
    %v361 = vadd.f32 %v358, 1.0
    %v362 = vadd.f32 %v360, 1.0
    %v363 = vrcp.pop %v361
    %v364 = vmul.f32 1.0, %v363
    %v365 = vrcp.pop %v362
    %v366 = vmul.f32 1.0, %v365
    %v367 = vmul.f32 %v353, %v364
    %v368 = vmul.f32 %v354, %v366
    %v369 = vld [vmem:[%s5] sm:$0xff]
    %v370 = vld [vmem:[%s5 + $0x8] sm:$0xff]
    %v371 = vld [vmem:[%s6] sm:$0xff]
    %v372 = vld [vmem:[%s6 + $0x8] sm:$0xff]
    %374 = vset.pattern.permute.xlu0 0
    %375 = vperm.xlu0 %374, %v371
    %v376 = vpop.permute.xlu0 %375
    %379 = vset.pattern.permute.xlu0 0
    %380 = vperm.xlu0 %379, %v372
    %v381 = vpop.permute.xlu0 %380
    %v384 = vsel %vm90, %v369, 0
    %v387 = vsel %vm90, %v370, 0
    %389 = vmatprep.subr.mxu0 0.0
    %390 = vmatpush1.msra.mxu0 0.0
    %391 = vmatprep.subr.mxu0 0.0
    %392 = vmatpush1.msra.mxu0 0.0
    %393 = vmatprep.subr.mxu0 0.0
    %394 = vmatpush1.msra.mxu0 0.0
    %395 = vmatprep.subr.mxu0 0.0
    %396 = vmatpush1.msra.mxu0 0.0
    %397 = vmatprep.subr.mxu0 0.0
    %398 = vmatpush1.msra.mxu0 0.0
    %399 = vmatprep.subr.mxu0 0.0
    %400 = vmatpush1.msra.mxu0 0.0
    %401 = vmatprep.subr.mxu0 0.0
    %402 = vmatpush1.msra.mxu0 0.0
    %403 = vmatprep.subr.mxu0 0.0
    %404 = vmatpush1.msra.mxu0 0.0
    %405 = vmatprep.subr.mxu0 0.0
    %406 = vmatpush1.msra.mxu0 0.0
    %407 = vmatprep.subr.mxu0 0.0
    %408 = vmatpush1.msra.mxu0 0.0
    %409 = vmatprep.subr.mxu0 0.0
    %410 = vmatpush1.msra.mxu0 0.0
    %411 = vmatprep.subr.mxu0 0.0
    %412 = vmatpush1.msra.mxu0 0.0
    %413 = vmatprep.subr.mxu0 0.0
    %414 = vmatpush1.msra.mxu0 0.0
    %415 = vmatprep.subr.mxu0 0.0
    %416 = vmatpush1.msra.mxu0 0.0
    %417 = vmatprep.subr.mxu0 0.0
    %418 = vmatpush1.msra.mxu0 0.0
    %419 = vmatprep.subr.mxu0 %v368
    %420 = vmatpush1.msra.mxu0 %v367
    %421 = vmatprep.subr.mxu0 0.0
    %422 = vmatpush2.msra.mxu0 0.0
    %423 = vmatprep.subr.mxu0 0.0
    %424 = vmatpush2.msra.mxu0 0.0
    %425 = vmatprep.subr.mxu0 0.0
    %426 = vmatpush2.msra.mxu0 0.0
    %427 = vmatprep.subr.mxu0 0.0
    %428 = vmatpush2.msra.mxu0 0.0
    %429 = vmatprep.subr.mxu0 0.0
    %430 = vmatpush2.msra.mxu0 0.0
    %431 = vmatprep.subr.mxu0 0.0
    %432 = vmatpush2.msra.mxu0 0.0
    %433 = vmatprep.subr.mxu0 0.0
    %434 = vmatpush2.msra.mxu0 0.0
    %435 = vmatprep.subr.mxu0 0.0
    %436 = vmatpush2.msra.mxu0 0.0
    %437 = vmatprep.subr.mxu0 0.0
    %438 = vmatpush2.msra.mxu0 0.0
    %439 = vmatprep.subr.mxu0 0.0
    %440 = vmatpush2.msra.mxu0 0.0
    %441 = vmatprep.subr.mxu0 0.0
    %442 = vmatpush2.msra.mxu0 0.0
    %443 = vmatprep.subr.mxu0 0.0
    %444 = vmatpush2.msra.mxu0 0.0
    %445 = vmatprep.subr.mxu0 0.0
    %446 = vmatpush2.msra.mxu0 0.0
    %447 = vmatprep.subr.mxu0 0.0
    %448 = vmatpush2.msra.mxu0 0.0
    %449 = vmatprep.subr.mxu0 0.0
    %450 = vmatpush2.msra.mxu0 0.0
    %451 = vmatprep.subr.mxu0 0.0
    %452 = vmatpush2.msra.mxu0 0.0
    %453 = vmatprep.mubr.f32.mxu0 0.0
    %454 = vmatmul.mubr.f32.gmra.mxu0 %v384
    %v455 = vpop.f32.mrf.mxu0
    %v456 = vadd.f32 %v376, %v455
    %v457 = vpop.f32.mrf.mxu0
    %v458 = vadd.f32 %v376, %v457
    %459 = vmatprep.mubr.f32.mxu0 0.0
    %460 = vmatmul.mubr.f32.gmra.mxu0 %v387
    %v461 = vpop.f32.mrf.mxu0
    %v462 = vadd.f32 %v381, %v461
    %v463 = vpop.f32.mrf.mxu0
    %v464 = vadd.f32 %v381, %v463
    %465 = vdwg.mxu0
    %v466 = vadd.f32 %v456, %v245
    %v467 = vadd.f32 %v458, %v246
    %v468 = vadd.f32 %v462, 0.0
    %v469 = vadd.f32 %v464, 0.0
    %s470 = scalar_lea.vmem %s3, 16
    %v471 = vld [vmem:[%s470] sm:$0xff]
    %v472 = vld [vmem:[%s470 + $0x8] sm:$0xff]
    %473 = vrot.lane.b32.xlu0 %v466, 2
    %v474 = vpop.permute.xlu0 %473
    %475 = vrot.lane.b32.xlu0 %v467, 2
    %v476 = vpop.permute.xlu0 %475
    %vm477 = vcmp.lt.s32.totalorder %v42, 2
    %v478 = vsel %vm477, %v474, %v476
    %v479 = vsel %vm477, %v476, %v474
    %v480 = vsel %vm70, 1, 0
    %v481 = vsel %vm71, 1, 0
    %vm482 = vcmp.eq.s32.totalorder %v480, 1
    %vm483 = vcmp.eq.s32.totalorder %v481, 1
    %v484 = vsel %vm482, %v479, 0.0
    %v485 = vsel %vm483, %v478, 0.0
    %s486 = scalar_lea.vmem %s4, 16
    %v487 = vld [vmem:[%s486] sm:$0xff]
    %v488 = vld [vmem:[%s486 + $0x8] sm:$0xff]
    %490 = vset.pattern.permute.xlu0 0
    %491 = vperm.xlu0 %490, %v487
    %v492 = vpop.permute.xlu0 %491
    %495 = vset.pattern.permute.xlu0 0
    %496 = vperm.xlu0 %495, %v488
    %v497 = vpop.permute.xlu0 %496
    %v500 = vsel %vm269, %v471, 0
    %v503 = vsel %vm269, %v472, 0
    %505 = vmatprep.subr.mxu0 0.0
    %506 = vmatpush1.msra.mxu0 0.0
    %507 = vmatprep.subr.mxu0 0.0
    %508 = vmatpush1.msra.mxu0 0.0
    %509 = vmatprep.subr.mxu0 0.0
    %510 = vmatpush1.msra.mxu0 0.0
    %511 = vmatprep.subr.mxu0 0.0
    %512 = vmatpush1.msra.mxu0 0.0
    %513 = vmatprep.subr.mxu0 0.0
    %514 = vmatpush1.msra.mxu0 0.0
    %515 = vmatprep.subr.mxu0 0.0
    %516 = vmatpush1.msra.mxu0 0.0
    %517 = vmatprep.subr.mxu0 0.0
    %518 = vmatpush1.msra.mxu0 0.0
    %519 = vmatprep.subr.mxu0 0.0
    %520 = vmatpush1.msra.mxu0 0.0
    %521 = vmatprep.subr.mxu0 0.0
    %522 = vmatpush1.msra.mxu0 0.0
    %523 = vmatprep.subr.mxu0 0.0
    %524 = vmatpush1.msra.mxu0 0.0
    %525 = vmatprep.subr.mxu0 0.0
    %526 = vmatpush1.msra.mxu0 0.0
    %527 = vmatprep.subr.mxu0 0.0
    %528 = vmatpush1.msra.mxu0 0.0
    %529 = vmatprep.subr.mxu0 0.0
    %530 = vmatpush1.msra.mxu0 0.0
    %531 = vmatprep.subr.mxu0 0.0
    %532 = vmatpush1.msra.mxu0 0.0
    %533 = vmatprep.subr.mxu0 %v467
    %534 = vmatpush1.msra.mxu0 %v466
    %535 = vmatprep.subr.mxu0 %v485
    %536 = vmatpush1.msra.mxu0 %v484
    %537 = vmatprep.subr.mxu0 0.0
    %538 = vmatpush2.msra.mxu0 0.0
    %539 = vmatprep.subr.mxu0 0.0
    %540 = vmatpush2.msra.mxu0 0.0
    %541 = vmatprep.subr.mxu0 0.0
    %542 = vmatpush2.msra.mxu0 0.0
    %543 = vmatprep.subr.mxu0 0.0
    %544 = vmatpush2.msra.mxu0 0.0
    %545 = vmatprep.subr.mxu0 0.0
    %546 = vmatpush2.msra.mxu0 0.0
    %547 = vmatprep.subr.mxu0 0.0
    %548 = vmatpush2.msra.mxu0 0.0
    %549 = vmatprep.subr.mxu0 0.0
    %550 = vmatpush2.msra.mxu0 0.0
    %551 = vmatprep.subr.mxu0 0.0
    %552 = vmatpush2.msra.mxu0 0.0
    %553 = vmatprep.subr.mxu0 0.0
    %554 = vmatpush2.msra.mxu0 0.0
    %555 = vmatprep.subr.mxu0 0.0
    %556 = vmatpush2.msra.mxu0 0.0
    %557 = vmatprep.subr.mxu0 0.0
    %558 = vmatpush2.msra.mxu0 0.0
    %559 = vmatprep.subr.mxu0 0.0
    %560 = vmatpush2.msra.mxu0 0.0
    %561 = vmatprep.subr.mxu0 0.0
    %562 = vmatpush2.msra.mxu0 0.0
    %563 = vmatprep.subr.mxu0 0.0
    %564 = vmatpush2.msra.mxu0 0.0
    %565 = vmatprep.subr.mxu0 0.0
    %566 = vmatpush2.msra.mxu0 0.0
    %567 = vmatprep.subr.mxu0 0.0
    %568 = vmatpush2.msra.mxu0 0.0
    %569 = vmatprep.mubr.f32.mxu0 0.0
    %570 = vmatmul.mubr.f32.gmra.mxu0 %v500
    %v571 = vpop.f32.mrf.mxu0
    %v572 = vadd.f32 %v492, %v571
    %v573 = vpop.f32.mrf.mxu0
    %v574 = vadd.f32 %v492, %v573
    %575 = vmatprep.mubr.f32.mxu0 0.0
    %576 = vmatmul.mubr.f32.gmra.mxu0 %v503
    %v577 = vpop.f32.mrf.mxu0
    %v578 = vadd.f32 %v497, %v577
    %v579 = vpop.f32.mrf.mxu0
    %v580 = vadd.f32 %v497, %v579
    %581 = vdwg.mxu0
    %v582 = vtanh.pop %v578
    %v583 = vtanh.pop %v580
    %v584 = vxor.u32 %v572, 2147483648
    %v585 = vxor.u32 %v574, 2147483648
    %v586 = vmul.f32 %v584, 1.442695
    %v587 = vpow.pop %v586
    %v588 = vmul.f32 %v585, 1.442695
    %v589 = vpow.pop %v588
    %v590 = vadd.f32 %v587, 1.0
    %v591 = vadd.f32 %v589, 1.0
    %v592 = vrcp.pop %v590
    %v593 = vmul.f32 1.0, %v592
    %v594 = vrcp.pop %v591
    %v595 = vmul.f32 1.0, %v594
    %v596 = vmul.f32 %v582, %v593
    %v597 = vmul.f32 %v583, %v595
    %s598 = scalar_lea.vmem %s5, 16
    %v599 = vld [vmem:[%s598] sm:$0xff]
    %v600 = vld [vmem:[%s598 + $0x8] sm:$0xff]
    %s601 = scalar_lea.vmem %s6, 16
    %v602 = vld [vmem:[%s601] sm:$0xff]
    %v603 = vld [vmem:[%s601 + $0x8] sm:$0xff]
    %605 = vset.pattern.permute.xlu0 0
    %606 = vperm.xlu0 %605, %v602
    %v607 = vpop.permute.xlu0 %606
    %610 = vset.pattern.permute.xlu0 0
    %611 = vperm.xlu0 %610, %v603
    %v612 = vpop.permute.xlu0 %611
    %v615 = vsel %vm90, %v599, 0
    %v618 = vsel %vm90, %v600, 0
    %620 = vmatprep.subr.mxu0 0.0
    %621 = vmatpush1.msra.mxu0 0.0
    %622 = vmatprep.subr.mxu0 0.0
    %623 = vmatpush1.msra.mxu0 0.0
    %624 = vmatprep.subr.mxu0 0.0
    %625 = vmatpush1.msra.mxu0 0.0
    %626 = vmatprep.subr.mxu0 0.0
    %627 = vmatpush1.msra.mxu0 0.0
    %628 = vmatprep.subr.mxu0 0.0
    %629 = vmatpush1.msra.mxu0 0.0
    %630 = vmatprep.subr.mxu0 0.0
    %631 = vmatpush1.msra.mxu0 0.0
    %632 = vmatprep.subr.mxu0 0.0
    %633 = vmatpush1.msra.mxu0 0.0
    %634 = vmatprep.subr.mxu0 0.0
    %635 = vmatpush1.msra.mxu0 0.0
    %636 = vmatprep.subr.mxu0 0.0
    %637 = vmatpush1.msra.mxu0 0.0
    %638 = vmatprep.subr.mxu0 0.0
    %639 = vmatpush1.msra.mxu0 0.0
    %640 = vmatprep.subr.mxu0 0.0
    %641 = vmatpush1.msra.mxu0 0.0
    %642 = vmatprep.subr.mxu0 0.0
    %643 = vmatpush1.msra.mxu0 0.0
    %644 = vmatprep.subr.mxu0 0.0
    %645 = vmatpush1.msra.mxu0 0.0
    %646 = vmatprep.subr.mxu0 0.0
    %647 = vmatpush1.msra.mxu0 0.0
    %648 = vmatprep.subr.mxu0 0.0
    %649 = vmatpush1.msra.mxu0 0.0
    %650 = vmatprep.subr.mxu0 %v597
    %651 = vmatpush1.msra.mxu0 %v596
    %652 = vmatprep.subr.mxu0 0.0
    %653 = vmatpush2.msra.mxu0 0.0
    %654 = vmatprep.subr.mxu0 0.0
    %655 = vmatpush2.msra.mxu0 0.0
    %656 = vmatprep.subr.mxu0 0.0
    %657 = vmatpush2.msra.mxu0 0.0
    %658 = vmatprep.subr.mxu0 0.0
    %659 = vmatpush2.msra.mxu0 0.0
    %660 = vmatprep.subr.mxu0 0.0
    %661 = vmatpush2.msra.mxu0 0.0
    %662 = vmatprep.subr.mxu0 0.0
    %663 = vmatpush2.msra.mxu0 0.0
    %664 = vmatprep.subr.mxu0 0.0
    %665 = vmatpush2.msra.mxu0 0.0
    %666 = vmatprep.subr.mxu0 0.0
    %667 = vmatpush2.msra.mxu0 0.0
    %668 = vmatprep.subr.mxu0 0.0
    %669 = vmatpush2.msra.mxu0 0.0
    %670 = vmatprep.subr.mxu0 0.0
    %671 = vmatpush2.msra.mxu0 0.0
    %672 = vmatprep.subr.mxu0 0.0
    %673 = vmatpush2.msra.mxu0 0.0
    %674 = vmatprep.subr.mxu0 0.0
    %675 = vmatpush2.msra.mxu0 0.0
    %676 = vmatprep.subr.mxu0 0.0
    %677 = vmatpush2.msra.mxu0 0.0
    %678 = vmatprep.subr.mxu0 0.0
    %679 = vmatpush2.msra.mxu0 0.0
    %680 = vmatprep.subr.mxu0 0.0
    %681 = vmatpush2.msra.mxu0 0.0
    %682 = vmatprep.subr.mxu0 0.0
    %683 = vmatpush2.msra.mxu0 0.0
    %684 = vmatprep.mubr.f32.mxu0 0.0
    %685 = vmatmul.mubr.f32.gmra.mxu0 %v615
    %v686 = vpop.f32.mrf.mxu0
    %v687 = vadd.f32 %v607, %v686
    %v688 = vpop.f32.mrf.mxu0
    %v689 = vadd.f32 %v607, %v688
    %690 = vmatprep.mubr.f32.mxu0 0.0
    %691 = vmatmul.mubr.f32.gmra.mxu0 %v618
    %v692 = vpop.f32.mrf.mxu0
    %v693 = vadd.f32 %v612, %v692
    %v694 = vpop.f32.mrf.mxu0
    %v695 = vadd.f32 %v612, %v694
    %696 = vdwg.mxu0
    %v697 = vadd.f32 %v687, %v466
    %v698 = vadd.f32 %v689, %v467
    %v699 = vadd.f32 %v468, %v693
    %v700 = vadd.f32 %v469, %v695
    %s701 = scalar_lea.vmem %s3, 32
    %v702 = vld [vmem:[%s701] sm:$0xff]
    %v703 = vld [vmem:[%s701 + $0x8] sm:$0xff]
    %704 = vrot.lane.b32.xlu0 %v697, 4
    %v705 = vpop.permute.xlu0 %704
    %706 = vrot.lane.b32.xlu0 %v698, 4
    %v707 = vpop.permute.xlu0 %706
    %vm708 = vcmp.lt.s32.totalorder %v42, 4
    %v709 = vsel %vm708, %v705, %v707
    %v710 = vsel %vm708, %v707, %v705
    %v711 = vsel %vm72, 1, 0
    %v712 = vsel %vm73, 1, 0
    %vm713 = vcmp.eq.s32.totalorder %v711, 1
    %vm714 = vcmp.eq.s32.totalorder %v712, 1
    %v715 = vsel %vm713, %v710, 0.0
    %v716 = vsel %vm714, %v709, 0.0
    %s717 = scalar_lea.vmem %s4, 32
    %v718 = vld [vmem:[%s717] sm:$0xff]
    %v719 = vld [vmem:[%s717 + $0x8] sm:$0xff]
    %721 = vset.pattern.permute.xlu0 0
    %722 = vperm.xlu0 %721, %v718
    %v723 = vpop.permute.xlu0 %722
    %726 = vset.pattern.permute.xlu0 0
    %727 = vperm.xlu0 %726, %v719
    %v728 = vpop.permute.xlu0 %727
    %v731 = vsel %vm269, %v702, 0
    %v734 = vsel %vm269, %v703, 0
    %736 = vmatprep.subr.mxu0 0.0
    %737 = vmatpush1.msra.mxu0 0.0
    %738 = vmatprep.subr.mxu0 0.0
    %739 = vmatpush1.msra.mxu0 0.0
    %740 = vmatprep.subr.mxu0 0.0
    %741 = vmatpush1.msra.mxu0 0.0
    %742 = vmatprep.subr.mxu0 0.0
    %743 = vmatpush1.msra.mxu0 0.0
    %744 = vmatprep.subr.mxu0 0.0
    %745 = vmatpush1.msra.mxu0 0.0
    %746 = vmatprep.subr.mxu0 0.0
    %747 = vmatpush1.msra.mxu0 0.0
    %748 = vmatprep.subr.mxu0 0.0
    %749 = vmatpush1.msra.mxu0 0.0
    %750 = vmatprep.subr.mxu0 0.0
    %751 = vmatpush1.msra.mxu0 0.0
    %752 = vmatprep.subr.mxu0 0.0
    %753 = vmatpush1.msra.mxu0 0.0
    %754 = vmatprep.subr.mxu0 0.0
    %755 = vmatpush1.msra.mxu0 0.0
    %756 = vmatprep.subr.mxu0 0.0
    %757 = vmatpush1.msra.mxu0 0.0
    %758 = vmatprep.subr.mxu0 0.0
    %759 = vmatpush1.msra.mxu0 0.0
    %760 = vmatprep.subr.mxu0 0.0
    %761 = vmatpush1.msra.mxu0 0.0
    %762 = vmatprep.subr.mxu0 0.0
    %763 = vmatpush1.msra.mxu0 0.0
    %764 = vmatprep.subr.mxu0 %v698
    %765 = vmatpush1.msra.mxu0 %v697
    %766 = vmatprep.subr.mxu0 %v716
    %767 = vmatpush1.msra.mxu0 %v715
    %768 = vmatprep.subr.mxu0 0.0
    %769 = vmatpush2.msra.mxu0 0.0
    %770 = vmatprep.subr.mxu0 0.0
    %771 = vmatpush2.msra.mxu0 0.0
    %772 = vmatprep.subr.mxu0 0.0
    %773 = vmatpush2.msra.mxu0 0.0
    %774 = vmatprep.subr.mxu0 0.0
    %775 = vmatpush2.msra.mxu0 0.0
    %776 = vmatprep.subr.mxu0 0.0
    %777 = vmatpush2.msra.mxu0 0.0
    %778 = vmatprep.subr.mxu0 0.0
    %779 = vmatpush2.msra.mxu0 0.0
    %780 = vmatprep.subr.mxu0 0.0
    %781 = vmatpush2.msra.mxu0 0.0
    %782 = vmatprep.subr.mxu0 0.0
    %783 = vmatpush2.msra.mxu0 0.0
    %784 = vmatprep.subr.mxu0 0.0
    %785 = vmatpush2.msra.mxu0 0.0
    %786 = vmatprep.subr.mxu0 0.0
    %787 = vmatpush2.msra.mxu0 0.0
    %788 = vmatprep.subr.mxu0 0.0
    %789 = vmatpush2.msra.mxu0 0.0
    %790 = vmatprep.subr.mxu0 0.0
    %791 = vmatpush2.msra.mxu0 0.0
    %792 = vmatprep.subr.mxu0 0.0
    %793 = vmatpush2.msra.mxu0 0.0
    %794 = vmatprep.subr.mxu0 0.0
    %795 = vmatpush2.msra.mxu0 0.0
    %796 = vmatprep.subr.mxu0 0.0
    %797 = vmatpush2.msra.mxu0 0.0
    %798 = vmatprep.subr.mxu0 0.0
    %799 = vmatpush2.msra.mxu0 0.0
    %800 = vmatprep.mubr.f32.mxu0 0.0
    %801 = vmatmul.mubr.f32.gmra.mxu0 %v731
    %v802 = vpop.f32.mrf.mxu0
    %v803 = vadd.f32 %v723, %v802
    %v804 = vpop.f32.mrf.mxu0
    %v805 = vadd.f32 %v723, %v804
    %806 = vmatprep.mubr.f32.mxu0 0.0
    %807 = vmatmul.mubr.f32.gmra.mxu0 %v734
    %v808 = vpop.f32.mrf.mxu0
    %v809 = vadd.f32 %v728, %v808
    %v810 = vpop.f32.mrf.mxu0
    %v811 = vadd.f32 %v728, %v810
    %812 = vdwg.mxu0
    %v813 = vtanh.pop %v809
    %v814 = vtanh.pop %v811
    %v815 = vxor.u32 %v803, 2147483648
    %v816 = vxor.u32 %v805, 2147483648
    %v817 = vmul.f32 %v815, 1.442695
    %v818 = vpow.pop %v817
    %v819 = vmul.f32 %v816, 1.442695
    %v820 = vpow.pop %v819
    %v821 = vadd.f32 %v818, 1.0
    %v822 = vadd.f32 %v820, 1.0
    %v823 = vrcp.pop %v821
    %v824 = vmul.f32 1.0, %v823
    %v825 = vrcp.pop %v822
    %v826 = vmul.f32 1.0, %v825
    %v827 = vmul.f32 %v813, %v824
    %v828 = vmul.f32 %v814, %v826
    %s829 = scalar_lea.vmem %s5, 32
    %v830 = vld [vmem:[%s829] sm:$0xff]
    %v831 = vld [vmem:[%s829 + $0x8] sm:$0xff]
    %s832 = scalar_lea.vmem %s6, 32
    %v833 = vld [vmem:[%s832] sm:$0xff]
    %v834 = vld [vmem:[%s832 + $0x8] sm:$0xff]
    %836 = vset.pattern.permute.xlu0 0
    %837 = vperm.xlu0 %836, %v833
    %v838 = vpop.permute.xlu0 %837
    %840 = vset.pattern.permute.xlu0 0
    %841 = vperm.xlu0 %840, %v834
    %v842 = vpop.permute.xlu0 %841
    %v845 = vsel %vm90, %v830, 0
    %v848 = vsel %vm90, %v831, 0
    %850 = vmatprep.subr.mxu0 0.0
    %851 = vmatpush1.msra.mxu0 0.0
    %852 = vmatprep.subr.mxu0 0.0
    %853 = vmatpush1.msra.mxu0 0.0
    %854 = vmatprep.subr.mxu0 0.0
    %855 = vmatpush1.msra.mxu0 0.0
    %856 = vmatprep.subr.mxu0 0.0
    %857 = vmatpush1.msra.mxu0 0.0
    %858 = vmatprep.subr.mxu0 0.0
    %859 = vmatpush1.msra.mxu0 0.0
    %860 = vmatprep.subr.mxu0 0.0
    %861 = vmatpush1.msra.mxu0 0.0
    %862 = vmatprep.subr.mxu0 0.0
    %863 = vmatpush1.msra.mxu0 0.0
    %864 = vmatprep.subr.mxu0 0.0
    %865 = vmatpush1.msra.mxu0 0.0
    %866 = vmatprep.subr.mxu0 0.0
    %867 = vmatpush1.msra.mxu0 0.0
    %868 = vmatprep.subr.mxu0 0.0
    %869 = vmatpush1.msra.mxu0 0.0
    %870 = vmatprep.subr.mxu0 0.0
    %871 = vmatpush1.msra.mxu0 0.0
    %872 = vmatprep.subr.mxu0 0.0
    %873 = vmatpush1.msra.mxu0 0.0
    %874 = vmatprep.subr.mxu0 0.0
    %875 = vmatpush1.msra.mxu0 0.0
    %876 = vmatprep.subr.mxu0 0.0
    %877 = vmatpush1.msra.mxu0 0.0
    %878 = vmatprep.subr.mxu0 0.0
    %879 = vmatpush1.msra.mxu0 0.0
    %880 = vmatprep.subr.mxu0 %v828
    %881 = vmatpush1.msra.mxu0 %v827
    %882 = vmatprep.subr.mxu0 0.0
    %883 = vmatpush2.msra.mxu0 0.0
    %884 = vmatprep.subr.mxu0 0.0
    %885 = vmatpush2.msra.mxu0 0.0
    %886 = vmatprep.subr.mxu0 0.0
    %887 = vmatpush2.msra.mxu0 0.0
    %888 = vmatprep.subr.mxu0 0.0
    %889 = vmatpush2.msra.mxu0 0.0
    %890 = vmatprep.subr.mxu0 0.0
    %891 = vmatpush2.msra.mxu0 0.0
    %892 = vmatprep.subr.mxu0 0.0
    %893 = vmatpush2.msra.mxu0 0.0
    %894 = vmatprep.subr.mxu0 0.0
    %895 = vmatpush2.msra.mxu0 0.0
    %896 = vmatprep.subr.mxu0 0.0
    %897 = vmatpush2.msra.mxu0 0.0
    %898 = vmatprep.subr.mxu0 0.0
    %899 = vmatpush2.msra.mxu0 0.0
    %900 = vmatprep.subr.mxu0 0.0
    %901 = vmatpush2.msra.mxu0 0.0
    %902 = vmatprep.subr.mxu0 0.0
    %903 = vmatpush2.msra.mxu0 0.0
    %904 = vmatprep.subr.mxu0 0.0
    %905 = vmatpush2.msra.mxu0 0.0
    %906 = vmatprep.subr.mxu0 0.0
    %907 = vmatpush2.msra.mxu0 0.0
    %908 = vmatprep.subr.mxu0 0.0
    %909 = vmatpush2.msra.mxu0 0.0
    %910 = vmatprep.subr.mxu0 0.0
    %911 = vmatpush2.msra.mxu0 0.0
    %912 = vmatprep.subr.mxu0 0.0
    %913 = vmatpush2.msra.mxu0 0.0
    %914 = vmatprep.mubr.f32.mxu0 0.0
    %915 = vmatmul.mubr.f32.gmra.mxu0 %v845
    %v916 = vpop.f32.mrf.mxu0
    %v917 = vpop.f32.mrf.mxu0
    %918 = vmatprep.mubr.f32.mxu0 0.0
    %919 = vmatmul.mubr.f32.gmra.mxu0 %v848
    %v920 = vpop.f32.mrf.mxu0
    %v921 = vadd.f32 %v842, %v920
    %v922 = vpop.f32.mrf.mxu0
    %v923 = vadd.f32 %v842, %v922
    %924 = vdwg.mxu0
    %v925 = vadd.f32 %v699, %v921
    %v926 = vadd.f32 %v700, %v923
    %v927 = vmax.f32 %v925, 0.0
    %v928 = vmax.f32 %v926, 0.0
    %v929 = vld [vmem:[%s7] sm:$0xff]
    %v930 = vld [vmem:[%s8] sm:$0xff]
    %932 = vset.pattern.permute.xlu0 0
    %933 = vperm.xlu0 %932, %v930
    %v934 = vpop.permute.xlu0 %933
    %v937 = vsel %vm90, %v929, 0
    %939 = vmatprep.subr.mxu0 0.0
    %940 = vmatpush1.msra.mxu0 0.0
    %941 = vmatprep.subr.mxu0 0.0
    %942 = vmatpush1.msra.mxu0 0.0
    %943 = vmatprep.subr.mxu0 0.0
    %944 = vmatpush1.msra.mxu0 0.0
    %945 = vmatprep.subr.mxu0 0.0
    %946 = vmatpush1.msra.mxu0 0.0
    %947 = vmatprep.subr.mxu0 0.0
    %948 = vmatpush1.msra.mxu0 0.0
    %949 = vmatprep.subr.mxu0 0.0
    %950 = vmatpush1.msra.mxu0 0.0
    %951 = vmatprep.subr.mxu0 0.0
    %952 = vmatpush1.msra.mxu0 0.0
    %953 = vmatprep.subr.mxu0 0.0
    %954 = vmatpush1.msra.mxu0 0.0
    %955 = vmatprep.subr.mxu0 0.0
    %956 = vmatpush1.msra.mxu0 0.0
    %957 = vmatprep.subr.mxu0 0.0
    %958 = vmatpush1.msra.mxu0 0.0
    %959 = vmatprep.subr.mxu0 0.0
    %960 = vmatpush1.msra.mxu0 0.0
    %961 = vmatprep.subr.mxu0 0.0
    %962 = vmatpush1.msra.mxu0 0.0
    %963 = vmatprep.subr.mxu0 0.0
    %964 = vmatpush1.msra.mxu0 0.0
    %965 = vmatprep.subr.mxu0 0.0
    %966 = vmatpush1.msra.mxu0 0.0
    %967 = vmatprep.subr.mxu0 0.0
    %968 = vmatpush1.msra.mxu0 0.0
    %969 = vmatprep.subr.mxu0 %v928
    %970 = vmatpush1.msra.mxu0 %v927
    %971 = vmatprep.subr.mxu0 0.0
    %972 = vmatpush2.msra.mxu0 0.0
    %973 = vmatprep.subr.mxu0 0.0
    %974 = vmatpush2.msra.mxu0 0.0
    %975 = vmatprep.subr.mxu0 0.0
    %976 = vmatpush2.msra.mxu0 0.0
    %977 = vmatprep.subr.mxu0 0.0
    %978 = vmatpush2.msra.mxu0 0.0
    %979 = vmatprep.subr.mxu0 0.0
    %980 = vmatpush2.msra.mxu0 0.0
    %981 = vmatprep.subr.mxu0 0.0
    %982 = vmatpush2.msra.mxu0 0.0
    %983 = vmatprep.subr.mxu0 0.0
    %984 = vmatpush2.msra.mxu0 0.0
    %985 = vmatprep.subr.mxu0 0.0
    %986 = vmatpush2.msra.mxu0 0.0
    %987 = vmatprep.subr.mxu0 0.0
    %988 = vmatpush2.msra.mxu0 0.0
    %989 = vmatprep.subr.mxu0 0.0
    %990 = vmatpush2.msra.mxu0 0.0
    %991 = vmatprep.subr.mxu0 0.0
    %992 = vmatpush2.msra.mxu0 0.0
    %993 = vmatprep.subr.mxu0 0.0
    %994 = vmatpush2.msra.mxu0 0.0
    %995 = vmatprep.subr.mxu0 0.0
    %996 = vmatpush2.msra.mxu0 0.0
    %997 = vmatprep.subr.mxu0 0.0
    %998 = vmatpush2.msra.mxu0 0.0
    %999 = vmatprep.subr.mxu0 0.0
    %1000 = vmatpush2.msra.mxu0 0.0
    %1001 = vmatprep.subr.mxu0 0.0
    %1002 = vmatpush2.msra.mxu0 0.0
    %1003 = vmatprep.mubr.f32.mxu0 0.0
    %1004 = vmatmul.mubr.f32.gmra.mxu0 %v937
    %v1005 = vpop.f32.mrf.mxu0
    %v1006 = vadd.f32 %v934, %v1005
    %v1007 = vpop.f32.mrf.mxu0
    %v1008 = vadd.f32 %v934, %v1007
    %1009 = vdwg.mxu0
    %v1010 = vmax.f32 %v1006, 0.0
    %v1011 = vmax.f32 %v1008, 0.0
    %v1012 = vld [vmem:[%s9] sm:$0xff]
    %v1013 = vld [vmem:[%s10] sm:$0xff]
    %1015 = vset.pattern.permute.xlu0 0
    %1016 = vperm.xlu0 %1015, %v1013
    %v1017 = vpop.permute.xlu0 %1016
    %v1020 = vsel %vm90, %v1012, 0
    %1022 = vmatprep.subr.mxu0 0.0
    %1023 = vmatpush1.msra.mxu0 0.0
    %1024 = vmatprep.subr.mxu0 0.0
    %1025 = vmatpush1.msra.mxu0 0.0
    %1026 = vmatprep.subr.mxu0 0.0
    %1027 = vmatpush1.msra.mxu0 0.0
    %1028 = vmatprep.subr.mxu0 0.0
    %1029 = vmatpush1.msra.mxu0 0.0
    %1030 = vmatprep.subr.mxu0 0.0
    %1031 = vmatpush1.msra.mxu0 0.0
    %1032 = vmatprep.subr.mxu0 0.0
    %1033 = vmatpush1.msra.mxu0 0.0
    %1034 = vmatprep.subr.mxu0 0.0
    %1035 = vmatpush1.msra.mxu0 0.0
    %1036 = vmatprep.subr.mxu0 0.0
    %1037 = vmatpush1.msra.mxu0 0.0
    %1038 = vmatprep.subr.mxu0 0.0
    %1039 = vmatpush1.msra.mxu0 0.0
    %1040 = vmatprep.subr.mxu0 0.0
    %1041 = vmatpush1.msra.mxu0 0.0
    %1042 = vmatprep.subr.mxu0 0.0
    %1043 = vmatpush1.msra.mxu0 0.0
    %1044 = vmatprep.subr.mxu0 0.0
    %1045 = vmatpush1.msra.mxu0 0.0
    %1046 = vmatprep.subr.mxu0 0.0
    %1047 = vmatpush1.msra.mxu0 0.0
    %1048 = vmatprep.subr.mxu0 0.0
    %1049 = vmatpush1.msra.mxu0 0.0
    %1050 = vmatprep.subr.mxu0 0.0
    %1051 = vmatpush1.msra.mxu0 0.0
    %1052 = vmatprep.subr.mxu0 %v1011
    %1053 = vmatpush1.msra.mxu0 %v1010
    %1054 = vmatprep.subr.mxu0 0.0
    %1055 = vmatpush2.msra.mxu0 0.0
    %1056 = vmatprep.subr.mxu0 0.0
    %1057 = vmatpush2.msra.mxu0 0.0
    %1058 = vmatprep.subr.mxu0 0.0
    %1059 = vmatpush2.msra.mxu0 0.0
    %1060 = vmatprep.subr.mxu0 0.0
    %1061 = vmatpush2.msra.mxu0 0.0
    %1062 = vmatprep.subr.mxu0 0.0
    %1063 = vmatpush2.msra.mxu0 0.0
    %1064 = vmatprep.subr.mxu0 0.0
    %1065 = vmatpush2.msra.mxu0 0.0
    %1066 = vmatprep.subr.mxu0 0.0
    %1067 = vmatpush2.msra.mxu0 0.0
    %1068 = vmatprep.subr.mxu0 0.0
    %1069 = vmatpush2.msra.mxu0 0.0
    %1070 = vmatprep.subr.mxu0 0.0
    %1071 = vmatpush2.msra.mxu0 0.0
    %1072 = vmatprep.subr.mxu0 0.0
    %1073 = vmatpush2.msra.mxu0 0.0
    %1074 = vmatprep.subr.mxu0 0.0
    %1075 = vmatpush2.msra.mxu0 0.0
    %1076 = vmatprep.subr.mxu0 0.0
    %1077 = vmatpush2.msra.mxu0 0.0
    %1078 = vmatprep.subr.mxu0 0.0
    %1079 = vmatpush2.msra.mxu0 0.0
    %1080 = vmatprep.subr.mxu0 0.0
    %1081 = vmatpush2.msra.mxu0 0.0
    %1082 = vmatprep.subr.mxu0 0.0
    %1083 = vmatpush2.msra.mxu0 0.0
    %1084 = vmatprep.subr.mxu0 0.0
    %1085 = vmatpush2.msra.mxu0 0.0
    %1086 = vmatprep.mubr.f32.mxu0 0.0
    %1087 = vmatmul.mubr.f32.gmra.mxu0 %v1020
    %v1088 = vpop.f32.mrf.mxu0
    %v1089 = vadd.f32 %v1017, %v1088
    %v1090 = vpop.f32.mrf.mxu0
    %v1091 = vadd.f32 %v1017, %v1090
    %1092 = vdwg.mxu0
    %1093 = vst [vmem:[#allocation2] sm:$0xff] %v1089
    %1094 = vst [vmem:[#allocation2 + $0x8] sm:$0xff] %v1091
    // Predicated region
    $region46: #{tpu_custom_call.1} parent=1 // pred_check
      _
    $region47: #{tpu_custom_call.1} parent=1 // pred_check_branch
      %1096 = sbr.rel (0) target = $region49
    $region48: #{tpu_custom_call.1} parent=1 // pred_region
      %s1098 = ssub.s32 256, 256
      %1099 = vsyncadd [#allocation3], %s1098
      %s1101 = sshll.u32 [#allocation2], 4
      %s1102 = int_to_ptr.vmem [resolvable:$true] %s1101
      %1104 = dma.vmem_to_hbm [thread:$0]  %s1102, 256, %s11, [#allocation3]
    $region49: #{tpu_custom_call.1} parent=1 // pred_fallthru
      _
    // Predicated region
    $region50: #{tpu_custom_call.1} parent=1 // pred_check
      _
    $region51: #{tpu_custom_call.1} parent=1 // pred_check_branch
      %1106 = sbr.rel (0) target = $region53
    $region52: #{tpu_custom_call.1} parent=1 // pred_region
      %1107 = dma.done [#allocation3], 256
    $region53: #{tpu_custom_call.1} parent=1 // pred_fallthru
      _
    %1108 = vsyncpa [#allocation3], 1

</llo_original>
